<compile_context>
chip_gen: v6e
topology: v6e:2x2x1
jax: 0.10.0
libtpu: 0.0.40
codegen_flags: <defaults>
</compile_context>

<pallas_src>
import jax
import jax.numpy as jnp
from jax.experimental import pallas as pl
from jax.experimental.pallas import tpu as pltpu


# ----------------------------------------------------------------------------
# Kernel
# ----------------------------------------------------------------------------
def _lstm_kernel(x_ref, wih0_ref, whh0_ref, b0_ref, wih1_ref, whh1_ref,
                 b1_ref, wfc_ref, bfc_ref, out_ref):
    # x_ref : (T*Bp, I)    time-major input, batch padded to Bp (multiple of 8)
    # wih0  : (I, 4*Hp)    f32  layer-0 input weights, gate d at cols [d*Hp, d*Hp+H)
    # whh0  : (Hp, 4*Hp)   bf16 layer-0 recurrent weights (rows >= H are zero)
    # b0    : (1, 4*Hp)    f32  b_ih_l0 + b_hh_l0 (padded columns zero)
    # wih1  : (Hp, 4*Hp)   bf16 layer-1 input weights (acting on h0)
    # whh1  : (Hp, 4*Hp)   bf16 layer-1 recurrent weights (acting on h1)
    # b1    : (1, 4*Hp)    f32
    # wfc   : (1, Hp) f32, bfc : (1, 1) f32
    # out   : (Bp, 1)
    # Gate column order (packed): [i | f | o | g]  (sigmoids contiguous).
    x = x_ref[...]
    wih0 = wih0_ref[...]
    whh0 = whh0_ref[...]
    b0 = b0_ref[...]
    wih1 = wih1_ref[...]
    whh1 = whh1_ref[...]
    b1 = b1_ref[...]
    wfc = wfc_ref[...]
    bfc = bfc_ref[...]

    Bp = out_ref.shape[0]
    TB, I = x.shape
    T = TB // Bp
    Hp = whh0.shape[0]
    bf16 = jnp.bfloat16

    # ---- Hoisted layer-0 input projection for ALL timesteps (off the serial
    # critical path).  With I == 1 this is exactly a broadcast multiply, so
    # keep it on the VPU instead of issuing a degenerate K=1 MXU matmul.
    if I == 1:
        xz0 = x * wih0 + b0                                         # (T*Bp, 4Hp)
    else:
        xz0 = jnp.dot(x, wih0, preferred_element_type=jnp.float32) + b0

    def gates(z, c):
        # Packed order [i|f|o|g]: one long sigmoid stream + one tanh stream.
        sig = jax.nn.sigmoid(z[:, :3 * Hp])                         # (Bp, 3Hp)
        i_g = sig[:, 0 * Hp:1 * Hp]
        f_g = sig[:, 1 * Hp:2 * Hp]
        o_g = sig[:, 2 * Hp:3 * Hp]
        g_g = jnp.tanh(z[:, 3 * Hp:4 * Hp])
        # Padded lanes: weights/bias pads are zero -> g=tanh(0)=0, c stays 0.
        c_new = f_g * c + i_g * g_g
        h_new = o_g * jnp.tanh(c_new)
        return h_new, c_new

    zeros = jnp.zeros((Bp, Hp), jnp.float32)
    h0, c0, h1, c1 = zeros, zeros, zeros, zeros

    # TODO(synk): hold whh0/wih1/whh1 weight-stationary across the unrolled
    # steps via pltpu.matmul_push_rhs / matmul_acc_lhs / matmul_pop; the N-tile
    # to MXU mapping and staging capacity differ per chip (4x128 v5e vs 2x256
    # v6e/v7x), so it is left to a chip-specific variant.
    for t in range(T):
        # Layer-1 recurrent half depends only on h1(t-1): expressed as its own
        # dot so it can overlap with layer-0(t)'s matmul/gates.
        rec1 = jnp.dot(h1.astype(bf16), whh1,
                       preferred_element_type=jnp.float32)
        # Layer 0: single recurrent matmul per step (input term precomputed).
        z0 = xz0[t * Bp:(t + 1) * Bp, :] + jnp.dot(
            h0.astype(bf16), whh0, preferred_element_type=jnp.float32)
        h0, c0 = gates(z0, c0)
        # Inter-layer dropout is identity at inference (eval mode).
        z1 = jnp.dot(h0.astype(bf16), wih1,
                     preferred_element_type=jnp.float32) + rec1 + b1
        h1, c1 = gates(z1, c1)

    # fc head on the last timestep's top-layer hidden state as a lane-reduce
    # (cheaper than a (B,H)@(H,1) MXU push with a 1-lane output).
    out_ref[...] = jnp.sum(h1 * wfc, axis=-1, keepdims=True) + bfc


# ----------------------------------------------------------------------------
# Wrapper
# ----------------------------------------------------------------------------
def lstm_model_forward(x, packed):
    """x: (B, T, I) float32 -> (B, 1) float32."""
    B, T, I = x.shape
    Bp = ((B + 7) // 8) * 8                      # pad batch to a sublane tile

    xp = jnp.zeros((Bp, T, I), jnp.float32).at[:B].set(x)
    x_tm = jnp.transpose(xp, (1, 0, 2)).reshape(T * Bp, I)   # time-major slab

    full = pl.BlockSpec(memory_space=pltpu.MemorySpace.VMEM)
    out = pl.pallas_call(
        _lstm_kernel,
        out_shape=jax.ShapeDtypeStruct((Bp, 1), jnp.float32),
        in_specs=[full] * 9,
        out_specs=full,
    )(x_tm, packed["wih0"], packed["whh0"], packed["b0"],
      packed["wih1"], packed["whh1"], packed["b1"],
      packed["wfc"], packed["bfc"])
    # TODO(synk): for large B, add a batch grid (block ~128 rows v5e / ~256
    # v6e-v7x) with dimension_semantics=("parallel",), and compute the hoisted
    # xz0 slab per block; unnecessary at these shapes (<1 MiB VMEM footprint).
    return out[:B]


# ----------------------------------------------------------------------------
# Parameters: PyTorch-shaped raw weights + packed (lane-aligned) kernel layout
# ----------------------------------------------------------------------------
def init_params(key, input_size=1, hidden_size=50):
    """Raw PyTorch nn.LSTM / nn.Linear shaped parameters."""
    H = hidden_size
    k = 1.0 / jnp.sqrt(jnp.float32(H))
    keys = jax.random.split(key, 10)

    def u(kk, shape):
        return jax.random.uniform(kk, shape, jnp.float32, -k, k)

    return {
        "w_ih_l0": u(keys[0], (4 * H, input_size)),
        "w_hh_l0": u(keys[1], (4 * H, H)),
        "b_ih_l0": u(keys[2], (4 * H,)),
        "b_hh_l0": u(keys[3], (4 * H,)),
        "w_ih_l1": u(keys[4], (4 * H, H)),
        "w_hh_l1": u(keys[5], (4 * H, H)),
        "b_ih_l1": u(keys[6], (4 * H,)),
        "b_hh_l1": u(keys[7], (4 * H,)),
        "w_fc":    u(keys[8], (1, H)),
        "b_fc":    u(keys[9], (1,)),
    }


# PyTorch gate order is [i|f|g|o]; packed layout is [i|f|o|g] so that the three
# sigmoid gates are lane-contiguous.  Dest slot d takes source gate PERM[d].
_GATE_PERM = (0, 1, 3, 2)


def _spread_gate_cols(w, H, Hp):
    """(K, 4H) PyTorch [i|f|g|o] -> (K, 4*Hp) packed [i|f|o|g]:
    gate slot d at columns [d*Hp, d*Hp+H), padded columns zero."""
    K = w.shape[0]
    out = jnp.zeros((K, 4 * Hp), jnp.float32)
    for d, s in enumerate(_GATE_PERM):
        out = out.at[:, d * Hp:d * Hp + H].set(w[:, s * H:(s + 1) * H])
    return out


def _pad_rows(w, Hp):
    """(H, 4Hp) -> (Hp, 4Hp), padding rows zero."""
    return jnp.zeros((Hp, w.shape[1]), jnp.float32).at[:w.shape[0]].set(w)


def pack_params(raw, hidden_size=50, h_pad=128):
    """Pre-transposed, gate-lane-aligned, zero-padded kernel weight layout.
    Recurrent / layer-1 matmul weights stored as bf16 (single-pass MXU);
    biases, layer-0 input weights and the fc head stay f32 (VPU path)."""
    H, Hp = hidden_size, h_pad
    bf16 = jnp.bfloat16

    wih0 = _spread_gate_cols(raw["w_ih_l0"].T, H, Hp)                 # (I, 4Hp)
    whh0 = _pad_rows(_spread_gate_cols(raw["w_hh_l0"].T, H, Hp),
                     Hp).astype(bf16)                                 # (Hp, 4Hp)
    b0 = _spread_gate_cols(
        (raw["b_ih_l0"] + raw["b_hh_l0"])[None, :], H, Hp)            # (1, 4Hp)

    wih1 = _pad_rows(_spread_gate_cols(raw["w_ih_l1"].T, H, Hp),
                     Hp).astype(bf16)                                 # (Hp, 4Hp)
    whh1 = _pad_rows(_spread_gate_cols(raw["w_hh_l1"].T, H, Hp),
                     Hp).astype(bf16)                                 # (Hp, 4Hp)
    b1 = _spread_gate_cols(
        (raw["b_ih_l1"] + raw["b_hh_l1"])[None, :], H, Hp)            # (1, 4Hp)

    wfc = jnp.zeros((1, Hp), jnp.float32).at[:, :H].set(raw["w_fc"])  # (1, Hp)
    bfc = raw["b_fc"][None, :]                                        # (1, 1)

    return {"wih0": wih0, "whh0": whh0, "b0": b0,
            "wih1": wih1, "whh1": whh1, "b1": b1,
            "wfc": wfc, "bfc": bfc}


# ----------------------------------------------------------------------------
# Pure-JAX reference (unpadded, f32) for the correctness check
# ----------------------------------------------------------------------------
def _reference_forward(x, raw):
    B, T, I = x.shape
    H = raw["w_hh_l0"].shape[1]
    wih0, whh0 = raw["w_ih_l0"].T, raw["w_hh_l0"].T
    b0 = raw["b_ih_l0"] + raw["b_hh_l0"]
    wih1, whh1 = raw["w_ih_l1"].T, raw["w_hh_l1"].T
    b1 = raw["b_ih_l1"] + raw["b_hh_l1"]

    def cell(x_t, h, c, wih, whh, b):
        z = x_t @ wih + h @ whh + b
        i = jax.nn.sigmoid(z[:, 0 * H:1 * H])
        f = jax.nn.sigmoid(z[:, 1 * H:2 * H])
        g = jnp.tanh(z[:, 2 * H:3 * H])
        o = jax.nn.sigmoid(z[:, 3 * H:4 * H])
        c = f * c + i * g
        return o * jnp.tanh(c), c

    h0 = c0 = h1 = c1 = jnp.zeros((B, H), jnp.float32)
    for t in range(T):
        h0, c0 = cell(x[:, t, :], h0, c0, wih0, whh0, b0)
        h1, c1 = cell(h0, h1, c1, wih1, whh1, b1)
    return h1 @ raw["w_fc"].T + raw["b_fc"]


if __name__ == "__main__":
    key = jax.random.PRNGKey(0)
    k_x, k_p = jax.random.split(key)

    B, T, I, H = 2, 8, 1, 50          # batch, seq, input_size=1, hidden_size=50
    x = jax.random.normal(k_x, (B, T, I), jnp.float32)
    raw = init_params(k_p, input_size=I, hidden_size=H)
    packed = pack_params(raw, hidden_size=H, h_pad=128)

    out = jax.block_until_ready(lstm_model_forward(x, packed))
    ref = _reference_forward(x, raw)

    assert out.shape == (B, 1)
    # bf16 matmul operands (f32 accumulation): tolerance relaxed vs. pure f32.
    assert jnp.allclose(out, ref, atol=2e-2, rtol=2e-2), (out, ref)

    print("KERNEL_OK")
</pallas_src>

<mosaic_0001>
module attributes {stable_mosaic.version = 11 : i64} {
  func.func @_lstm_kernel(%arg0: memref<64x1xf32, #tpu.memory_space<vmem>>, %arg1: memref<1x512xf32, #tpu.memory_space<vmem>>, %arg2: memref<128x512xbf16, #tpu.memory_space<vmem>>, %arg3: memref<1x512xf32, #tpu.memory_space<vmem>>, %arg4: memref<128x512xbf16, #tpu.memory_space<vmem>>, %arg5: memref<128x512xbf16, #tpu.memory_space<vmem>>, %arg6: memref<1x512xf32, #tpu.memory_space<vmem>>, %arg7: memref<1x128xf32, #tpu.memory_space<vmem>>, %arg8: memref<1x1xf32, #tpu.memory_space<vmem>>, %arg9: memref<8x1xf32, #tpu.memory_space<vmem>>) attributes {dimension_semantics = [], scalar_prefetch = 0 : i64, scratch_operands = 0 : i64, tpu.core_type = #tpu.core_type<tc>} {
    %c0 = arith.constant 0 : index
    %c0_0 = arith.constant 0 : index
    %0 = vector.load %arg0[%c0, %c0_0] : memref<64x1xf32, #tpu.memory_space<vmem>>, vector<64x1xf32>
    %c0_1 = arith.constant 0 : index
    %c0_2 = arith.constant 0 : index
    %1 = vector.load %arg1[%c0_1, %c0_2] : memref<1x512xf32, #tpu.memory_space<vmem>>, vector<1x512xf32>
    %c0_3 = arith.constant 0 : index
    %c0_4 = arith.constant 0 : index
    %2 = vector.load %arg2[%c0_3, %c0_4] : memref<128x512xbf16, #tpu.memory_space<vmem>>, vector<128x512xbf16>
    %c0_5 = arith.constant 0 : index
    %c0_6 = arith.constant 0 : index
    %3 = vector.load %arg3[%c0_5, %c0_6] : memref<1x512xf32, #tpu.memory_space<vmem>>, vector<1x512xf32>
    %c0_7 = arith.constant 0 : index
    %c0_8 = arith.constant 0 : index
    %4 = vector.load %arg4[%c0_7, %c0_8] : memref<128x512xbf16, #tpu.memory_space<vmem>>, vector<128x512xbf16>
    %c0_9 = arith.constant 0 : index
    %c0_10 = arith.constant 0 : index
    %5 = vector.load %arg5[%c0_9, %c0_10] : memref<128x512xbf16, #tpu.memory_space<vmem>>, vector<128x512xbf16>
    %c0_11 = arith.constant 0 : index
    %c0_12 = arith.constant 0 : index
    %6 = vector.load %arg6[%c0_11, %c0_12] : memref<1x512xf32, #tpu.memory_space<vmem>>, vector<1x512xf32>
    %c0_13 = arith.constant 0 : index
    %c0_14 = arith.constant 0 : index
    %7 = vector.load %arg7[%c0_13, %c0_14] : memref<1x128xf32, #tpu.memory_space<vmem>>, vector<1x128xf32>
    %c0_15 = arith.constant 0 : index
    %c0_16 = arith.constant 0 : index
    %8 = vector.load %arg8[%c0_15, %c0_16] : memref<1x1xf32, #tpu.memory_space<vmem>>, vector<1x1xf32>
    %9 = vector.broadcast %0 : vector<64x1xf32> to vector<64x512xf32>
    %10 = vector.broadcast %1 : vector<1x512xf32> to vector<64x512xf32>
    %11 = arith.mulf %9, %10 : vector<64x512xf32>
    %12 = vector.broadcast %3 : vector<1x512xf32> to vector<64x512xf32>
    %13 = arith.addf %11, %12 : vector<64x512xf32>
    %cst = arith.constant 0.000000e+00 : f32
    %14 = vector.broadcast %cst : f32 to vector<8x128xf32>
    %15 = arith.truncf %14 : vector<8x128xf32> to vector<8x128xbf16>
    %cst_17 = arith.constant dense<0.000000e+00> : vector<8x512xf32>
    %16 = tpu.matmul %15, %5, %cst_17 {dimension_numbers = #tpu.dot_dimension_numbers<[1], [0], [0], [1], [0, 0, 1, 1], [], []>} : vector<8x128xbf16>, vector<128x512xbf16>, vector<8x512xf32> -> vector<8x512xf32>
    %17 = vector.extract_strided_slice %13 {offsets = [0, 0], sizes = [8, 512], strides = [1, 1]} : vector<64x512xf32> to vector<8x512xf32>
    %18 = arith.truncf %14 : vector<8x128xf32> to vector<8x128xbf16>
    %cst_18 = arith.constant dense<0.000000e+00> : vector<8x512xf32>
    %19 = tpu.matmul %18, %2, %cst_18 {dimension_numbers = #tpu.dot_dimension_numbers<[1], [0], [0], [1], [0, 0, 1, 1], [], []>} : vector<8x128xbf16>, vector<128x512xbf16>, vector<8x512xf32> -> vector<8x512xf32>
    %20 = arith.addf %17, %19 : vector<8x512xf32>
    %21 = vector.extract_strided_slice %20 {offsets = [0, 0], sizes = [8, 384], strides = [1, 1]} : vector<8x512xf32> to vector<8x384xf32>
    %22 = arith.negf %21 : vector<8x384xf32>
    %23 = math.exp %22 : vector<8x384xf32>
    %cst_19 = arith.constant 1.000000e+00 : f32
    %24 = vector.broadcast %cst_19 : f32 to vector<8x384xf32>
    %25 = arith.addf %24, %23 : vector<8x384xf32>
    %26 = arith.divf %24, %25 : vector<8x384xf32>
    %27 = vector.extract_strided_slice %26 {offsets = [0, 0], sizes = [8, 128], strides = [1, 1]} : vector<8x384xf32> to vector<8x128xf32>
    %28 = vector.extract_strided_slice %26 {offsets = [0, 128], sizes = [8, 128], strides = [1, 1]} : vector<8x384xf32> to vector<8x128xf32>
    %29 = vector.extract_strided_slice %26 {offsets = [0, 256], sizes = [8, 128], strides = [1, 1]} : vector<8x384xf32> to vector<8x128xf32>
    %30 = vector.extract_strided_slice %20 {offsets = [0, 384], sizes = [8, 128], strides = [1, 1]} : vector<8x512xf32> to vector<8x128xf32>
    %31 = math.tanh %30 : vector<8x128xf32>
    %32 = arith.mulf %28, %14 : vector<8x128xf32>
    %33 = arith.mulf %27, %31 : vector<8x128xf32>
    %34 = arith.addf %32, %33 : vector<8x128xf32>
    %35 = math.tanh %34 : vector<8x128xf32>
    %36 = arith.mulf %29, %35 : vector<8x128xf32>
    %37 = arith.truncf %36 : vector<8x128xf32> to vector<8x128xbf16>
    %cst_20 = arith.constant dense<0.000000e+00> : vector<8x512xf32>
    %38 = tpu.matmul %37, %4, %cst_20 {dimension_numbers = #tpu.dot_dimension_numbers<[1], [0], [0], [1], [0, 0, 1, 1], [], []>} : vector<8x128xbf16>, vector<128x512xbf16>, vector<8x512xf32> -> vector<8x512xf32>
    %39 = arith.addf %38, %16 : vector<8x512xf32>
    %40 = vector.broadcast %6 : vector<1x512xf32> to vector<8x512xf32>
    %41 = arith.addf %39, %40 : vector<8x512xf32>
    %42 = vector.extract_strided_slice %41 {offsets = [0, 0], sizes = [8, 384], strides = [1, 1]} : vector<8x512xf32> to vector<8x384xf32>
    %43 = arith.negf %42 : vector<8x384xf32>
    %44 = math.exp %43 : vector<8x384xf32>
    %cst_21 = arith.constant 1.000000e+00 : f32
    %45 = vector.broadcast %cst_21 : f32 to vector<8x384xf32>
    %46 = arith.addf %45, %44 : vector<8x384xf32>
    %47 = arith.divf %45, %46 : vector<8x384xf32>
    %48 = vector.extract_strided_slice %47 {offsets = [0, 0], sizes = [8, 128], strides = [1, 1]} : vector<8x384xf32> to vector<8x128xf32>
    %49 = vector.extract_strided_slice %47 {offsets = [0, 128], sizes = [8, 128], strides = [1, 1]} : vector<8x384xf32> to vector<8x128xf32>
    %50 = vector.extract_strided_slice %47 {offsets = [0, 256], sizes = [8, 128], strides = [1, 1]} : vector<8x384xf32> to vector<8x128xf32>
    %51 = vector.extract_strided_slice %41 {offsets = [0, 384], sizes = [8, 128], strides = [1, 1]} : vector<8x512xf32> to vector<8x128xf32>
    %52 = math.tanh %51 : vector<8x128xf32>
    %53 = arith.mulf %49, %14 : vector<8x128xf32>
    %54 = arith.mulf %48, %52 : vector<8x128xf32>
    %55 = arith.addf %53, %54 : vector<8x128xf32>
    %56 = math.tanh %55 : vector<8x128xf32>
    %57 = arith.mulf %50, %56 : vector<8x128xf32>
    %58 = arith.truncf %57 : vector<8x128xf32> to vector<8x128xbf16>
    %cst_22 = arith.constant dense<0.000000e+00> : vector<8x512xf32>
    %59 = tpu.matmul %58, %5, %cst_22 {dimension_numbers = #tpu.dot_dimension_numbers<[1], [0], [0], [1], [0, 0, 1, 1], [], []>} : vector<8x128xbf16>, vector<128x512xbf16>, vector<8x512xf32> -> vector<8x512xf32>
    %60 = vector.extract_strided_slice %13 {offsets = [8, 0], sizes = [8, 512], strides = [1, 1]} : vector<64x512xf32> to vector<8x512xf32>
    %61 = arith.truncf %36 : vector<8x128xf32> to vector<8x128xbf16>
    %cst_23 = arith.constant dense<0.000000e+00> : vector<8x512xf32>
    %62 = tpu.matmul %61, %2, %cst_23 {dimension_numbers = #tpu.dot_dimension_numbers<[1], [0], [0], [1], [0, 0, 1, 1], [], []>} : vector<8x128xbf16>, vector<128x512xbf16>, vector<8x512xf32> -> vector<8x512xf32>
    %63 = arith.addf %60, %62 : vector<8x512xf32>
    %64 = vector.extract_strided_slice %63 {offsets = [0, 0], sizes = [8, 384], strides = [1, 1]} : vector<8x512xf32> to vector<8x384xf32>
    %65 = arith.negf %64 : vector<8x384xf32>
    %66 = math.exp %65 : vector<8x384xf32>
    %cst_24 = arith.constant 1.000000e+00 : f32
    %67 = vector.broadcast %cst_24 : f32 to vector<8x384xf32>
    %68 = arith.addf %67, %66 : vector<8x384xf32>
    %69 = arith.divf %67, %68 : vector<8x384xf32>
    %70 = vector.extract_strided_slice %69 {offsets = [0, 0], sizes = [8, 128], strides = [1, 1]} : vector<8x384xf32> to vector<8x128xf32>
    %71 = vector.extract_strided_slice %69 {offsets = [0, 128], sizes = [8, 128], strides = [1, 1]} : vector<8x384xf32> to vector<8x128xf32>
    %72 = vector.extract_strided_slice %69 {offsets = [0, 256], sizes = [8, 128], strides = [1, 1]} : vector<8x384xf32> to vector<8x128xf32>
    %73 = vector.extract_strided_slice %63 {offsets = [0, 384], sizes = [8, 128], strides = [1, 1]} : vector<8x512xf32> to vector<8x128xf32>
    %74 = math.tanh %73 : vector<8x128xf32>
    %75 = arith.mulf %71, %34 : vector<8x128xf32>
    %76 = arith.mulf %70, %74 : vector<8x128xf32>
    %77 = arith.addf %75, %76 : vector<8x128xf32>
    %78 = math.tanh %77 : vector<8x128xf32>
    %79 = arith.mulf %72, %78 : vector<8x128xf32>
    %80 = arith.truncf %79 : vector<8x128xf32> to vector<8x128xbf16>
    %cst_25 = arith.constant dense<0.000000e+00> : vector<8x512xf32>
    %81 = tpu.matmul %80, %4, %cst_25 {dimension_numbers = #tpu.dot_dimension_numbers<[1], [0], [0], [1], [0, 0, 1, 1], [], []>} : vector<8x128xbf16>, vector<128x512xbf16>, vector<8x512xf32> -> vector<8x512xf32>
    %82 = arith.addf %81, %59 : vector<8x512xf32>
    %83 = vector.broadcast %6 : vector<1x512xf32> to vector<8x512xf32>
    %84 = arith.addf %82, %83 : vector<8x512xf32>
    %85 = vector.extract_strided_slice %84 {offsets = [0, 0], sizes = [8, 384], strides = [1, 1]} : vector<8x512xf32> to vector<8x384xf32>
    %86 = arith.negf %85 : vector<8x384xf32>
    %87 = math.exp %86 : vector<8x384xf32>
    %cst_26 = arith.constant 1.000000e+00 : f32
    %88 = vector.broadcast %cst_26 : f32 to vector<8x384xf32>
    %89 = arith.addf %88, %87 : vector<8x384xf32>
    %90 = arith.divf %88, %89 : vector<8x384xf32>
    %91 = vector.extract_strided_slice %90 {offsets = [0, 0], sizes = [8, 128], strides = [1, 1]} : vector<8x384xf32> to vector<8x128xf32>
    %92 = vector.extract_strided_slice %90 {offsets = [0, 128], sizes = [8, 128], strides = [1, 1]} : vector<8x384xf32> to vector<8x128xf32>
    %93 = vector.extract_strided_slice %90 {offsets = [0, 256], sizes = [8, 128], strides = [1, 1]} : vector<8x384xf32> to vector<8x128xf32>
    %94 = vector.extract_strided_slice %84 {offsets = [0, 384], sizes = [8, 128], strides = [1, 1]} : vector<8x512xf32> to vector<8x128xf32>
    %95 = math.tanh %94 : vector<8x128xf32>
    %96 = arith.mulf %92, %55 : vector<8x128xf32>
    %97 = arith.mulf %91, %95 : vector<8x128xf32>
    %98 = arith.addf %96, %97 : vector<8x128xf32>
    %99 = math.tanh %98 : vector<8x128xf32>
    %100 = arith.mulf %93, %99 : vector<8x128xf32>
    %101 = arith.truncf %100 : vector<8x128xf32> to vector<8x128xbf16>
    %cst_27 = arith.constant dense<0.000000e+00> : vector<8x512xf32>
    %102 = tpu.matmul %101, %5, %cst_27 {dimension_numbers = #tpu.dot_dimension_numbers<[1], [0], [0], [1], [0, 0, 1, 1], [], []>} : vector<8x128xbf16>, vector<128x512xbf16>, vector<8x512xf32> -> vector<8x512xf32>
    %103 = vector.extract_strided_slice %13 {offsets = [16, 0], sizes = [8, 512], strides = [1, 1]} : vector<64x512xf32> to vector<8x512xf32>
    %104 = arith.truncf %79 : vector<8x128xf32> to vector<8x128xbf16>
    %cst_28 = arith.constant dense<0.000000e+00> : vector<8x512xf32>
    %105 = tpu.matmul %104, %2, %cst_28 {dimension_numbers = #tpu.dot_dimension_numbers<[1], [0], [0], [1], [0, 0, 1, 1], [], []>} : vector<8x128xbf16>, vector<128x512xbf16>, vector<8x512xf32> -> vector<8x512xf32>
    %106 = arith.addf %103, %105 : vector<8x512xf32>
    %107 = vector.extract_strided_slice %106 {offsets = [0, 0], sizes = [8, 384], strides = [1, 1]} : vector<8x512xf32> to vector<8x384xf32>
    %108 = arith.negf %107 : vector<8x384xf32>
    %109 = math.exp %108 : vector<8x384xf32>
    %cst_29 = arith.constant 1.000000e+00 : f32
    %110 = vector.broadcast %cst_29 : f32 to vector<8x384xf32>
    %111 = arith.addf %110, %109 : vector<8x384xf32>
    %112 = arith.divf %110, %111 : vector<8x384xf32>
    %113 = vector.extract_strided_slice %112 {offsets = [0, 0], sizes = [8, 128], strides = [1, 1]} : vector<8x384xf32> to vector<8x128xf32>
    %114 = vector.extract_strided_slice %112 {offsets = [0, 128], sizes = [8, 128], strides = [1, 1]} : vector<8x384xf32> to vector<8x128xf32>
    %115 = vector.extract_strided_slice %112 {offsets = [0, 256], sizes = [8, 128], strides = [1, 1]} : vector<8x384xf32> to vector<8x128xf32>
    %116 = vector.extract_strided_slice %106 {offsets = [0, 384], sizes = [8, 128], strides = [1, 1]} : vector<8x512xf32> to vector<8x128xf32>
    %117 = math.tanh %116 : vector<8x128xf32>
    %118 = arith.mulf %114, %77 : vector<8x128xf32>
    %119 = arith.mulf %113, %117 : vector<8x128xf32>
    %120 = arith.addf %118, %119 : vector<8x128xf32>
    %121 = math.tanh %120 : vector<8x128xf32>
    %122 = arith.mulf %115, %121 : vector<8x128xf32>
    %123 = arith.truncf %122 : vector<8x128xf32> to vector<8x128xbf16>
    %cst_30 = arith.constant dense<0.000000e+00> : vector<8x512xf32>
    %124 = tpu.matmul %123, %4, %cst_30 {dimension_numbers = #tpu.dot_dimension_numbers<[1], [0], [0], [1], [0, 0, 1, 1], [], []>} : vector<8x128xbf16>, vector<128x512xbf16>, vector<8x512xf32> -> vector<8x512xf32>
    %125 = arith.addf %124, %102 : vector<8x512xf32>
    %126 = vector.broadcast %6 : vector<1x512xf32> to vector<8x512xf32>
    %127 = arith.addf %125, %126 : vector<8x512xf32>
    %128 = vector.extract_strided_slice %127 {offsets = [0, 0], sizes = [8, 384], strides = [1, 1]} : vector<8x512xf32> to vector<8x384xf32>
    %129 = arith.negf %128 : vector<8x384xf32>
    %130 = math.exp %129 : vector<8x384xf32>
    %cst_31 = arith.constant 1.000000e+00 : f32
    %131 = vector.broadcast %cst_31 : f32 to vector<8x384xf32>
    %132 = arith.addf %131, %130 : vector<8x384xf32>
    %133 = arith.divf %131, %132 : vector<8x384xf32>
    %134 = vector.extract_strided_slice %133 {offsets = [0, 0], sizes = [8, 128], strides = [1, 1]} : vector<8x384xf32> to vector<8x128xf32>
    %135 = vector.extract_strided_slice %133 {offsets = [0, 128], sizes = [8, 128], strides = [1, 1]} : vector<8x384xf32> to vector<8x128xf32>
    %136 = vector.extract_strided_slice %133 {offsets = [0, 256], sizes = [8, 128], strides = [1, 1]} : vector<8x384xf32> to vector<8x128xf32>
    %137 = vector.extract_strided_slice %127 {offsets = [0, 384], sizes = [8, 128], strides = [1, 1]} : vector<8x512xf32> to vector<8x128xf32>
    %138 = math.tanh %137 : vector<8x128xf32>
    %139 = arith.mulf %135, %98 : vector<8x128xf32>
    %140 = arith.mulf %134, %138 : vector<8x128xf32>
    %141 = arith.addf %139, %140 : vector<8x128xf32>
    %142 = math.tanh %141 : vector<8x128xf32>
    %143 = arith.mulf %136, %142 : vector<8x128xf32>
    %144 = arith.truncf %143 : vector<8x128xf32> to vector<8x128xbf16>
    %cst_32 = arith.constant dense<0.000000e+00> : vector<8x512xf32>
    %145 = tpu.matmul %144, %5, %cst_32 {dimension_numbers = #tpu.dot_dimension_numbers<[1], [0], [0], [1], [0, 0, 1, 1], [], []>} : vector<8x128xbf16>, vector<128x512xbf16>, vector<8x512xf32> -> vector<8x512xf32>
    %146 = vector.extract_strided_slice %13 {offsets = [24, 0], sizes = [8, 512], strides = [1, 1]} : vector<64x512xf32> to vector<8x512xf32>
    %147 = arith.truncf %122 : vector<8x128xf32> to vector<8x128xbf16>
    %cst_33 = arith.constant dense<0.000000e+00> : vector<8x512xf32>
    %148 = tpu.matmul %147, %2, %cst_33 {dimension_numbers = #tpu.dot_dimension_numbers<[1], [0], [0], [1], [0, 0, 1, 1], [], []>} : vector<8x128xbf16>, vector<128x512xbf16>, vector<8x512xf32> -> vector<8x512xf32>
    %149 = arith.addf %146, %148 : vector<8x512xf32>
    %150 = vector.extract_strided_slice %149 {offsets = [0, 0], sizes = [8, 384], strides = [1, 1]} : vector<8x512xf32> to vector<8x384xf32>
    %151 = arith.negf %150 : vector<8x384xf32>
    %152 = math.exp %151 : vector<8x384xf32>
    %cst_34 = arith.constant 1.000000e+00 : f32
    %153 = vector.broadcast %cst_34 : f32 to vector<8x384xf32>
    %154 = arith.addf %153, %152 : vector<8x384xf32>
    %155 = arith.divf %153, %154 : vector<8x384xf32>
    %156 = vector.extract_strided_slice %155 {offsets = [0, 0], sizes = [8, 128], strides = [1, 1]} : vector<8x384xf32> to vector<8x128xf32>
    %157 = vector.extract_strided_slice %155 {offsets = [0, 128], sizes = [8, 128], strides = [1, 1]} : vector<8x384xf32> to vector<8x128xf32>
    %158 = vector.extract_strided_slice %155 {offsets = [0, 256], sizes = [8, 128], strides = [1, 1]} : vector<8x384xf32> to vector<8x128xf32>
    %159 = vector.extract_strided_slice %149 {offsets = [0, 384], sizes = [8, 128], strides = [1, 1]} : vector<8x512xf32> to vector<8x128xf32>
    %160 = math.tanh %159 : vector<8x128xf32>
    %161 = arith.mulf %157, %120 : vector<8x128xf32>
    %162 = arith.mulf %156, %160 : vector<8x128xf32>
    %163 = arith.addf %161, %162 : vector<8x128xf32>
    %164 = math.tanh %163 : vector<8x128xf32>
    %165 = arith.mulf %158, %164 : vector<8x128xf32>
    %166 = arith.truncf %165 : vector<8x128xf32> to vector<8x128xbf16>
    %cst_35 = arith.constant dense<0.000000e+00> : vector<8x512xf32>
    %167 = tpu.matmul %166, %4, %cst_35 {dimension_numbers = #tpu.dot_dimension_numbers<[1], [0], [0], [1], [0, 0, 1, 1], [], []>} : vector<8x128xbf16>, vector<128x512xbf16>, vector<8x512xf32> -> vector<8x512xf32>
    %168 = arith.addf %167, %145 : vector<8x512xf32>
    %169 = vector.broadcast %6 : vector<1x512xf32> to vector<8x512xf32>
    %170 = arith.addf %168, %169 : vector<8x512xf32>
    %171 = vector.extract_strided_slice %170 {offsets = [0, 0], sizes = [8, 384], strides = [1, 1]} : vector<8x512xf32> to vector<8x384xf32>
    %172 = arith.negf %171 : vector<8x384xf32>
    %173 = math.exp %172 : vector<8x384xf32>
    %cst_36 = arith.constant 1.000000e+00 : f32
    %174 = vector.broadcast %cst_36 : f32 to vector<8x384xf32>
    %175 = arith.addf %174, %173 : vector<8x384xf32>
    %176 = arith.divf %174, %175 : vector<8x384xf32>
    %177 = vector.extract_strided_slice %176 {offsets = [0, 0], sizes = [8, 128], strides = [1, 1]} : vector<8x384xf32> to vector<8x128xf32>
    %178 = vector.extract_strided_slice %176 {offsets = [0, 128], sizes = [8, 128], strides = [1, 1]} : vector<8x384xf32> to vector<8x128xf32>
    %179 = vector.extract_strided_slice %176 {offsets = [0, 256], sizes = [8, 128], strides = [1, 1]} : vector<8x384xf32> to vector<8x128xf32>
    %180 = vector.extract_strided_slice %170 {offsets = [0, 384], sizes = [8, 128], strides = [1, 1]} : vector<8x512xf32> to vector<8x128xf32>
    %181 = math.tanh %180 : vector<8x128xf32>
    %182 = arith.mulf %178, %141 : vector<8x128xf32>
    %183 = arith.mulf %177, %181 : vector<8x128xf32>
    %184 = arith.addf %182, %183 : vector<8x128xf32>
    %185 = math.tanh %184 : vector<8x128xf32>
    %186 = arith.mulf %179, %185 : vector<8x128xf32>
    %187 = arith.truncf %186 : vector<8x128xf32> to vector<8x128xbf16>
    %cst_37 = arith.constant dense<0.000000e+00> : vector<8x512xf32>
    %188 = tpu.matmul %187, %5, %cst_37 {dimension_numbers = #tpu.dot_dimension_numbers<[1], [0], [0], [1], [0, 0, 1, 1], [], []>} : vector<8x128xbf16>, vector<128x512xbf16>, vector<8x512xf32> -> vector<8x512xf32>
    %189 = vector.extract_strided_slice %13 {offsets = [32, 0], sizes = [8, 512], strides = [1, 1]} : vector<64x512xf32> to vector<8x512xf32>
    %190 = arith.truncf %165 : vector<8x128xf32> to vector<8x128xbf16>
    %cst_38 = arith.constant dense<0.000000e+00> : vector<8x512xf32>
    %191 = tpu.matmul %190, %2, %cst_38 {dimension_numbers = #tpu.dot_dimension_numbers<[1], [0], [0], [1], [0, 0, 1, 1], [], []>} : vector<8x128xbf16>, vector<128x512xbf16>, vector<8x512xf32> -> vector<8x512xf32>
    %192 = arith.addf %189, %191 : vector<8x512xf32>
    %193 = vector.extract_strided_slice %192 {offsets = [0, 0], sizes = [8, 384], strides = [1, 1]} : vector<8x512xf32> to vector<8x384xf32>
    %194 = arith.negf %193 : vector<8x384xf32>
    %195 = math.exp %194 : vector<8x384xf32>
    %cst_39 = arith.constant 1.000000e+00 : f32
    %196 = vector.broadcast %cst_39 : f32 to vector<8x384xf32>
    %197 = arith.addf %196, %195 : vector<8x384xf32>
    %198 = arith.divf %196, %197 : vector<8x384xf32>
    %199 = vector.extract_strided_slice %198 {offsets = [0, 0], sizes = [8, 128], strides = [1, 1]} : vector<8x384xf32> to vector<8x128xf32>
    %200 = vector.extract_strided_slice %198 {offsets = [0, 128], sizes = [8, 128], strides = [1, 1]} : vector<8x384xf32> to vector<8x128xf32>
    %201 = vector.extract_strided_slice %198 {offsets = [0, 256], sizes = [8, 128], strides = [1, 1]} : vector<8x384xf32> to vector<8x128xf32>
    %202 = vector.extract_strided_slice %192 {offsets = [0, 384], sizes = [8, 128], strides = [1, 1]} : vector<8x512xf32> to vector<8x128xf32>
    %203 = math.tanh %202 : vector<8x128xf32>
    %204 = arith.mulf %200, %163 : vector<8x128xf32>
    %205 = arith.mulf %199, %203 : vector<8x128xf32>
    %206 = arith.addf %204, %205 : vector<8x128xf32>
    %207 = math.tanh %206 : vector<8x128xf32>
    %208 = arith.mulf %201, %207 : vector<8x128xf32>
    %209 = arith.truncf %208 : vector<8x128xf32> to vector<8x128xbf16>
    %cst_40 = arith.constant dense<0.000000e+00> : vector<8x512xf32>
    %210 = tpu.matmul %209, %4, %cst_40 {dimension_numbers = #tpu.dot_dimension_numbers<[1], [0], [0], [1], [0, 0, 1, 1], [], []>} : vector<8x128xbf16>, vector<128x512xbf16>, vector<8x512xf32> -> vector<8x512xf32>
    %211 = arith.addf %210, %188 : vector<8x512xf32>
    %212 = vector.broadcast %6 : vector<1x512xf32> to vector<8x512xf32>
    %213 = arith.addf %211, %212 : vector<8x512xf32>
    %214 = vector.extract_strided_slice %213 {offsets = [0, 0], sizes = [8, 384], strides = [1, 1]} : vector<8x512xf32> to vector<8x384xf32>
    %215 = arith.negf %214 : vector<8x384xf32>
    %216 = math.exp %215 : vector<8x384xf32>
    %cst_41 = arith.constant 1.000000e+00 : f32
    %217 = vector.broadcast %cst_41 : f32 to vector<8x384xf32>
    %218 = arith.addf %217, %216 : vector<8x384xf32>
    %219 = arith.divf %217, %218 : vector<8x384xf32>
    %220 = vector.extract_strided_slice %219 {offsets = [0, 0], sizes = [8, 128], strides = [1, 1]} : vector<8x384xf32> to vector<8x128xf32>
    %221 = vector.extract_strided_slice %219 {offsets = [0, 128], sizes = [8, 128], strides = [1, 1]} : vector<8x384xf32> to vector<8x128xf32>
    %222 = vector.extract_strided_slice %219 {offsets = [0, 256], sizes = [8, 128], strides = [1, 1]} : vector<8x384xf32> to vector<8x128xf32>
    %223 = vector.extract_strided_slice %213 {offsets = [0, 384], sizes = [8, 128], strides = [1, 1]} : vector<8x512xf32> to vector<8x128xf32>
    %224 = math.tanh %223 : vector<8x128xf32>
    %225 = arith.mulf %221, %184 : vector<8x128xf32>
    %226 = arith.mulf %220, %224 : vector<8x128xf32>
    %227 = arith.addf %225, %226 : vector<8x128xf32>
    %228 = math.tanh %227 : vector<8x128xf32>
    %229 = arith.mulf %222, %228 : vector<8x128xf32>
    %230 = arith.truncf %229 : vector<8x128xf32> to vector<8x128xbf16>
    %cst_42 = arith.constant dense<0.000000e+00> : vector<8x512xf32>
    %231 = tpu.matmul %230, %5, %cst_42 {dimension_numbers = #tpu.dot_dimension_numbers<[1], [0], [0], [1], [0, 0, 1, 1], [], []>} : vector<8x128xbf16>, vector<128x512xbf16>, vector<8x512xf32> -> vector<8x512xf32>
    %232 = vector.extract_strided_slice %13 {offsets = [40, 0], sizes = [8, 512], strides = [1, 1]} : vector<64x512xf32> to vector<8x512xf32>
    %233 = arith.truncf %208 : vector<8x128xf32> to vector<8x128xbf16>
    %cst_43 = arith.constant dense<0.000000e+00> : vector<8x512xf32>
    %234 = tpu.matmul %233, %2, %cst_43 {dimension_numbers = #tpu.dot_dimension_numbers<[1], [0], [0], [1], [0, 0, 1, 1], [], []>} : vector<8x128xbf16>, vector<128x512xbf16>, vector<8x512xf32> -> vector<8x512xf32>
    %235 = arith.addf %232, %234 : vector<8x512xf32>
    %236 = vector.extract_strided_slice %235 {offsets = [0, 0], sizes = [8, 384], strides = [1, 1]} : vector<8x512xf32> to vector<8x384xf32>
    %237 = arith.negf %236 : vector<8x384xf32>
    %238 = math.exp %237 : vector<8x384xf32>
    %cst_44 = arith.constant 1.000000e+00 : f32
    %239 = vector.broadcast %cst_44 : f32 to vector<8x384xf32>
    %240 = arith.addf %239, %238 : vector<8x384xf32>
    %241 = arith.divf %239, %240 : vector<8x384xf32>
    %242 = vector.extract_strided_slice %241 {offsets = [0, 0], sizes = [8, 128], strides = [1, 1]} : vector<8x384xf32> to vector<8x128xf32>
    %243 = vector.extract_strided_slice %241 {offsets = [0, 128], sizes = [8, 128], strides = [1, 1]} : vector<8x384xf32> to vector<8x128xf32>
    %244 = vector.extract_strided_slice %241 {offsets = [0, 256], sizes = [8, 128], strides = [1, 1]} : vector<8x384xf32> to vector<8x128xf32>
    %245 = vector.extract_strided_slice %235 {offsets = [0, 384], sizes = [8, 128], strides = [1, 1]} : vector<8x512xf32> to vector<8x128xf32>
    %246 = math.tanh %245 : vector<8x128xf32>
    %247 = arith.mulf %243, %206 : vector<8x128xf32>
    %248 = arith.mulf %242, %246 : vector<8x128xf32>
    %249 = arith.addf %247, %248 : vector<8x128xf32>
    %250 = math.tanh %249 : vector<8x128xf32>
    %251 = arith.mulf %244, %250 : vector<8x128xf32>
    %252 = arith.truncf %251 : vector<8x128xf32> to vector<8x128xbf16>
    %cst_45 = arith.constant dense<0.000000e+00> : vector<8x512xf32>
    %253 = tpu.matmul %252, %4, %cst_45 {dimension_numbers = #tpu.dot_dimension_numbers<[1], [0], [0], [1], [0, 0, 1, 1], [], []>} : vector<8x128xbf16>, vector<128x512xbf16>, vector<8x512xf32> -> vector<8x512xf32>
    %254 = arith.addf %253, %231 : vector<8x512xf32>
    %255 = vector.broadcast %6 : vector<1x512xf32> to vector<8x512xf32>
    %256 = arith.addf %254, %255 : vector<8x512xf32>
    %257 = vector.extract_strided_slice %256 {offsets = [0, 0], sizes = [8, 384], strides = [1, 1]} : vector<8x512xf32> to vector<8x384xf32>
    %258 = arith.negf %257 : vector<8x384xf32>
    %259 = math.exp %258 : vector<8x384xf32>
    %cst_46 = arith.constant 1.000000e+00 : f32
    %260 = vector.broadcast %cst_46 : f32 to vector<8x384xf32>
    %261 = arith.addf %260, %259 : vector<8x384xf32>
    %262 = arith.divf %260, %261 : vector<8x384xf32>
    %263 = vector.extract_strided_slice %262 {offsets = [0, 0], sizes = [8, 128], strides = [1, 1]} : vector<8x384xf32> to vector<8x128xf32>
    %264 = vector.extract_strided_slice %262 {offsets = [0, 128], sizes = [8, 128], strides = [1, 1]} : vector<8x384xf32> to vector<8x128xf32>
    %265 = vector.extract_strided_slice %262 {offsets = [0, 256], sizes = [8, 128], strides = [1, 1]} : vector<8x384xf32> to vector<8x128xf32>
    %266 = vector.extract_strided_slice %256 {offsets = [0, 384], sizes = [8, 128], strides = [1, 1]} : vector<8x512xf32> to vector<8x128xf32>
    %267 = math.tanh %266 : vector<8x128xf32>
    %268 = arith.mulf %264, %227 : vector<8x128xf32>
    %269 = arith.mulf %263, %267 : vector<8x128xf32>
    %270 = arith.addf %268, %269 : vector<8x128xf32>
    %271 = math.tanh %270 : vector<8x128xf32>
    %272 = arith.mulf %265, %271 : vector<8x128xf32>
    %273 = arith.truncf %272 : vector<8x128xf32> to vector<8x128xbf16>
    %cst_47 = arith.constant dense<0.000000e+00> : vector<8x512xf32>
    %274 = tpu.matmul %273, %5, %cst_47 {dimension_numbers = #tpu.dot_dimension_numbers<[1], [0], [0], [1], [0, 0, 1, 1], [], []>} : vector<8x128xbf16>, vector<128x512xbf16>, vector<8x512xf32> -> vector<8x512xf32>
    %275 = vector.extract_strided_slice %13 {offsets = [48, 0], sizes = [8, 512], strides = [1, 1]} : vector<64x512xf32> to vector<8x512xf32>
    %276 = arith.truncf %251 : vector<8x128xf32> to vector<8x128xbf16>
    %cst_48 = arith.constant dense<0.000000e+00> : vector<8x512xf32>
    %277 = tpu.matmul %276, %2, %cst_48 {dimension_numbers = #tpu.dot_dimension_numbers<[1], [0], [0], [1], [0, 0, 1, 1], [], []>} : vector<8x128xbf16>, vector<128x512xbf16>, vector<8x512xf32> -> vector<8x512xf32>
    %278 = arith.addf %275, %277 : vector<8x512xf32>
    %279 = vector.extract_strided_slice %278 {offsets = [0, 0], sizes = [8, 384], strides = [1, 1]} : vector<8x512xf32> to vector<8x384xf32>
    %280 = arith.negf %279 : vector<8x384xf32>
    %281 = math.exp %280 : vector<8x384xf32>
    %cst_49 = arith.constant 1.000000e+00 : f32
    %282 = vector.broadcast %cst_49 : f32 to vector<8x384xf32>
    %283 = arith.addf %282, %281 : vector<8x384xf32>
    %284 = arith.divf %282, %283 : vector<8x384xf32>
    %285 = vector.extract_strided_slice %284 {offsets = [0, 0], sizes = [8, 128], strides = [1, 1]} : vector<8x384xf32> to vector<8x128xf32>
    %286 = vector.extract_strided_slice %284 {offsets = [0, 128], sizes = [8, 128], strides = [1, 1]} : vector<8x384xf32> to vector<8x128xf32>
    %287 = vector.extract_strided_slice %284 {offsets = [0, 256], sizes = [8, 128], strides = [1, 1]} : vector<8x384xf32> to vector<8x128xf32>
    %288 = vector.extract_strided_slice %278 {offsets = [0, 384], sizes = [8, 128], strides = [1, 1]} : vector<8x512xf32> to vector<8x128xf32>
    %289 = math.tanh %288 : vector<8x128xf32>
    %290 = arith.mulf %286, %249 : vector<8x128xf32>
    %291 = arith.mulf %285, %289 : vector<8x128xf32>
    %292 = arith.addf %290, %291 : vector<8x128xf32>
    %293 = math.tanh %292 : vector<8x128xf32>
    %294 = arith.mulf %287, %293 : vector<8x128xf32>
    %295 = arith.truncf %294 : vector<8x128xf32> to vector<8x128xbf16>
    %cst_50 = arith.constant dense<0.000000e+00> : vector<8x512xf32>
    %296 = tpu.matmul %295, %4, %cst_50 {dimension_numbers = #tpu.dot_dimension_numbers<[1], [0], [0], [1], [0, 0, 1, 1], [], []>} : vector<8x128xbf16>, vector<128x512xbf16>, vector<8x512xf32> -> vector<8x512xf32>
    %297 = arith.addf %296, %274 : vector<8x512xf32>
    %298 = vector.broadcast %6 : vector<1x512xf32> to vector<8x512xf32>
    %299 = arith.addf %297, %298 : vector<8x512xf32>
    %300 = vector.extract_strided_slice %299 {offsets = [0, 0], sizes = [8, 384], strides = [1, 1]} : vector<8x512xf32> to vector<8x384xf32>
    %301 = arith.negf %300 : vector<8x384xf32>
    %302 = math.exp %301 : vector<8x384xf32>
    %cst_51 = arith.constant 1.000000e+00 : f32
    %303 = vector.broadcast %cst_51 : f32 to vector<8x384xf32>
    %304 = arith.addf %303, %302 : vector<8x384xf32>
    %305 = arith.divf %303, %304 : vector<8x384xf32>
    %306 = vector.extract_strided_slice %305 {offsets = [0, 0], sizes = [8, 128], strides = [1, 1]} : vector<8x384xf32> to vector<8x128xf32>
    %307 = vector.extract_strided_slice %305 {offsets = [0, 128], sizes = [8, 128], strides = [1, 1]} : vector<8x384xf32> to vector<8x128xf32>
    %308 = vector.extract_strided_slice %305 {offsets = [0, 256], sizes = [8, 128], strides = [1, 1]} : vector<8x384xf32> to vector<8x128xf32>
    %309 = vector.extract_strided_slice %299 {offsets = [0, 384], sizes = [8, 128], strides = [1, 1]} : vector<8x512xf32> to vector<8x128xf32>
    %310 = math.tanh %309 : vector<8x128xf32>
    %311 = arith.mulf %307, %270 : vector<8x128xf32>
    %312 = arith.mulf %306, %310 : vector<8x128xf32>
    %313 = arith.addf %311, %312 : vector<8x128xf32>
    %314 = math.tanh %313 : vector<8x128xf32>
    %315 = arith.mulf %308, %314 : vector<8x128xf32>
    %316 = arith.truncf %315 : vector<8x128xf32> to vector<8x128xbf16>
    %cst_52 = arith.constant dense<0.000000e+00> : vector<8x512xf32>
    %317 = tpu.matmul %316, %5, %cst_52 {dimension_numbers = #tpu.dot_dimension_numbers<[1], [0], [0], [1], [0, 0, 1, 1], [], []>} : vector<8x128xbf16>, vector<128x512xbf16>, vector<8x512xf32> -> vector<8x512xf32>
    %318 = vector.extract_strided_slice %13 {offsets = [56, 0], sizes = [8, 512], strides = [1, 1]} : vector<64x512xf32> to vector<8x512xf32>
    %319 = arith.truncf %294 : vector<8x128xf32> to vector<8x128xbf16>
    %cst_53 = arith.constant dense<0.000000e+00> : vector<8x512xf32>
    %320 = tpu.matmul %319, %2, %cst_53 {dimension_numbers = #tpu.dot_dimension_numbers<[1], [0], [0], [1], [0, 0, 1, 1], [], []>} : vector<8x128xbf16>, vector<128x512xbf16>, vector<8x512xf32> -> vector<8x512xf32>
    %321 = arith.addf %318, %320 : vector<8x512xf32>
    %322 = vector.extract_strided_slice %321 {offsets = [0, 0], sizes = [8, 384], strides = [1, 1]} : vector<8x512xf32> to vector<8x384xf32>
    %323 = arith.negf %322 : vector<8x384xf32>
    %324 = math.exp %323 : vector<8x384xf32>
    %cst_54 = arith.constant 1.000000e+00 : f32
    %325 = vector.broadcast %cst_54 : f32 to vector<8x384xf32>
    %326 = arith.addf %325, %324 : vector<8x384xf32>
    %327 = arith.divf %325, %326 : vector<8x384xf32>
    %328 = vector.extract_strided_slice %327 {offsets = [0, 0], sizes = [8, 128], strides = [1, 1]} : vector<8x384xf32> to vector<8x128xf32>
    %329 = vector.extract_strided_slice %327 {offsets = [0, 128], sizes = [8, 128], strides = [1, 1]} : vector<8x384xf32> to vector<8x128xf32>
    %330 = vector.extract_strided_slice %327 {offsets = [0, 256], sizes = [8, 128], strides = [1, 1]} : vector<8x384xf32> to vector<8x128xf32>
    %331 = vector.extract_strided_slice %321 {offsets = [0, 384], sizes = [8, 128], strides = [1, 1]} : vector<8x512xf32> to vector<8x128xf32>
    %332 = math.tanh %331 : vector<8x128xf32>
    %333 = arith.mulf %329, %292 : vector<8x128xf32>
    %334 = arith.mulf %328, %332 : vector<8x128xf32>
    %335 = arith.addf %333, %334 : vector<8x128xf32>
    %336 = math.tanh %335 : vector<8x128xf32>
    %337 = arith.mulf %330, %336 : vector<8x128xf32>
    %338 = arith.truncf %337 : vector<8x128xf32> to vector<8x128xbf16>
    %cst_55 = arith.constant dense<0.000000e+00> : vector<8x512xf32>
    %339 = tpu.matmul %338, %4, %cst_55 {dimension_numbers = #tpu.dot_dimension_numbers<[1], [0], [0], [1], [0, 0, 1, 1], [], []>} : vector<8x128xbf16>, vector<128x512xbf16>, vector<8x512xf32> -> vector<8x512xf32>
    %340 = arith.addf %339, %317 : vector<8x512xf32>
    %341 = vector.broadcast %6 : vector<1x512xf32> to vector<8x512xf32>
    %342 = arith.addf %340, %341 : vector<8x512xf32>
    %343 = vector.extract_strided_slice %342 {offsets = [0, 0], sizes = [8, 384], strides = [1, 1]} : vector<8x512xf32> to vector<8x384xf32>
    %344 = arith.negf %343 : vector<8x384xf32>
    %345 = math.exp %344 : vector<8x384xf32>
    %cst_56 = arith.constant 1.000000e+00 : f32
    %346 = vector.broadcast %cst_56 : f32 to vector<8x384xf32>
    %347 = arith.addf %346, %345 : vector<8x384xf32>
    %348 = arith.divf %346, %347 : vector<8x384xf32>
    %349 = vector.extract_strided_slice %348 {offsets = [0, 0], sizes = [8, 128], strides = [1, 1]} : vector<8x384xf32> to vector<8x128xf32>
    %350 = vector.extract_strided_slice %348 {offsets = [0, 128], sizes = [8, 128], strides = [1, 1]} : vector<8x384xf32> to vector<8x128xf32>
    %351 = vector.extract_strided_slice %348 {offsets = [0, 256], sizes = [8, 128], strides = [1, 1]} : vector<8x384xf32> to vector<8x128xf32>
    %352 = vector.extract_strided_slice %342 {offsets = [0, 384], sizes = [8, 128], strides = [1, 1]} : vector<8x512xf32> to vector<8x128xf32>
    %353 = math.tanh %352 : vector<8x128xf32>
    %354 = arith.mulf %350, %313 : vector<8x128xf32>
    %355 = arith.mulf %349, %353 : vector<8x128xf32>
    %356 = arith.addf %354, %355 : vector<8x128xf32>
    %357 = math.tanh %356 : vector<8x128xf32>
    %358 = arith.mulf %351, %357 : vector<8x128xf32>
    %359 = vector.broadcast %7 : vector<1x128xf32> to vector<8x128xf32>
    %360 = arith.mulf %358, %359 : vector<8x128xf32>
    %cst_57 = arith.constant dense<0.000000e+00> : vector<8xf32>
    %361 = vector.multi_reduction <add>, %360, %cst_57 [1] : vector<8x128xf32> to vector<8xf32>
    %362 = vector.shape_cast %361 : vector<8xf32> to vector<8x1xf32>
    %363 = vector.broadcast %8 : vector<1x1xf32> to vector<8x1xf32>
    %364 = arith.addf %362, %363 : vector<8x1xf32>
    %c0_58 = arith.constant 0 : index
    %c0_59 = arith.constant 0 : index
    %365 = vector.load %arg9[%c0_58, %c0_59] : memref<8x1xf32, #tpu.memory_space<vmem>>, vector<8x1xf32>
    tpu.vector_store %arg9[%c0_58, %c0_59], %364 {strides = array<i32>} : memref<8x1xf32, #tpu.memory_space<vmem>>, vector<8x1xf32>,
    return
  }
}

</mosaic_0001>

<llo_original>
// kernel: tpu_custom_call.1
$region0: #{tpu_custom_call.1}
  #allocation0 [shape = 'u32[]', space=smem, size = 0x4, offset = 0x4, fixed_abs, tag = 'smem constant byte address 0x4 - core index']
  #allocation1 [shape = 'u32[144,128]{1,0:T(1,128)}', space=vmem, size = 0x12000, scoped, tag = 'internal scratch']
  #allocation2 [shape = 'f32[1,1]{1,0:T(1,128)S(1)}', space=vmem, size = 0x200, scoped, tag = 'scoped memory for tpu_custom_call.1']
  %s0 = inlined_call_operand.vmem [shape: f32[64,1], index: 0, kind: input, shape index: {}]
  %s1 = inlined_call_operand.vmem [shape: f32[1,512], index: 1, kind: input, shape index: {}]
  %s2 = inlined_call_operand.hbm [shape: bf16[128,512], index: 2, kind: input, shape index: {}]
  %s3 = inlined_call_operand.vmem [shape: f32[1,512], index: 3, kind: input, shape index: {}]
  %s4 = inlined_call_operand.hbm [shape: bf16[128,512], index: 4, kind: input, shape index: {}]
  %s5 = inlined_call_operand.hbm [shape: bf16[128,512], index: 5, kind: input, shape index: {}]
  %s6 = inlined_call_operand.vmem [shape: f32[1,512], index: 6, kind: input, shape index: {}]
  %s7 = inlined_call_operand.vmem [shape: f32[1,128], index: 7, kind: input, shape index: {}]
  %s8 = inlined_call_operand.<no memory space> [shape: f32[1,1], index: 8, kind: input, shape index: {}]
  %s9 = inlined_call_operand.vmem [shape: f32[8,1], index: 9, kind: output, shape index: {}]
  %s10 = sld [smem:[#allocation0]]
  $region58: #{tpu_custom_call.1} parent=0
    _
  %s12 = ssub.s32 1, %s10
  %s13 = scalar_select 0, %s12, %s10
  %v14 = vstv %s8
  %15 = vst [vmem:[#allocation2] sm:$0x1] %v14
  $region1: #{tpu_custom_call.1} parent=0
    #allocation3 [shape = 'u8[131072]{0}', space=vmem, size = 0x20000, scoped, tag = 'input window, operand 2, single buffered']
    #allocation4 [shape = 's32[1]{0}', space=sflag, size = 0x4, scoped, tag = 'scoped memory for tpu_custom_call.1']
    #allocation5 [shape = 'u8[131072]{0}', space=vmem, size = 0x20000, scoped, tag = 'input window, operand 4, single buffered']
    #allocation6 [shape = 's32[1]{0}', space=sflag, size = 0x4, scoped, tag = 'scoped memory for tpu_custom_call.1']
    #allocation7 [shape = 'u8[131072]{0}', space=vmem, size = 0x20000, scoped, tag = 'input window, operand 5, single buffered']
    %16 = vsyncpa [#allocation4], 0
    %17 = vsyncpa [#allocation6], 0
    // Predicated region
    $region2: #{tpu_custom_call.1} parent=1 // pred_check
      _
    $region3: #{tpu_custom_call.1} parent=1 // pred_check_branch
      %19 = sbr.rel (0) target = $region5
    $region4: #{tpu_custom_call.1} parent=1 // pred_region
      _
    $region5: #{tpu_custom_call.1} parent=1 // pred_fallthru
      _
    // Predicated region
    $region6: #{tpu_custom_call.1} parent=1 // pred_check
      _
    $region7: #{tpu_custom_call.1} parent=1 // pred_check_branch
      %21 = sbr.rel (0) target = $region9
    $region8: #{tpu_custom_call.1} parent=1 // pred_region
      _
    $region9: #{tpu_custom_call.1} parent=1 // pred_fallthru
      _
    // Predicated region
    $region10: #{tpu_custom_call.1} parent=1 // pred_check
      _
    $region11: #{tpu_custom_call.1} parent=1 // pred_check_branch
      %23 = sbr.rel (0) target = $region13
    $region12: #{tpu_custom_call.1} parent=1 // pred_region
      %s25 = ssub.s32 4096, 4096
      %26 = vsyncadd [#allocation4], %s25
      %s27 = sshll.u32 [#allocation3], 4
      %s28 = int_to_ptr.vmem [resolvable:$true] %s27
      %33 = dma.hbm_to_vmem [thread:$0]  %s2, 4096, %s28, [#allocation4], 256, 256, 16
    $region13: #{tpu_custom_call.1} parent=1 // pred_fallthru
      _
    // Predicated region
    $region14: #{tpu_custom_call.1} parent=1 // pred_check
      _
    $region15: #{tpu_custom_call.1} parent=1 // pred_check_branch
      %35 = sbr.rel (0) target = $region17
    $region16: #{tpu_custom_call.1} parent=1 // pred_region
      _
    $region17: #{tpu_custom_call.1} parent=1 // pred_fallthru
      _
    // Predicated region
    $region18: #{tpu_custom_call.1} parent=1 // pred_check
      _
    $region19: #{tpu_custom_call.1} parent=1 // pred_check_branch
      %37 = sbr.rel (0) target = $region21
    $region20: #{tpu_custom_call.1} parent=1 // pred_region
      %s39 = ssub.s32 4096, 4096
      %40 = vsyncadd [#allocation6], %s39
      %s41 = sshll.u32 [#allocation5], 4
      %s42 = int_to_ptr.vmem [resolvable:$true] %s41
      %47 = dma.hbm_to_vmem [thread:$0]  %s4, 4096, %s42, [#allocation6], 256, 256, 16
    $region21: #{tpu_custom_call.1} parent=1 // pred_fallthru
      _
    // Predicated region
    $region22: #{tpu_custom_call.1} parent=1 // pred_check
      _
    $region23: #{tpu_custom_call.1} parent=1 // pred_check_branch
      %49 = sbr.rel (0) target = $region25
    $region24: #{tpu_custom_call.1} parent=1 // pred_region
      %s51 = ssub.s32 4096, 4096
      %52 = vsyncadd [#allocation6], %s51
      %s53 = sshll.u32 [#allocation7], 4
      %s54 = int_to_ptr.vmem [resolvable:$true] %s53
      %59 = dma.hbm_to_vmem [thread:$0]  %s5, 4096, %s54, [#allocation6], 256, 256, 16
    $region25: #{tpu_custom_call.1} parent=1 // pred_fallthru
      _
    // Predicated region
    $region26: #{tpu_custom_call.1} parent=1 // pred_check
      _
    $region27: #{tpu_custom_call.1} parent=1 // pred_check_branch
      %61 = sbr.rel (0) target = $region29
    $region28: #{tpu_custom_call.1} parent=1 // pred_region
      _
    $region29: #{tpu_custom_call.1} parent=1 // pred_fallthru
      _
    // Predicated region
    $region30: #{tpu_custom_call.1} parent=1 // pred_check
      _
    $region31: #{tpu_custom_call.1} parent=1 // pred_check_branch
      %63 = sbr.rel (0) target = $region33
    $region32: #{tpu_custom_call.1} parent=1 // pred_region
      _
    $region33: #{tpu_custom_call.1} parent=1 // pred_fallthru
      _
    // Predicated region
    $region34: #{tpu_custom_call.1} parent=1 // pred_check
      _
    $region35: #{tpu_custom_call.1} parent=1 // pred_check_branch
      %65 = sbr.rel (0) target = $region37
    $region36: #{tpu_custom_call.1} parent=1 // pred_region
      _
    $region37: #{tpu_custom_call.1} parent=1 // pred_fallthru
      _
    // Predicated region
    $region38: #{tpu_custom_call.1} parent=1 // pred_check
      _
    $region39: #{tpu_custom_call.1} parent=1 // pred_check_branch
      %67 = sbr.rel (0) target = $region41
    $region40: #{tpu_custom_call.1} parent=1 // pred_region
      %68 = dma.done [#allocation4], 4096
    $region41: #{tpu_custom_call.1} parent=1 // pred_fallthru
      _
    // Predicated region
    $region42: #{tpu_custom_call.1} parent=1 // pred_check
      _
    $region43: #{tpu_custom_call.1} parent=1 // pred_check_branch
      %70 = sbr.rel (0) target = $region45
    $region44: #{tpu_custom_call.1} parent=1 // pred_region
      %71 = dma.done [#allocation6], 4096
    $region45: #{tpu_custom_call.1} parent=1 // pred_fallthru
      _
    // Predicated region
    $region46: #{tpu_custom_call.1} parent=1 // pred_check
      _
    $region47: #{tpu_custom_call.1} parent=1 // pred_check_branch
      %73 = sbr.rel (0) target = $region49
    $region48: #{tpu_custom_call.1} parent=1 // pred_region
      %74 = dma.done [#allocation6], 4096
    $region49: #{tpu_custom_call.1} parent=1 // pred_fallthru
      _
    %v76 = vld [vmem:[%s0] sm:$0xff]
    %v77 = vld [vmem:[%s0 + $0x8] sm:$0xff]
    %v78 = vld [vmem:[%s0 + $0x10] sm:$0xff]
    %v79 = vld [vmem:[%s0 + $0x18] sm:$0xff]
    %v80 = vld [vmem:[%s0 + $0x20] sm:$0xff]
    %v81 = vld [vmem:[%s0 + $0x28] sm:$0xff]
    %v82 = vld [vmem:[%s0 + $0x30] sm:$0xff]
    %v83 = vld [vmem:[%s0 + $0x38] sm:$0xff]
    %v84 = vld [vmem:[%s1] sm:$0xf]
    %v85 = vld [vmem:[#allocation3] sm:$0xff]
    %v86 = vld [vmem:[#allocation3 + $0x8] sm:$0xff]
    %v87 = vld [vmem:[#allocation3 + $0x10] sm:$0xff]
    %v88 = vld [vmem:[#allocation3 + $0x18] sm:$0xff]
    %v89 = vld [vmem:[#allocation3 + $0x20] sm:$0xff]
    %v90 = vld [vmem:[#allocation3 + $0x28] sm:$0xff]
    %v91 = vld [vmem:[#allocation3 + $0x30] sm:$0xff]
    %v92 = vld [vmem:[#allocation3 + $0x38] sm:$0xff]
    %v93 = vld [vmem:[#allocation3 + $0x40] sm:$0xff]
    %v94 = vld [vmem:[#allocation3 + $0x48] sm:$0xff]
    %v95 = vld [vmem:[#allocation3 + $0x50] sm:$0xff]
    %v96 = vld [vmem:[#allocation3 + $0x58] sm:$0xff]
    %v97 = vld [vmem:[#allocation3 + $0x60] sm:$0xff]
    %v98 = vld [vmem:[#allocation3 + $0x68] sm:$0xff]
    %v99 = vld [vmem:[#allocation3 + $0x70] sm:$0xff]
    %v100 = vld [vmem:[#allocation3 + $0x78] sm:$0xff]
    %v101 = vld [vmem:[#allocation3 + $0x80] sm:$0xff]
    %v102 = vld [vmem:[#allocation3 + $0x88] sm:$0xff]
    %v103 = vld [vmem:[#allocation3 + $0x90] sm:$0xff]
    %v104 = vld [vmem:[#allocation3 + $0x98] sm:$0xff]
    %v105 = vld [vmem:[#allocation3 + $0xa0] sm:$0xff]
    %v106 = vld [vmem:[#allocation3 + $0xa8] sm:$0xff]
    %v107 = vld [vmem:[#allocation3 + $0xb0] sm:$0xff]
    %v108 = vld [vmem:[#allocation3 + $0xb8] sm:$0xff]
    %v109 = vld [vmem:[#allocation3 + $0xc0] sm:$0xff]
    %v110 = vld [vmem:[#allocation3 + $0xc8] sm:$0xff]
    %v111 = vld [vmem:[#allocation3 + $0xd0] sm:$0xff]
    %v112 = vld [vmem:[#allocation3 + $0xd8] sm:$0xff]
    %v113 = vld [vmem:[#allocation3 + $0xe0] sm:$0xff]
    %v114 = vld [vmem:[#allocation3 + $0xe8] sm:$0xff]
    %v115 = vld [vmem:[#allocation3 + $0xf0] sm:$0xff]
    %v116 = vld [vmem:[#allocation3 + $0xf8] sm:$0xff]
    %v117 = vld [vmem:[%s3] sm:$0xf]
    %v118 = vld [vmem:[#allocation5] sm:$0xff]
    %v119 = vld [vmem:[#allocation5 + $0x8] sm:$0xff]
    %v120 = vld [vmem:[#allocation5 + $0x10] sm:$0xff]
    %v121 = vld [vmem:[#allocation5 + $0x18] sm:$0xff]
    %v122 = vld [vmem:[#allocation5 + $0x20] sm:$0xff]
    %v123 = vld [vmem:[#allocation5 + $0x28] sm:$0xff]
    %v124 = vld [vmem:[#allocation5 + $0x30] sm:$0xff]
    %v125 = vld [vmem:[#allocation5 + $0x38] sm:$0xff]
    %v126 = vld [vmem:[#allocation5 + $0x40] sm:$0xff]
    %v127 = vld [vmem:[#allocation5 + $0x48] sm:$0xff]
    %v128 = vld [vmem:[#allocation5 + $0x50] sm:$0xff]
    %v129 = vld [vmem:[#allocation5 + $0x58] sm:$0xff]
    %v130 = vld [vmem:[#allocation5 + $0x60] sm:$0xff]
    %v131 = vld [vmem:[#allocation5 + $0x68] sm:$0xff]
    %v132 = vld [vmem:[#allocation5 + $0x70] sm:$0xff]
    %v133 = vld [vmem:[#allocation5 + $0x78] sm:$0xff]
    %v134 = vld [vmem:[#allocation5 + $0x80] sm:$0xff]
    %v135 = vld [vmem:[#allocation5 + $0x88] sm:$0xff]
    %v136 = vld [vmem:[#allocation5 + $0x90] sm:$0xff]
    %v137 = vld [vmem:[#allocation5 + $0x98] sm:$0xff]
    %v138 = vld [vmem:[#allocation5 + $0xa0] sm:$0xff]
    %v139 = vld [vmem:[#allocation5 + $0xa8] sm:$0xff]
    %v140 = vld [vmem:[#allocation5 + $0xb0] sm:$0xff]
    %v141 = vld [vmem:[#allocation5 + $0xb8] sm:$0xff]
    %v142 = vld [vmem:[#allocation5 + $0xc0] sm:$0xff]
    %v143 = vld [vmem:[#allocation5 + $0xc8] sm:$0xff]
    %v144 = vld [vmem:[#allocation5 + $0xd0] sm:$0xff]
    %v145 = vld [vmem:[#allocation5 + $0xd8] sm:$0xff]
    %v146 = vld [vmem:[#allocation5 + $0xe0] sm:$0xff]
    %v147 = vld [vmem:[#allocation5 + $0xe8] sm:$0xff]
    %v148 = vld [vmem:[#allocation5 + $0xf0] sm:$0xff]
    %v149 = vld [vmem:[#allocation5 + $0xf8] sm:$0xff]
    %v150 = vld [vmem:[#allocation7] sm:$0xff]
    %v151 = vld [vmem:[#allocation7 + $0x8] sm:$0xff]
    %v152 = vld [vmem:[#allocation7 + $0x10] sm:$0xff]
    %v153 = vld [vmem:[#allocation7 + $0x18] sm:$0xff]
    %v154 = vld [vmem:[#allocation7 + $0x20] sm:$0xff]
    %v155 = vld [vmem:[#allocation7 + $0x28] sm:$0xff]
    %v156 = vld [vmem:[#allocation7 + $0x30] sm:$0xff]
    %v157 = vld [vmem:[#allocation7 + $0x38] sm:$0xff]
    %v158 = vld [vmem:[#allocation7 + $0x40] sm:$0xff]
    %v159 = vld [vmem:[#allocation7 + $0x48] sm:$0xff]
    %v160 = vld [vmem:[#allocation7 + $0x50] sm:$0xff]
    %v161 = vld [vmem:[#allocation7 + $0x58] sm:$0xff]
    %v162 = vld [vmem:[#allocation7 + $0x60] sm:$0xff]
    %v163 = vld [vmem:[#allocation7 + $0x68] sm:$0xff]
    %v164 = vld [vmem:[#allocation7 + $0x70] sm:$0xff]
    %v165 = vld [vmem:[#allocation7 + $0x78] sm:$0xff]
    %v166 = vld [vmem:[#allocation7 + $0x80] sm:$0xff]
    %v167 = vld [vmem:[#allocation7 + $0x88] sm:$0xff]
    %v168 = vld [vmem:[#allocation7 + $0x90] sm:$0xff]
    %v169 = vld [vmem:[#allocation7 + $0x98] sm:$0xff]
    %v170 = vld [vmem:[#allocation7 + $0xa0] sm:$0xff]
    %v171 = vld [vmem:[#allocation7 + $0xa8] sm:$0xff]
    %v172 = vld [vmem:[#allocation7 + $0xb0] sm:$0xff]
    %v173 = vld [vmem:[#allocation7 + $0xb8] sm:$0xff]
    %v174 = vld [vmem:[#allocation7 + $0xc0] sm:$0xff]
    %v175 = vld [vmem:[#allocation7 + $0xc8] sm:$0xff]
    %v176 = vld [vmem:[#allocation7 + $0xd0] sm:$0xff]
    %v177 = vld [vmem:[#allocation7 + $0xd8] sm:$0xff]
    %v178 = vld [vmem:[#allocation7 + $0xe0] sm:$0xff]
    %v179 = vld [vmem:[#allocation7 + $0xe8] sm:$0xff]
    %v180 = vld [vmem:[#allocation7 + $0xf0] sm:$0xff]
    %v181 = vld [vmem:[#allocation7 + $0xf8] sm:$0xff]
    %v182 = vld [vmem:[%s6] sm:$0xf]
    %v183 = vld [vmem:[%s7] sm:$0x1]
    %v184 = vld [vmem:[#allocation2] sm:$0x1]
    %186 = vset.pattern.permute.xlu0 0
    %187 = vperm.xlu0 %186, %v76
    %v188 = vpop.permute.xlu0 %187
    %191 = vset.pattern.permute.xlu0 0
    %192 = vperm.xlu0 %191, %v77
    %v193 = vpop.permute.xlu0 %192
    %196 = vset.pattern.permute.xlu0 0
    %197 = vperm.xlu0 %196, %v78
    %v198 = vpop.permute.xlu0 %197
    %201 = vset.pattern.permute.xlu0 0
    %202 = vperm.xlu0 %201, %v79
    %v203 = vpop.permute.xlu0 %202
    %206 = vset.pattern.permute.xlu0 0
    %207 = vperm.xlu0 %206, %v80
    %v208 = vpop.permute.xlu0 %207
    %211 = vset.pattern.permute.xlu0 0
    %212 = vperm.xlu0 %211, %v81
    %v213 = vpop.permute.xlu0 %212
    %216 = vset.pattern.permute.xlu0 0
    %217 = vperm.xlu0 %216, %v82
    %v218 = vpop.permute.xlu0 %217
    %221 = vset.pattern.permute.xlu0 0
    %222 = vperm.xlu0 %221, %v83
    %v223 = vpop.permute.xlu0 %222
    %v226 = vlaneseq
    %v227 = vshrl.u32 %v226, 7
    %v228 = vsub.s32 0, %v227
    %v229 = vrot.slane %v84, %v228
    %v230 = vlaneseq
    %v231 = vshrl.u32 %v230, 7
    %v232 = vsub.s32 1, %v231
    %v233 = vrot.slane %v84, %v232
    %v234 = vlaneseq
    %v235 = vshrl.u32 %v234, 7
    %v236 = vsub.s32 2, %v235
    %v237 = vrot.slane %v84, %v236
    %v238 = vlaneseq
    %v239 = vshrl.u32 %v238, 7
    %v240 = vsub.s32 3, %v239
    %v241 = vrot.slane %v84, %v240
    %v246 = vmul.f32 %v188, %v229
    %v247 = vmul.f32 %v188, %v233
    %v248 = vmul.f32 %v188, %v237
    %v249 = vmul.f32 %v188, %v241
    %v250 = vmul.f32 %v193, %v229
    %v251 = vmul.f32 %v193, %v233
    %v252 = vmul.f32 %v193, %v237
    %v253 = vmul.f32 %v193, %v241
    %v254 = vmul.f32 %v198, %v229
    %v255 = vmul.f32 %v198, %v233
    %v256 = vmul.f32 %v198, %v237
    %v257 = vmul.f32 %v198, %v241
    %v258 = vmul.f32 %v203, %v229
    %v259 = vmul.f32 %v203, %v233
    %v260 = vmul.f32 %v203, %v237
    %v261 = vmul.f32 %v203, %v241
    %v262 = vmul.f32 %v208, %v229
    %v263 = vmul.f32 %v208, %v233
    %v264 = vmul.f32 %v208, %v237
    %v265 = vmul.f32 %v208, %v241
    %v266 = vmul.f32 %v213, %v229
    %v267 = vmul.f32 %v213, %v233
    %v268 = vmul.f32 %v213, %v237
    %v269 = vmul.f32 %v213, %v241
    %v270 = vmul.f32 %v218, %v229
    %v271 = vmul.f32 %v218, %v233
    %v272 = vmul.f32 %v218, %v237
    %v273 = vmul.f32 %v218, %v241
    %v274 = vmul.f32 %v223, %v229
    %v275 = vmul.f32 %v223, %v233
    %v276 = vmul.f32 %v223, %v237
    %v277 = vmul.f32 %v223, %v241
    %v279 = vlaneseq
    %v280 = vshrl.u32 %v279, 7
    %v281 = vsub.s32 0, %v280
    %v282 = vrot.slane %v117, %v281
    %v283 = vlaneseq
    %v284 = vshrl.u32 %v283, 7
    %v285 = vsub.s32 1, %v284
    %v286 = vrot.slane %v117, %v285
    %v287 = vlaneseq
    %v288 = vshrl.u32 %v287, 7
    %v289 = vsub.s32 2, %v288
    %v290 = vrot.slane %v117, %v289
    %v291 = vlaneseq
    %v292 = vshrl.u32 %v291, 7
    %v293 = vsub.s32 3, %v292
    %v294 = vrot.slane %v117, %v293
    %v299 = vadd.f32 %v246, %v282
    %v300 = vadd.f32 %v247, %v286
    %v301 = vadd.f32 %v248, %v290
    %v302 = vadd.f32 %v249, %v294
    %v303 = vadd.f32 %v250, %v282
    %v304 = vadd.f32 %v251, %v286
    %v305 = vadd.f32 %v252, %v290
    %v306 = vadd.f32 %v253, %v294
    %v307 = vadd.f32 %v254, %v282
    %v308 = vadd.f32 %v255, %v286
    %v309 = vadd.f32 %v256, %v290
    %v310 = vadd.f32 %v257, %v294
    %v311 = vadd.f32 %v258, %v282
    %v312 = vadd.f32 %v259, %v286
    %v313 = vadd.f32 %v260, %v290
    %v314 = vadd.f32 %v261, %v294
    %v315 = vadd.f32 %v262, %v282
    %v316 = vadd.f32 %v263, %v286
    %v317 = vadd.f32 %v264, %v290
    %v318 = vadd.f32 %v265, %v294
    %v319 = vadd.f32 %v266, %v282
    %v320 = vadd.f32 %v267, %v286
    %v321 = vadd.f32 %v268, %v290
    %v322 = vadd.f32 %v269, %v294
    %v323 = vadd.f32 %v270, %v282
    %v324 = vadd.f32 %v271, %v286
    %v325 = vadd.f32 %v272, %v290
    %v326 = vadd.f32 %v273, %v294
    %v327 = vadd.f32 %v274, %v282
    %v328 = vadd.f32 %v275, %v286
    %v329 = vadd.f32 %v276, %v290
    %v330 = vadd.f32 %v277, %v294
    %v363 = vunpack.c.l.b16 %v150
    %v364 = vunpack.c.h.b16 %v150
    %v365 = vunpack.c.l.b16 %v151
    %v366 = vunpack.c.h.b16 %v151
    %v367 = vunpack.c.l.b16 %v152
    %v368 = vunpack.c.h.b16 %v152
    %v369 = vunpack.c.l.b16 %v153
    %v370 = vunpack.c.h.b16 %v153
    %v371 = vunpack.c.l.b16 %v154
    %v372 = vunpack.c.h.b16 %v154
    %v373 = vunpack.c.l.b16 %v155
    %v374 = vunpack.c.h.b16 %v155
    %v375 = vunpack.c.l.b16 %v156
    %v376 = vunpack.c.h.b16 %v156
    %v377 = vunpack.c.l.b16 %v157
    %v378 = vunpack.c.h.b16 %v157
    %v379 = vunpack.c.l.b16 %v158
    %v380 = vunpack.c.h.b16 %v158
    %v381 = vunpack.c.l.b16 %v159
    %v382 = vunpack.c.h.b16 %v159
    %v383 = vunpack.c.l.b16 %v160
    %v384 = vunpack.c.h.b16 %v160
    %v385 = vunpack.c.l.b16 %v161
    %v386 = vunpack.c.h.b16 %v161
    %v387 = vunpack.c.l.b16 %v162
    %v388 = vunpack.c.h.b16 %v162
    %v389 = vunpack.c.l.b16 %v163
    %v390 = vunpack.c.h.b16 %v163
    %v391 = vunpack.c.l.b16 %v164
    %v392 = vunpack.c.h.b16 %v164
    %v393 = vunpack.c.l.b16 %v165
    %v394 = vunpack.c.h.b16 %v165
    %v395 = vunpack.c.l.b16 %v166
    %v396 = vunpack.c.h.b16 %v166
    %v397 = vunpack.c.l.b16 %v167
    %v398 = vunpack.c.h.b16 %v167
    %v399 = vunpack.c.l.b16 %v168
    %v400 = vunpack.c.h.b16 %v168
    %v401 = vunpack.c.l.b16 %v169
    %v402 = vunpack.c.h.b16 %v169
    %v403 = vunpack.c.l.b16 %v170
    %v404 = vunpack.c.h.b16 %v170
    %v405 = vunpack.c.l.b16 %v171
    %v406 = vunpack.c.h.b16 %v171
    %v407 = vunpack.c.l.b16 %v172
    %v408 = vunpack.c.h.b16 %v172
    %v409 = vunpack.c.l.b16 %v173
    %v410 = vunpack.c.h.b16 %v173
    %v411 = vunpack.c.l.b16 %v174
    %v412 = vunpack.c.h.b16 %v174
    %v413 = vunpack.c.l.b16 %v175
    %v414 = vunpack.c.h.b16 %v175
    %v415 = vunpack.c.l.b16 %v176
    %v416 = vunpack.c.h.b16 %v176
    %v417 = vunpack.c.l.b16 %v177
    %v418 = vunpack.c.h.b16 %v177
    %v419 = vunpack.c.l.b16 %v178
    %v420 = vunpack.c.h.b16 %v178
    %v421 = vunpack.c.l.b16 %v179
    %v422 = vunpack.c.h.b16 %v179
    %v423 = vunpack.c.l.b16 %v180
    %v424 = vunpack.c.h.b16 %v180
    %v425 = vunpack.c.l.b16 %v181
    %v426 = vunpack.c.h.b16 %v181
    %v427 = vpack.c.b16 %v367, %v363
    %v428 = vpack.c.b16 %v368, %v364
    %v429 = vpack.c.b16 %v369, %v365
    %v430 = vpack.c.b16 %v370, %v366
    %v431 = vpack.c.b16 %v375, %v371
    %v432 = vpack.c.b16 %v376, %v372
    %v433 = vpack.c.b16 %v377, %v373
    %v434 = vpack.c.b16 %v378, %v374
    %v435 = vpack.c.b16 %v383, %v379
    %v436 = vpack.c.b16 %v384, %v380
    %v437 = vpack.c.b16 %v385, %v381
    %v438 = vpack.c.b16 %v386, %v382
    %v439 = vpack.c.b16 %v391, %v387
    %v440 = vpack.c.b16 %v392, %v388
    %v441 = vpack.c.b16 %v393, %v389
    %v442 = vpack.c.b16 %v394, %v390
    %v443 = vpack.c.b16 %v399, %v395
    %v444 = vpack.c.b16 %v400, %v396
    %v445 = vpack.c.b16 %v401, %v397
    %v446 = vpack.c.b16 %v402, %v398
    %v447 = vpack.c.b16 %v407, %v403
    %v448 = vpack.c.b16 %v408, %v404
    %v449 = vpack.c.b16 %v409, %v405
    %v450 = vpack.c.b16 %v410, %v406
    %v451 = vpack.c.b16 %v415, %v411
    %v452 = vpack.c.b16 %v416, %v412
    %v453 = vpack.c.b16 %v417, %v413
    %v454 = vpack.c.b16 %v418, %v414
    %v455 = vpack.c.b16 %v423, %v419
    %v456 = vpack.c.b16 %v424, %v420
    %v457 = vpack.c.b16 %v425, %v421
    %v458 = vpack.c.b16 %v426, %v422
    %491 = vmatprep.subr.bf16.mxu0 %v456
    %492 = vmatpush1.bf16.msra.mxu0 %v455
    %493 = vmatprep.subr.bf16.mxu0 %v452
    %494 = vmatpush1.bf16.msra.mxu0 %v451
    %495 = vmatprep.subr.bf16.mxu0 %v448
    %496 = vmatpush1.bf16.msra.mxu0 %v447
    %497 = vmatprep.subr.bf16.mxu0 %v444
    %498 = vmatpush1.bf16.msra.mxu0 %v443
    %499 = vmatprep.subr.bf16.mxu0 %v440
    %500 = vmatpush1.bf16.msra.mxu0 %v439
    %501 = vmatprep.subr.bf16.mxu0 %v436
    %502 = vmatpush1.bf16.msra.mxu0 %v435
    %503 = vmatprep.subr.bf16.mxu0 %v432
    %504 = vmatpush1.bf16.msra.mxu0 %v431
    %505 = vmatprep.subr.bf16.mxu0 %v428
    %506 = vmatpush1.bf16.msra.mxu0 %v427
    %507 = vmatprep.subr.bf16.mxu0 0
    %508 = vmatpush2.bf16.msra.mxu0 0
    %509 = vmatprep.subr.bf16.mxu0 0
    %510 = vmatpush2.bf16.msra.mxu0 0
    %511 = vmatprep.subr.bf16.mxu0 0
    %512 = vmatpush2.bf16.msra.mxu0 0
    %513 = vmatprep.subr.bf16.mxu0 0
    %514 = vmatpush2.bf16.msra.mxu0 0
    %515 = vmatprep.subr.bf16.mxu0 0
    %516 = vmatpush2.bf16.msra.mxu0 0
    %517 = vmatprep.subr.bf16.mxu0 0
    %518 = vmatpush2.bf16.msra.mxu0 0
    %519 = vmatprep.subr.bf16.mxu0 0
    %520 = vmatpush2.bf16.msra.mxu0 0
    %521 = vmatprep.subr.bf16.mxu0 0
    %522 = vmatpush2.bf16.msra.mxu0 0
    %523 = vmatprep.mubr.bf16.mxu0 0
    %524 = vmatmul.mubr.bf16.gmra.mxu0 0
    %v525 = vpop.f32.mrf.mxu0
    %v526 = vadd.f32 0.0, %v525
    %v527 = vpop.f32.mrf.mxu0
    %v528 = vadd.f32 0.0, %v527
    %v529 = vpop.f32.mrf.mxu0
    %v530 = vpop.f32.mrf.mxu0
    %531 = vdwg.mxu0
    %532 = vmatprep.subr.bf16.mxu0 %v458
    %533 = vmatpush1.bf16.msra.mxu0 %v457
    %534 = vmatprep.subr.bf16.mxu0 %v454
    %535 = vmatpush1.bf16.msra.mxu0 %v453
    %536 = vmatprep.subr.bf16.mxu0 %v450
    %537 = vmatpush1.bf16.msra.mxu0 %v449
    %538 = vmatprep.subr.bf16.mxu0 %v446
    %539 = vmatpush1.bf16.msra.mxu0 %v445
    %540 = vmatprep.subr.bf16.mxu0 %v442
    %541 = vmatpush1.bf16.msra.mxu0 %v441
    %542 = vmatprep.subr.bf16.mxu0 %v438
    %543 = vmatpush1.bf16.msra.mxu0 %v437
    %544 = vmatprep.subr.bf16.mxu0 %v434
    %545 = vmatpush1.bf16.msra.mxu0 %v433
    %546 = vmatprep.subr.bf16.mxu0 %v430
    %547 = vmatpush1.bf16.msra.mxu0 %v429
    %548 = vmatprep.subr.bf16.mxu0 0
    %549 = vmatpush2.bf16.msra.mxu0 0
    %550 = vmatprep.subr.bf16.mxu0 0
    %551 = vmatpush2.bf16.msra.mxu0 0
    %552 = vmatprep.subr.bf16.mxu0 0
    %553 = vmatpush2.bf16.msra.mxu0 0
    %554 = vmatprep.subr.bf16.mxu0 0
    %555 = vmatpush2.bf16.msra.mxu0 0
    %556 = vmatprep.subr.bf16.mxu0 0
    %557 = vmatpush2.bf16.msra.mxu0 0
    %558 = vmatprep.subr.bf16.mxu0 0
    %559 = vmatpush2.bf16.msra.mxu0 0
    %560 = vmatprep.subr.bf16.mxu0 0
    %561 = vmatpush2.bf16.msra.mxu0 0
    %562 = vmatprep.subr.bf16.mxu0 0
    %563 = vmatpush2.bf16.msra.mxu0 0
    %564 = vmatprep.mubr.bf16.mxu0 0
    %565 = vmatmul.mubr.bf16.gmra.mxu0 0
    %v566 = vpop.f32.mrf.mxu0
    %v567 = vadd.f32 0.0, %v566
    %v568 = vpop.f32.mrf.mxu0
    %v569 = vadd.f32 0.0, %v568
    %v570 = vpop.f32.mrf.mxu0
    %v571 = vpop.f32.mrf.mxu0
    %572 = vdwg.mxu0
    %v605 = vunpack.c.l.b16 %v85
    %v606 = vunpack.c.h.b16 %v85
    %v607 = vunpack.c.l.b16 %v86
    %v608 = vunpack.c.h.b16 %v86
    %v609 = vunpack.c.l.b16 %v87
    %v610 = vunpack.c.h.b16 %v87
    %v611 = vunpack.c.l.b16 %v88
    %v612 = vunpack.c.h.b16 %v88
    %v613 = vunpack.c.l.b16 %v89
    %v614 = vunpack.c.h.b16 %v89
    %v615 = vunpack.c.l.b16 %v90
    %v616 = vunpack.c.h.b16 %v90
    %v617 = vunpack.c.l.b16 %v91
    %v618 = vunpack.c.h.b16 %v91
    %v619 = vunpack.c.l.b16 %v92
    %v620 = vunpack.c.h.b16 %v92
    %v621 = vunpack.c.l.b16 %v93
    %v622 = vunpack.c.h.b16 %v93
    %v623 = vunpack.c.l.b16 %v94
    %v624 = vunpack.c.h.b16 %v94
    %v625 = vunpack.c.l.b16 %v95
    %v626 = vunpack.c.h.b16 %v95
    %v627 = vunpack.c.l.b16 %v96
    %v628 = vunpack.c.h.b16 %v96
    %v629 = vunpack.c.l.b16 %v97
    %v630 = vunpack.c.h.b16 %v97
    %v631 = vunpack.c.l.b16 %v98
    %v632 = vunpack.c.h.b16 %v98
    %v633 = vunpack.c.l.b16 %v99
    %v634 = vunpack.c.h.b16 %v99
    %v635 = vunpack.c.l.b16 %v100
    %v636 = vunpack.c.h.b16 %v100
    %v637 = vunpack.c.l.b16 %v101
    %v638 = vunpack.c.h.b16 %v101
    %v639 = vunpack.c.l.b16 %v102
    %v640 = vunpack.c.h.b16 %v102
    %v641 = vunpack.c.l.b16 %v103
    %v642 = vunpack.c.h.b16 %v103
    %v643 = vunpack.c.l.b16 %v104
    %v644 = vunpack.c.h.b16 %v104
    %v645 = vunpack.c.l.b16 %v105
    %v646 = vunpack.c.h.b16 %v105
    %v647 = vunpack.c.l.b16 %v106
    %v648 = vunpack.c.h.b16 %v106
    %v649 = vunpack.c.l.b16 %v107
    %v650 = vunpack.c.h.b16 %v107
    %v651 = vunpack.c.l.b16 %v108
    %v652 = vunpack.c.h.b16 %v108
    %v653 = vunpack.c.l.b16 %v109
    %v654 = vunpack.c.h.b16 %v109
    %v655 = vunpack.c.l.b16 %v110
    %v656 = vunpack.c.h.b16 %v110
    %v657 = vunpack.c.l.b16 %v111
    %v658 = vunpack.c.h.b16 %v111
    %v659 = vunpack.c.l.b16 %v112
    %v660 = vunpack.c.h.b16 %v112
    %v661 = vunpack.c.l.b16 %v113
    %v662 = vunpack.c.h.b16 %v113
    %v663 = vunpack.c.l.b16 %v114
    %v664 = vunpack.c.h.b16 %v114
    %v665 = vunpack.c.l.b16 %v115
    %v666 = vunpack.c.h.b16 %v115
    %v667 = vunpack.c.l.b16 %v116
    %v668 = vunpack.c.h.b16 %v116
    %v669 = vpack.c.b16 %v609, %v605
    %v670 = vpack.c.b16 %v610, %v606
    %v671 = vpack.c.b16 %v611, %v607
    %v672 = vpack.c.b16 %v612, %v608
    %v673 = vpack.c.b16 %v617, %v613
    %v674 = vpack.c.b16 %v618, %v614
    %v675 = vpack.c.b16 %v619, %v615
    %v676 = vpack.c.b16 %v620, %v616
    %v677 = vpack.c.b16 %v625, %v621
    %v678 = vpack.c.b16 %v626, %v622
    %v679 = vpack.c.b16 %v627, %v623
    %v680 = vpack.c.b16 %v628, %v624
    %v681 = vpack.c.b16 %v633, %v629
    %v682 = vpack.c.b16 %v634, %v630
    %v683 = vpack.c.b16 %v635, %v631
    %v684 = vpack.c.b16 %v636, %v632
    %v685 = vpack.c.b16 %v641, %v637
    %v686 = vpack.c.b16 %v642, %v638
    %v687 = vpack.c.b16 %v643, %v639
    %v688 = vpack.c.b16 %v644, %v640
    %v689 = vpack.c.b16 %v649, %v645
    %v690 = vpack.c.b16 %v650, %v646
    %v691 = vpack.c.b16 %v651, %v647
    %v692 = vpack.c.b16 %v652, %v648
    %v693 = vpack.c.b16 %v657, %v653
    %v694 = vpack.c.b16 %v658, %v654
    %v695 = vpack.c.b16 %v659, %v655
    %v696 = vpack.c.b16 %v660, %v656
    %v697 = vpack.c.b16 %v665, %v661
    %v698 = vpack.c.b16 %v666, %v662
    %v699 = vpack.c.b16 %v667, %v663
    %v700 = vpack.c.b16 %v668, %v664
    %733 = vmatprep.subr.bf16.mxu0 %v698
    %734 = vmatpush1.bf16.msra.mxu0 %v697
    %735 = vmatprep.subr.bf16.mxu0 %v694
    %736 = vmatpush1.bf16.msra.mxu0 %v693
    %737 = vmatprep.subr.bf16.mxu0 %v690
    %738 = vmatpush1.bf16.msra.mxu0 %v689
    %739 = vmatprep.subr.bf16.mxu0 %v686
    %740 = vmatpush1.bf16.msra.mxu0 %v685
    %741 = vmatprep.subr.bf16.mxu0 %v682
    %742 = vmatpush1.bf16.msra.mxu0 %v681
    %743 = vmatprep.subr.bf16.mxu0 %v678
    %744 = vmatpush1.bf16.msra.mxu0 %v677
    %745 = vmatprep.subr.bf16.mxu0 %v674
    %746 = vmatpush1.bf16.msra.mxu0 %v673
    %747 = vmatprep.subr.bf16.mxu0 %v670
    %748 = vmatpush1.bf16.msra.mxu0 %v669
    %749 = vmatprep.subr.bf16.mxu0 0
    %750 = vmatpush2.bf16.msra.mxu0 0
    %751 = vmatprep.subr.bf16.mxu0 0
    %752 = vmatpush2.bf16.msra.mxu0 0
    %753 = vmatprep.subr.bf16.mxu0 0
    %754 = vmatpush2.bf16.msra.mxu0 0
    %755 = vmatprep.subr.bf16.mxu0 0
    %756 = vmatpush2.bf16.msra.mxu0 0
    %757 = vmatprep.subr.bf16.mxu0 0
    %758 = vmatpush2.bf16.msra.mxu0 0
    %759 = vmatprep.subr.bf16.mxu0 0
    %760 = vmatpush2.bf16.msra.mxu0 0
    %761 = vmatprep.subr.bf16.mxu0 0
    %762 = vmatpush2.bf16.msra.mxu0 0
    %763 = vmatprep.subr.bf16.mxu0 0
    %764 = vmatpush2.bf16.msra.mxu0 0
    %765 = vmatprep.mubr.bf16.mxu0 0
    %766 = vmatmul.mubr.bf16.gmra.mxu0 0
    %v767 = vpop.f32.mrf.mxu0
    %v768 = vadd.f32 0.0, %v767
    %v769 = vpop.f32.mrf.mxu0
    %v770 = vadd.f32 0.0, %v769
    %v771 = vpop.f32.mrf.mxu0
    %v772 = vpop.f32.mrf.mxu0
    %773 = vdwg.mxu0
    %774 = vmatprep.subr.bf16.mxu0 %v700
    %775 = vmatpush1.bf16.msra.mxu0 %v699
    %776 = vmatprep.subr.bf16.mxu0 %v696
    %777 = vmatpush1.bf16.msra.mxu0 %v695
    %778 = vmatprep.subr.bf16.mxu0 %v692
    %779 = vmatpush1.bf16.msra.mxu0 %v691
    %780 = vmatprep.subr.bf16.mxu0 %v688
    %781 = vmatpush1.bf16.msra.mxu0 %v687
    %782 = vmatprep.subr.bf16.mxu0 %v684
    %783 = vmatpush1.bf16.msra.mxu0 %v683
    %784 = vmatprep.subr.bf16.mxu0 %v680
    %785 = vmatpush1.bf16.msra.mxu0 %v679
    %786 = vmatprep.subr.bf16.mxu0 %v676
    %787 = vmatpush1.bf16.msra.mxu0 %v675
    %788 = vmatprep.subr.bf16.mxu0 %v672
    %789 = vmatpush1.bf16.msra.mxu0 %v671
    %790 = vmatprep.subr.bf16.mxu0 0
    %791 = vmatpush2.bf16.msra.mxu0 0
    %792 = vmatprep.subr.bf16.mxu0 0
    %793 = vmatpush2.bf16.msra.mxu0 0
    %794 = vmatprep.subr.bf16.mxu0 0
    %795 = vmatpush2.bf16.msra.mxu0 0
    %796 = vmatprep.subr.bf16.mxu0 0
    %797 = vmatpush2.bf16.msra.mxu0 0
    %798 = vmatprep.subr.bf16.mxu0 0
    %799 = vmatpush2.bf16.msra.mxu0 0
    %800 = vmatprep.subr.bf16.mxu0 0
    %801 = vmatpush2.bf16.msra.mxu0 0
    %802 = vmatprep.subr.bf16.mxu0 0
    %803 = vmatpush2.bf16.msra.mxu0 0
    %804 = vmatprep.subr.bf16.mxu0 0
    %805 = vmatpush2.bf16.msra.mxu0 0
    %806 = vmatprep.mubr.bf16.mxu0 0
    %807 = vmatmul.mubr.bf16.gmra.mxu0 0
    %v808 = vpop.f32.mrf.mxu0
    %v809 = vadd.f32 0.0, %v808
    %v810 = vpop.f32.mrf.mxu0
    %v811 = vadd.f32 0.0, %v810
    %v812 = vpop.f32.mrf.mxu0
    %v813 = vpop.f32.mrf.mxu0
    %814 = vdwg.mxu0
    %v815 = vadd.f32 %v299, %v768
    %v816 = vadd.f32 %v300, %v770
    %v817 = vadd.f32 %v301, %v809
    %v818 = vadd.f32 %v302, %v811
    %v819 = vxor.u32 %v815, 2147483648
    %v820 = vxor.u32 %v816, 2147483648
    %v821 = vxor.u32 %v817, 2147483648
    %v822 = vmul.f32 %v819, 1.442695
    %v823 = vpow.pop %v822
    %v824 = vmul.f32 %v820, 1.442695
    %v825 = vpow.pop %v824
    %v826 = vmul.f32 %v821, 1.442695
    %v827 = vpow.pop %v826
    %v828 = vadd.f32 %v823, 1.0
    %v829 = vadd.f32 %v825, 1.0
    %v830 = vadd.f32 %v827, 1.0
    %v831 = vrcp.pop %v828
    %v832 = vmul.f32 1.0, %v831
    %v833 = vrcp.pop %v829
    %v834 = vmul.f32 1.0, %v833
    %v835 = vrcp.pop %v830
    %v836 = vmul.f32 1.0, %v835
    %v837 = vtanh.pop %v818
    %v838 = vmul.f32 %v834, 0.0
    %v839 = vmul.f32 %v832, %v837
    %v840 = vadd.f32 %v838, %v839
    %v841 = vtanh.pop %v840
    %v842 = vmul.f32 %v836, %v841
    %v843 = vpack.c.bf16 %v842, %v842
    %v876 = vunpack.c.l.b16 %v118
    %v877 = vunpack.c.h.b16 %v118
    %v878 = vunpack.c.l.b16 %v119
    %v879 = vunpack.c.h.b16 %v119
    %v880 = vunpack.c.l.b16 %v120
    %v881 = vunpack.c.h.b16 %v120
    %v882 = vunpack.c.l.b16 %v121
    %v883 = vunpack.c.h.b16 %v121
    %v884 = vunpack.c.l.b16 %v122
    %v885 = vunpack.c.h.b16 %v122
    %v886 = vunpack.c.l.b16 %v123
    %v887 = vunpack.c.h.b16 %v123
    %v888 = vunpack.c.l.b16 %v124
    %v889 = vunpack.c.h.b16 %v124
    %v890 = vunpack.c.l.b16 %v125
    %v891 = vunpack.c.h.b16 %v125
    %v892 = vunpack.c.l.b16 %v126
    %v893 = vunpack.c.h.b16 %v126
    %v894 = vunpack.c.l.b16 %v127
    %v895 = vunpack.c.h.b16 %v127
    %v896 = vunpack.c.l.b16 %v128
    %v897 = vunpack.c.h.b16 %v128
    %v898 = vunpack.c.l.b16 %v129
    %v899 = vunpack.c.h.b16 %v129
    %v900 = vunpack.c.l.b16 %v130
    %v901 = vunpack.c.h.b16 %v130
    %v902 = vunpack.c.l.b16 %v131
    %v903 = vunpack.c.h.b16 %v131
    %v904 = vunpack.c.l.b16 %v132
    %v905 = vunpack.c.h.b16 %v132
    %v906 = vunpack.c.l.b16 %v133
    %v907 = vunpack.c.h.b16 %v133
    %v908 = vunpack.c.l.b16 %v134
    %v909 = vunpack.c.h.b16 %v134
    %v910 = vunpack.c.l.b16 %v135
    %v911 = vunpack.c.h.b16 %v135
    %v912 = vunpack.c.l.b16 %v136
    %v913 = vunpack.c.h.b16 %v136
    %v914 = vunpack.c.l.b16 %v137
    %v915 = vunpack.c.h.b16 %v137
    %v916 = vunpack.c.l.b16 %v138
    %v917 = vunpack.c.h.b16 %v138
    %v918 = vunpack.c.l.b16 %v139
    %v919 = vunpack.c.h.b16 %v139
    %v920 = vunpack.c.l.b16 %v140
    %v921 = vunpack.c.h.b16 %v140
    %v922 = vunpack.c.l.b16 %v141
    %v923 = vunpack.c.h.b16 %v141
    %v924 = vunpack.c.l.b16 %v142
    %v925 = vunpack.c.h.b16 %v142
    %v926 = vunpack.c.l.b16 %v143
    %v927 = vunpack.c.h.b16 %v143
    %v928 = vunpack.c.l.b16 %v144
    %v929 = vunpack.c.h.b16 %v144
    %v930 = vunpack.c.l.b16 %v145
    %v931 = vunpack.c.h.b16 %v145
    %v932 = vunpack.c.l.b16 %v146
    %v933 = vunpack.c.h.b16 %v146
    %v934 = vunpack.c.l.b16 %v147
    %v935 = vunpack.c.h.b16 %v147
    %v936 = vunpack.c.l.b16 %v148
    %v937 = vunpack.c.h.b16 %v148
    %v938 = vunpack.c.l.b16 %v149
    %v939 = vunpack.c.h.b16 %v149
    %v940 = vpack.c.b16 %v880, %v876
    %v941 = vpack.c.b16 %v881, %v877
    %v942 = vpack.c.b16 %v882, %v878
    %v943 = vpack.c.b16 %v883, %v879
    %v944 = vpack.c.b16 %v888, %v884
    %v945 = vpack.c.b16 %v889, %v885
    %v946 = vpack.c.b16 %v890, %v886
    %v947 = vpack.c.b16 %v891, %v887
    %v948 = vpack.c.b16 %v896, %v892
    %v949 = vpack.c.b16 %v897, %v893
    %v950 = vpack.c.b16 %v898, %v894
    %v951 = vpack.c.b16 %v899, %v895
    %v952 = vpack.c.b16 %v904, %v900
    %v953 = vpack.c.b16 %v905, %v901
    %v954 = vpack.c.b16 %v906, %v902
    %v955 = vpack.c.b16 %v907, %v903
    %v956 = vpack.c.b16 %v912, %v908
    %v957 = vpack.c.b16 %v913, %v909
    %v958 = vpack.c.b16 %v914, %v910
    %v959 = vpack.c.b16 %v915, %v911
    %v960 = vpack.c.b16 %v920, %v916
    %v961 = vpack.c.b16 %v921, %v917
    %v962 = vpack.c.b16 %v922, %v918
    %v963 = vpack.c.b16 %v923, %v919
    %v964 = vpack.c.b16 %v928, %v924
    %v965 = vpack.c.b16 %v929, %v925
    %v966 = vpack.c.b16 %v930, %v926
    %v967 = vpack.c.b16 %v931, %v927
    %v968 = vpack.c.b16 %v936, %v932
    %v969 = vpack.c.b16 %v937, %v933
    %v970 = vpack.c.b16 %v938, %v934
    %v971 = vpack.c.b16 %v939, %v935
    %1004 = vmatprep.subr.bf16.mxu0 %v969
    %1005 = vmatpush1.bf16.msra.mxu0 %v968
    %1006 = vmatprep.subr.bf16.mxu0 %v965
    %1007 = vmatpush1.bf16.msra.mxu0 %v964
    %1008 = vmatprep.subr.bf16.mxu0 %v961
    %1009 = vmatpush1.bf16.msra.mxu0 %v960
    %1010 = vmatprep.subr.bf16.mxu0 %v957
    %1011 = vmatpush1.bf16.msra.mxu0 %v956
    %1012 = vmatprep.subr.bf16.mxu0 %v953
    %1013 = vmatpush1.bf16.msra.mxu0 %v952
    %1014 = vmatprep.subr.bf16.mxu0 %v949
    %1015 = vmatpush1.bf16.msra.mxu0 %v948
    %1016 = vmatprep.subr.bf16.mxu0 %v945
    %1017 = vmatpush1.bf16.msra.mxu0 %v944
    %1018 = vmatprep.subr.bf16.mxu0 %v941
    %1019 = vmatpush1.bf16.msra.mxu0 %v940
    %1020 = vmatprep.subr.bf16.mxu0 0
    %1021 = vmatpush2.bf16.msra.mxu0 0
    %1022 = vmatprep.subr.bf16.mxu0 0
    %1023 = vmatpush2.bf16.msra.mxu0 0
    %1024 = vmatprep.subr.bf16.mxu0 0
    %1025 = vmatpush2.bf16.msra.mxu0 0
    %1026 = vmatprep.subr.bf16.mxu0 0
    %1027 = vmatpush2.bf16.msra.mxu0 0
    %1028 = vmatprep.subr.bf16.mxu0 0
    %1029 = vmatpush2.bf16.msra.mxu0 0
    %1030 = vmatprep.subr.bf16.mxu0 0
    %1031 = vmatpush2.bf16.msra.mxu0 0
    %1032 = vmatprep.subr.bf16.mxu0 0
    %1033 = vmatpush2.bf16.msra.mxu0 0
    %1034 = vmatprep.subr.bf16.mxu0 0
    %1035 = vmatpush2.bf16.msra.mxu0 0
    %1036 = vmatprep.mubr.bf16.mxu0 0
    %1037 = vmatmul.mubr.bf16.gmra.mxu0 %v843
    %v1038 = vpop.f32.mrf.mxu0
    %v1039 = vadd.f32 %v526, %v1038
    %v1040 = vpop.f32.mrf.mxu0
    %v1041 = vadd.f32 %v528, %v1040
    %v1042 = vpop.f32.mrf.mxu0
    %v1043 = vpop.f32.mrf.mxu0
    %1044 = vdwg.mxu0
    %1045 = vmatprep.subr.bf16.mxu0 %v971
    %1046 = vmatpush1.bf16.msra.mxu0 %v970
    %1047 = vmatprep.subr.bf16.mxu0 %v967
    %1048 = vmatpush1.bf16.msra.mxu0 %v966
    %1049 = vmatprep.subr.bf16.mxu0 %v963
    %1050 = vmatpush1.bf16.msra.mxu0 %v962
    %1051 = vmatprep.subr.bf16.mxu0 %v959
    %1052 = vmatpush1.bf16.msra.mxu0 %v958
    %1053 = vmatprep.subr.bf16.mxu0 %v955
    %1054 = vmatpush1.bf16.msra.mxu0 %v954
    %1055 = vmatprep.subr.bf16.mxu0 %v951
    %1056 = vmatpush1.bf16.msra.mxu0 %v950
    %1057 = vmatprep.subr.bf16.mxu0 %v947
    %1058 = vmatpush1.bf16.msra.mxu0 %v946
    %1059 = vmatprep.subr.bf16.mxu0 %v943
    %1060 = vmatpush1.bf16.msra.mxu0 %v942
    %1061 = vmatprep.subr.bf16.mxu0 0
    %1062 = vmatpush2.bf16.msra.mxu0 0
    %1063 = vmatprep.subr.bf16.mxu0 0
    %1064 = vmatpush2.bf16.msra.mxu0 0
    %1065 = vmatprep.subr.bf16.mxu0 0
    %1066 = vmatpush2.bf16.msra.mxu0 0
    %1067 = vmatprep.subr.bf16.mxu0 0
    %1068 = vmatpush2.bf16.msra.mxu0 0
    %1069 = vmatprep.subr.bf16.mxu0 0
    %1070 = vmatpush2.bf16.msra.mxu0 0
    %1071 = vmatprep.subr.bf16.mxu0 0
    %1072 = vmatpush2.bf16.msra.mxu0 0
    %1073 = vmatprep.subr.bf16.mxu0 0
    %1074 = vmatpush2.bf16.msra.mxu0 0
    %1075 = vmatprep.subr.bf16.mxu0 0
    %1076 = vmatpush2.bf16.msra.mxu0 0
    %1077 = vmatprep.mubr.bf16.mxu0 0
    %1078 = vmatmul.mubr.bf16.gmra.mxu0 %v843
    %v1079 = vpop.f32.mrf.mxu0
    %v1080 = vadd.f32 %v567, %v1079
    %v1081 = vpop.f32.mrf.mxu0
    %v1082 = vadd.f32 %v569, %v1081
    %v1083 = vpop.f32.mrf.mxu0
    %v1084 = vpop.f32.mrf.mxu0
    %1085 = vdwg.mxu0
    %v1087 = vlaneseq
    %v1088 = vshrl.u32 %v1087, 7
    %v1089 = vsub.s32 0, %v1088
    %v1090 = vrot.slane %v182, %v1089
    %v1091 = vlaneseq
    %v1092 = vshrl.u32 %v1091, 7
    %v1093 = vsub.s32 1, %v1092
    %v1094 = vrot.slane %v182, %v1093
    %v1095 = vlaneseq
    %v1096 = vshrl.u32 %v1095, 7
    %v1097 = vsub.s32 2, %v1096
    %v1098 = vrot.slane %v182, %v1097
    %v1099 = vlaneseq
    %v1100 = vshrl.u32 %v1099, 7
    %v1101 = vsub.s32 3, %v1100
    %v1102 = vrot.slane %v182, %v1101
    %v1107 = vadd.f32 %v1039, %v1090
    %v1108 = vadd.f32 %v1041, %v1094
    %v1109 = vadd.f32 %v1080, %v1098
    %v1110 = vadd.f32 %v1082, %v1102
    %v1111 = vxor.u32 %v1107, 2147483648
    %v1112 = vxor.u32 %v1108, 2147483648
    %v1113 = vxor.u32 %v1109, 2147483648
    %v1114 = vmul.f32 %v1111, 1.442695
    %v1115 = vpow.pop %v1114
    %v1116 = vmul.f32 %v1112, 1.442695
    %v1117 = vpow.pop %v1116
    %v1118 = vmul.f32 %v1113, 1.442695
    %v1119 = vpow.pop %v1118
    %v1120 = vadd.f32 %v1115, 1.0
    %v1121 = vadd.f32 %v1117, 1.0
    %v1122 = vadd.f32 %v1119, 1.0
    %v1123 = vrcp.pop %v1120
    %v1124 = vmul.f32 1.0, %v1123
    %v1125 = vrcp.pop %v1121
    %v1126 = vmul.f32 1.0, %v1125
    %v1127 = vrcp.pop %v1122
    %v1128 = vmul.f32 1.0, %v1127
    %v1129 = vtanh.pop %v1110
    %v1130 = vmul.f32 %v1126, 0.0
    %v1131 = vmul.f32 %v1124, %v1129
    %v1132 = vadd.f32 %v1130, %v1131
    %v1133 = vtanh.pop %v1132
    %v1134 = vmul.f32 %v1128, %v1133
    %v1135 = vpack.c.bf16 %v1134, %v1134
    %1136 = vmatprep.subr.bf16.mxu0 %v456
    %1137 = vmatpush1.bf16.msra.mxu0 %v455
    %1138 = vmatprep.subr.bf16.mxu0 %v452
    %1139 = vmatpush1.bf16.msra.mxu0 %v451
    %1140 = vmatprep.subr.bf16.mxu0 %v448
    %1141 = vmatpush1.bf16.msra.mxu0 %v447
    %1142 = vmatprep.subr.bf16.mxu0 %v444
    %1143 = vmatpush1.bf16.msra.mxu0 %v443
    %1144 = vmatprep.subr.bf16.mxu0 %v440
    %1145 = vmatpush1.bf16.msra.mxu0 %v439
    %1146 = vmatprep.subr.bf16.mxu0 %v436
    %1147 = vmatpush1.bf16.msra.mxu0 %v435
    %1148 = vmatprep.subr.bf16.mxu0 %v432
    %1149 = vmatpush1.bf16.msra.mxu0 %v431
    %1150 = vmatprep.subr.bf16.mxu0 %v428
    %1151 = vmatpush1.bf16.msra.mxu0 %v427
    %1152 = vmatprep.subr.bf16.mxu0 0
    %1153 = vmatpush2.bf16.msra.mxu0 0
    %1154 = vmatprep.subr.bf16.mxu0 0
    %1155 = vmatpush2.bf16.msra.mxu0 0
    %1156 = vmatprep.subr.bf16.mxu0 0
    %1157 = vmatpush2.bf16.msra.mxu0 0
    %1158 = vmatprep.subr.bf16.mxu0 0
    %1159 = vmatpush2.bf16.msra.mxu0 0
    %1160 = vmatprep.subr.bf16.mxu0 0
    %1161 = vmatpush2.bf16.msra.mxu0 0
    %1162 = vmatprep.subr.bf16.mxu0 0
    %1163 = vmatpush2.bf16.msra.mxu0 0
    %1164 = vmatprep.subr.bf16.mxu0 0
    %1165 = vmatpush2.bf16.msra.mxu0 0
    %1166 = vmatprep.subr.bf16.mxu0 0
    %1167 = vmatpush2.bf16.msra.mxu0 0
    %1168 = vmatprep.mubr.bf16.mxu0 0
    %1169 = vmatmul.mubr.bf16.gmra.mxu0 %v1135
    %v1170 = vpop.f32.mrf.mxu0
    %v1171 = vadd.f32 0.0, %v1170
    %v1172 = vpop.f32.mrf.mxu0
    %v1173 = vadd.f32 0.0, %v1172
    %v1174 = vpop.f32.mrf.mxu0
    %v1175 = vpop.f32.mrf.mxu0
    %1176 = vdwg.mxu0
    %1177 = vmatprep.subr.bf16.mxu0 %v458
    %1178 = vmatpush1.bf16.msra.mxu0 %v457
    %1179 = vmatprep.subr.bf16.mxu0 %v454
    %1180 = vmatpush1.bf16.msra.mxu0 %v453
    %1181 = vmatprep.subr.bf16.mxu0 %v450
    %1182 = vmatpush1.bf16.msra.mxu0 %v449
    %1183 = vmatprep.subr.bf16.mxu0 %v446
    %1184 = vmatpush1.bf16.msra.mxu0 %v445
    %1185 = vmatprep.subr.bf16.mxu0 %v442
    %1186 = vmatpush1.bf16.msra.mxu0 %v441
    %1187 = vmatprep.subr.bf16.mxu0 %v438
    %1188 = vmatpush1.bf16.msra.mxu0 %v437
    %1189 = vmatprep.subr.bf16.mxu0 %v434
    %1190 = vmatpush1.bf16.msra.mxu0 %v433
    %1191 = vmatprep.subr.bf16.mxu0 %v430
    %1192 = vmatpush1.bf16.msra.mxu0 %v429
    %1193 = vmatprep.subr.bf16.mxu0 0
    %1194 = vmatpush2.bf16.msra.mxu0 0
    %1195 = vmatprep.subr.bf16.mxu0 0
    %1196 = vmatpush2.bf16.msra.mxu0 0
    %1197 = vmatprep.subr.bf16.mxu0 0
    %1198 = vmatpush2.bf16.msra.mxu0 0
    %1199 = vmatprep.subr.bf16.mxu0 0
    %1200 = vmatpush2.bf16.msra.mxu0 0
    %1201 = vmatprep.subr.bf16.mxu0 0
    %1202 = vmatpush2.bf16.msra.mxu0 0
    %1203 = vmatprep.subr.bf16.mxu0 0
    %1204 = vmatpush2.bf16.msra.mxu0 0
    %1205 = vmatprep.subr.bf16.mxu0 0
    %1206 = vmatpush2.bf16.msra.mxu0 0
    %1207 = vmatprep.subr.bf16.mxu0 0
    %1208 = vmatpush2.bf16.msra.mxu0 0
    %1209 = vmatprep.mubr.bf16.mxu0 0
    %1210 = vmatmul.mubr.bf16.gmra.mxu0 %v1135
    %v1211 = vpop.f32.mrf.mxu0
    %v1212 = vadd.f32 0.0, %v1211
    %v1213 = vpop.f32.mrf.mxu0
    %v1214 = vadd.f32 0.0, %v1213
    %v1215 = vpop.f32.mrf.mxu0
    %v1216 = vpop.f32.mrf.mxu0
    %1217 = vdwg.mxu0
    %1218 = vmatprep.subr.bf16.mxu0 %v698
    %1219 = vmatpush1.bf16.msra.mxu0 %v697
    %1220 = vmatprep.subr.bf16.mxu0 %v694
    %1221 = vmatpush1.bf16.msra.mxu0 %v693
    %1222 = vmatprep.subr.bf16.mxu0 %v690
    %1223 = vmatpush1.bf16.msra.mxu0 %v689
    %1224 = vmatprep.subr.bf16.mxu0 %v686
    %1225 = vmatpush1.bf16.msra.mxu0 %v685
    %1226 = vmatprep.subr.bf16.mxu0 %v682
    %1227 = vmatpush1.bf16.msra.mxu0 %v681
    %1228 = vmatprep.subr.bf16.mxu0 %v678
    %1229 = vmatpush1.bf16.msra.mxu0 %v677
    %1230 = vmatprep.subr.bf16.mxu0 %v674
    %1231 = vmatpush1.bf16.msra.mxu0 %v673
    %1232 = vmatprep.subr.bf16.mxu0 %v670
    %1233 = vmatpush1.bf16.msra.mxu0 %v669
    %1234 = vmatprep.subr.bf16.mxu0 0
    %1235 = vmatpush2.bf16.msra.mxu0 0
    %1236 = vmatprep.subr.bf16.mxu0 0
    %1237 = vmatpush2.bf16.msra.mxu0 0
    %1238 = vmatprep.subr.bf16.mxu0 0
    %1239 = vmatpush2.bf16.msra.mxu0 0
    %1240 = vmatprep.subr.bf16.mxu0 0
    %1241 = vmatpush2.bf16.msra.mxu0 0
    %1242 = vmatprep.subr.bf16.mxu0 0
    %1243 = vmatpush2.bf16.msra.mxu0 0
    %1244 = vmatprep.subr.bf16.mxu0 0
    %1245 = vmatpush2.bf16.msra.mxu0 0
    %1246 = vmatprep.subr.bf16.mxu0 0
    %1247 = vmatpush2.bf16.msra.mxu0 0
    %1248 = vmatprep.subr.bf16.mxu0 0
    %1249 = vmatpush2.bf16.msra.mxu0 0
    %1250 = vmatprep.mubr.bf16.mxu0 0
    %1251 = vmatmul.mubr.bf16.gmra.mxu0 %v843
    %v1252 = vpop.f32.mrf.mxu0
    %v1253 = vadd.f32 0.0, %v1252
    %v1254 = vpop.f32.mrf.mxu0
    %v1255 = vadd.f32 0.0, %v1254
    %v1256 = vpop.f32.mrf.mxu0
    %v1257 = vpop.f32.mrf.mxu0
    %1258 = vdwg.mxu0
    %1259 = vmatprep.subr.bf16.mxu0 %v700
    %1260 = vmatpush1.bf16.msra.mxu0 %v699
    %1261 = vmatprep.subr.bf16.mxu0 %v696
    %1262 = vmatpush1.bf16.msra.mxu0 %v695
    %1263 = vmatprep.subr.bf16.mxu0 %v692
    %1264 = vmatpush1.bf16.msra.mxu0 %v691
    %1265 = vmatprep.subr.bf16.mxu0 %v688
    %1266 = vmatpush1.bf16.msra.mxu0 %v687
    %1267 = vmatprep.subr.bf16.mxu0 %v684
    %1268 = vmatpush1.bf16.msra.mxu0 %v683
    %1269 = vmatprep.subr.bf16.mxu0 %v680
    %1270 = vmatpush1.bf16.msra.mxu0 %v679
    %1271 = vmatprep.subr.bf16.mxu0 %v676
    %1272 = vmatpush1.bf16.msra.mxu0 %v675
    %1273 = vmatprep.subr.bf16.mxu0 %v672
    %1274 = vmatpush1.bf16.msra.mxu0 %v671
    %1275 = vmatprep.subr.bf16.mxu0 0
    %1276 = vmatpush2.bf16.msra.mxu0 0
    %1277 = vmatprep.subr.bf16.mxu0 0
    %1278 = vmatpush2.bf16.msra.mxu0 0
    %1279 = vmatprep.subr.bf16.mxu0 0
    %1280 = vmatpush2.bf16.msra.mxu0 0
    %1281 = vmatprep.subr.bf16.mxu0 0
    %1282 = vmatpush2.bf16.msra.mxu0 0
    %1283 = vmatprep.subr.bf16.mxu0 0
    %1284 = vmatpush2.bf16.msra.mxu0 0
    %1285 = vmatprep.subr.bf16.mxu0 0
    %1286 = vmatpush2.bf16.msra.mxu0 0
    %1287 = vmatprep.subr.bf16.mxu0 0
    %1288 = vmatpush2.bf16.msra.mxu0 0
    %1289 = vmatprep.subr.bf16.mxu0 0
    %1290 = vmatpush2.bf16.msra.mxu0 0
    %1291 = vmatprep.mubr.bf16.mxu0 0
    %1292 = vmatmul.mubr.bf16.gmra.mxu0 %v843
    %v1293 = vpop.f32.mrf.mxu0
    %v1294 = vadd.f32 0.0, %v1293
    %v1295 = vpop.f32.mrf.mxu0
    %v1296 = vadd.f32 0.0, %v1295
    %v1297 = vpop.f32.mrf.mxu0
    %v1298 = vpop.f32.mrf.mxu0
    %1299 = vdwg.mxu0
    %v1300 = vadd.f32 %v303, %v1253
    %v1301 = vadd.f32 %v304, %v1255
    %v1302 = vadd.f32 %v305, %v1294
    %v1303 = vadd.f32 %v306, %v1296
    %v1304 = vxor.u32 %v1300, 2147483648
    %v1305 = vxor.u32 %v1301, 2147483648
    %v1306 = vxor.u32 %v1302, 2147483648
    %v1307 = vmul.f32 %v1304, 1.442695
    %v1308 = vpow.pop %v1307
    %v1309 = vmul.f32 %v1305, 1.442695
    %v1310 = vpow.pop %v1309
    %v1311 = vmul.f32 %v1306, 1.442695
    %v1312 = vpow.pop %v1311
    %v1313 = vadd.f32 %v1308, 1.0
    %v1314 = vadd.f32 %v1310, 1.0
    %v1315 = vadd.f32 %v1312, 1.0
    %v1316 = vrcp.pop %v1313
    %v1317 = vmul.f32 1.0, %v1316
    %v1318 = vrcp.pop %v1314
    %v1319 = vmul.f32 1.0, %v1318
    %v1320 = vrcp.pop %v1315
    %v1321 = vmul.f32 1.0, %v1320
    %v1322 = vtanh.pop %v1303
    %v1323 = vmul.f32 %v1319, %v840
    %v1324 = vmul.f32 %v1317, %v1322
    %v1325 = vadd.f32 %v1323, %v1324
    %v1326 = vtanh.pop %v1325
    %v1327 = vmul.f32 %v1321, %v1326
    %v1328 = vpack.c.bf16 %v1327, %v1327
    %1329 = vmatprep.subr.bf16.mxu0 %v969
    %1330 = vmatpush1.bf16.msra.mxu0 %v968
    %1331 = vmatprep.subr.bf16.mxu0 %v965
    %1332 = vmatpush1.bf16.msra.mxu0 %v964
    %1333 = vmatprep.subr.bf16.mxu0 %v961
    %1334 = vmatpush1.bf16.msra.mxu0 %v960
    %1335 = vmatprep.subr.bf16.mxu0 %v957
    %1336 = vmatpush1.bf16.msra.mxu0 %v956
    %1337 = vmatprep.subr.bf16.mxu0 %v953
    %1338 = vmatpush1.bf16.msra.mxu0 %v952
    %1339 = vmatprep.subr.bf16.mxu0 %v949
    %1340 = vmatpush1.bf16.msra.mxu0 %v948
    %1341 = vmatprep.subr.bf16.mxu0 %v945
    %1342 = vmatpush1.bf16.msra.mxu0 %v944
    %1343 = vmatprep.subr.bf16.mxu0 %v941
    %1344 = vmatpush1.bf16.msra.mxu0 %v940
    %1345 = vmatprep.subr.bf16.mxu0 0
    %1346 = vmatpush2.bf16.msra.mxu0 0
    %1347 = vmatprep.subr.bf16.mxu0 0
    %1348 = vmatpush2.bf16.msra.mxu0 0
    %1349 = vmatprep.subr.bf16.mxu0 0
    %1350 = vmatpush2.bf16.msra.mxu0 0
    %1351 = vmatprep.subr.bf16.mxu0 0
    %1352 = vmatpush2.bf16.msra.mxu0 0
    %1353 = vmatprep.subr.bf16.mxu0 0
    %1354 = vmatpush2.bf16.msra.mxu0 0
    %1355 = vmatprep.subr.bf16.mxu0 0
    %1356 = vmatpush2.bf16.msra.mxu0 0
    %1357 = vmatprep.subr.bf16.mxu0 0
    %1358 = vmatpush2.bf16.msra.mxu0 0
    %1359 = vmatprep.subr.bf16.mxu0 0
    %1360 = vmatpush2.bf16.msra.mxu0 0
    %1361 = vmatprep.mubr.bf16.mxu0 0
    %1362 = vmatmul.mubr.bf16.gmra.mxu0 %v1328
    %v1363 = vpop.f32.mrf.mxu0
    %v1364 = vadd.f32 %v1171, %v1363
    %v1365 = vpop.f32.mrf.mxu0
    %v1366 = vadd.f32 %v1173, %v1365
    %v1367 = vpop.f32.mrf.mxu0
    %v1368 = vpop.f32.mrf.mxu0
    %1369 = vdwg.mxu0
    %1370 = vmatprep.subr.bf16.mxu0 %v971
    %1371 = vmatpush1.bf16.msra.mxu0 %v970
    %1372 = vmatprep.subr.bf16.mxu0 %v967
    %1373 = vmatpush1.bf16.msra.mxu0 %v966
    %1374 = vmatprep.subr.bf16.mxu0 %v963
    %1375 = vmatpush1.bf16.msra.mxu0 %v962
    %1376 = vmatprep.subr.bf16.mxu0 %v959
    %1377 = vmatpush1.bf16.msra.mxu0 %v958
    %1378 = vmatprep.subr.bf16.mxu0 %v955
    %1379 = vmatpush1.bf16.msra.mxu0 %v954
    %1380 = vmatprep.subr.bf16.mxu0 %v951
    %1381 = vmatpush1.bf16.msra.mxu0 %v950
    %1382 = vmatprep.subr.bf16.mxu0 %v947
    %1383 = vmatpush1.bf16.msra.mxu0 %v946
    %1384 = vmatprep.subr.bf16.mxu0 %v943
    %1385 = vmatpush1.bf16.msra.mxu0 %v942
    %1386 = vmatprep.subr.bf16.mxu0 0
    %1387 = vmatpush2.bf16.msra.mxu0 0
    %1388 = vmatprep.subr.bf16.mxu0 0
    %1389 = vmatpush2.bf16.msra.mxu0 0
    %1390 = vmatprep.subr.bf16.mxu0 0
    %1391 = vmatpush2.bf16.msra.mxu0 0
    %1392 = vmatprep.subr.bf16.mxu0 0
    %1393 = vmatpush2.bf16.msra.mxu0 0
    %1394 = vmatprep.subr.bf16.mxu0 0
    %1395 = vmatpush2.bf16.msra.mxu0 0
    %1396 = vmatprep.subr.bf16.mxu0 0
    %1397 = vmatpush2.bf16.msra.mxu0 0
    %1398 = vmatprep.subr.bf16.mxu0 0
    %1399 = vmatpush2.bf16.msra.mxu0 0
    %1400 = vmatprep.subr.bf16.mxu0 0
    %1401 = vmatpush2.bf16.msra.mxu0 0
    %1402 = vmatprep.mubr.bf16.mxu0 0
    %1403 = vmatmul.mubr.bf16.gmra.mxu0 %v1328
    %v1404 = vpop.f32.mrf.mxu0
    %v1405 = vadd.f32 %v1212, %v1404
    %v1406 = vpop.f32.mrf.mxu0
    %v1407 = vadd.f32 %v1214, %v1406
    %v1408 = vpop.f32.mrf.mxu0
    %v1409 = vpop.f32.mrf.mxu0
    %1410 = vdwg.mxu0
    %v1411 = vadd.f32 %v1364, %v1090
    %v1412 = vadd.f32 %v1366, %v1094
    %v1413 = vadd.f32 %v1405, %v1098
    %v1414 = vadd.f32 %v1407, %v1102
    %v1415 = vxor.u32 %v1411, 2147483648
    %v1416 = vxor.u32 %v1412, 2147483648
    %v1417 = vxor.u32 %v1413, 2147483648
    %v1418 = vmul.f32 %v1415, 1.442695
    %v1419 = vpow.pop %v1418
    %v1420 = vmul.f32 %v1416, 1.442695
    %v1421 = vpow.pop %v1420
    %v1422 = vmul.f32 %v1417, 1.442695
    %v1423 = vpow.pop %v1422
    %v1424 = vadd.f32 %v1419, 1.0
    %v1425 = vadd.f32 %v1421, 1.0
    %v1426 = vadd.f32 %v1423, 1.0
    %v1427 = vrcp.pop %v1424
    %v1428 = vmul.f32 1.0, %v1427
    %v1429 = vrcp.pop %v1425
    %v1430 = vmul.f32 1.0, %v1429
    %v1431 = vrcp.pop %v1426
    %v1432 = vmul.f32 1.0, %v1431
    %v1433 = vtanh.pop %v1414
    %v1434 = vmul.f32 %v1430, %v1132
    %v1435 = vmul.f32 %v1428, %v1433
    %v1436 = vadd.f32 %v1434, %v1435
    %v1437 = vtanh.pop %v1436
    %v1438 = vmul.f32 %v1432, %v1437
    %v1439 = vpack.c.bf16 %v1438, %v1438
    %1440 = vmatprep.subr.bf16.mxu0 %v456
    %1441 = vmatpush1.bf16.msra.mxu0 %v455
    %1442 = vmatprep.subr.bf16.mxu0 %v452
    %1443 = vmatpush1.bf16.msra.mxu0 %v451
    %1444 = vmatprep.subr.bf16.mxu0 %v448
    %1445 = vmatpush1.bf16.msra.mxu0 %v447
    %1446 = vmatprep.subr.bf16.mxu0 %v444
    %1447 = vmatpush1.bf16.msra.mxu0 %v443
    %1448 = vmatprep.subr.bf16.mxu0 %v440
    %1449 = vmatpush1.bf16.msra.mxu0 %v439
    %1450 = vmatprep.subr.bf16.mxu0 %v436
    %1451 = vmatpush1.bf16.msra.mxu0 %v435
    %1452 = vmatprep.subr.bf16.mxu0 %v432
    %1453 = vmatpush1.bf16.msra.mxu0 %v431
    %1454 = vmatprep.subr.bf16.mxu0 %v428
    %1455 = vmatpush1.bf16.msra.mxu0 %v427
    %1456 = vmatprep.subr.bf16.mxu0 0
    %1457 = vmatpush2.bf16.msra.mxu0 0
    %1458 = vmatprep.subr.bf16.mxu0 0
    %1459 = vmatpush2.bf16.msra.mxu0 0
    %1460 = vmatprep.subr.bf16.mxu0 0
    %1461 = vmatpush2.bf16.msra.mxu0 0
    %1462 = vmatprep.subr.bf16.mxu0 0
    %1463 = vmatpush2.bf16.msra.mxu0 0
    %1464 = vmatprep.subr.bf16.mxu0 0
    %1465 = vmatpush2.bf16.msra.mxu0 0
    %1466 = vmatprep.subr.bf16.mxu0 0
    %1467 = vmatpush2.bf16.msra.mxu0 0
    %1468 = vmatprep.subr.bf16.mxu0 0
    %1469 = vmatpush2.bf16.msra.mxu0 0
    %1470 = vmatprep.subr.bf16.mxu0 0
    %1471 = vmatpush2.bf16.msra.mxu0 0
    %1472 = vmatprep.mubr.bf16.mxu0 0
    %1473 = vmatmul.mubr.bf16.gmra.mxu0 %v1439
    %v1474 = vpop.f32.mrf.mxu0
    %v1475 = vadd.f32 0.0, %v1474
    %v1476 = vpop.f32.mrf.mxu0
    %v1477 = vadd.f32 0.0, %v1476
    %v1478 = vpop.f32.mrf.mxu0
    %v1479 = vpop.f32.mrf.mxu0
    %1480 = vdwg.mxu0
    %1481 = vmatprep.subr.bf16.mxu0 %v458
    %1482 = vmatpush1.bf16.msra.mxu0 %v457
    %1483 = vmatprep.subr.bf16.mxu0 %v454
    %1484 = vmatpush1.bf16.msra.mxu0 %v453
    %1485 = vmatprep.subr.bf16.mxu0 %v450
    %1486 = vmatpush1.bf16.msra.mxu0 %v449
    %1487 = vmatprep.subr.bf16.mxu0 %v446
    %1488 = vmatpush1.bf16.msra.mxu0 %v445
    %1489 = vmatprep.subr.bf16.mxu0 %v442
    %1490 = vmatpush1.bf16.msra.mxu0 %v441
    %1491 = vmatprep.subr.bf16.mxu0 %v438
    %1492 = vmatpush1.bf16.msra.mxu0 %v437
    %1493 = vmatprep.subr.bf16.mxu0 %v434
    %1494 = vmatpush1.bf16.msra.mxu0 %v433
    %1495 = vmatprep.subr.bf16.mxu0 %v430
    %1496 = vmatpush1.bf16.msra.mxu0 %v429
    %1497 = vmatprep.subr.bf16.mxu0 0
    %1498 = vmatpush2.bf16.msra.mxu0 0
    %1499 = vmatprep.subr.bf16.mxu0 0
    %1500 = vmatpush2.bf16.msra.mxu0 0
    %1501 = vmatprep.subr.bf16.mxu0 0
    %1502 = vmatpush2.bf16.msra.mxu0 0
    %1503 = vmatprep.subr.bf16.mxu0 0
    %1504 = vmatpush2.bf16.msra.mxu0 0
    %1505 = vmatprep.subr.bf16.mxu0 0
    %1506 = vmatpush2.bf16.msra.mxu0 0
    %1507 = vmatprep.subr.bf16.mxu0 0
    %1508 = vmatpush2.bf16.msra.mxu0 0
    %1509 = vmatprep.subr.bf16.mxu0 0
    %1510 = vmatpush2.bf16.msra.mxu0 0
    %1511 = vmatprep.subr.bf16.mxu0 0
    %1512 = vmatpush2.bf16.msra.mxu0 0
    %1513 = vmatprep.mubr.bf16.mxu0 0
    %1514 = vmatmul.mubr.bf16.gmra.mxu0 %v1439
    %v1515 = vpop.f32.mrf.mxu0
    %v1516 = vadd.f32 0.0, %v1515
    %v1517 = vpop.f32.mrf.mxu0
    %v1518 = vadd.f32 0.0, %v1517
    %v1519 = vpop.f32.mrf.mxu0
    %v1520 = vpop.f32.mrf.mxu0
    %1521 = vdwg.mxu0
    %1522 = vmatprep.subr.bf16.mxu0 %v698
    %1523 = vmatpush1.bf16.msra.mxu0 %v697
    %1524 = vmatprep.subr.bf16.mxu0 %v694
    %1525 = vmatpush1.bf16.msra.mxu0 %v693
    %1526 = vmatprep.subr.bf16.mxu0 %v690
    %1527 = vmatpush1.bf16.msra.mxu0 %v689
    %1528 = vmatprep.subr.bf16.mxu0 %v686
    %1529 = vmatpush1.bf16.msra.mxu0 %v685
    %1530 = vmatprep.subr.bf16.mxu0 %v682
    %1531 = vmatpush1.bf16.msra.mxu0 %v681
    %1532 = vmatprep.subr.bf16.mxu0 %v678
    %1533 = vmatpush1.bf16.msra.mxu0 %v677
    %1534 = vmatprep.subr.bf16.mxu0 %v674
    %1535 = vmatpush1.bf16.msra.mxu0 %v673
    %1536 = vmatprep.subr.bf16.mxu0 %v670
    %1537 = vmatpush1.bf16.msra.mxu0 %v669
    %1538 = vmatprep.subr.bf16.mxu0 0
    %1539 = vmatpush2.bf16.msra.mxu0 0
    %1540 = vmatprep.subr.bf16.mxu0 0
    %1541 = vmatpush2.bf16.msra.mxu0 0
    %1542 = vmatprep.subr.bf16.mxu0 0
    %1543 = vmatpush2.bf16.msra.mxu0 0
    %1544 = vmatprep.subr.bf16.mxu0 0
    %1545 = vmatpush2.bf16.msra.mxu0 0
    %1546 = vmatprep.subr.bf16.mxu0 0
    %1547 = vmatpush2.bf16.msra.mxu0 0
    %1548 = vmatprep.subr.bf16.mxu0 0
    %1549 = vmatpush2.bf16.msra.mxu0 0
    %1550 = vmatprep.subr.bf16.mxu0 0
    %1551 = vmatpush2.bf16.msra.mxu0 0
    %1552 = vmatprep.subr.bf16.mxu0 0
    %1553 = vmatpush2.bf16.msra.mxu0 0
    %1554 = vmatprep.mubr.bf16.mxu0 0
    %1555 = vmatmul.mubr.bf16.gmra.mxu0 %v1328
    %v1556 = vpop.f32.mrf.mxu0
    %v1557 = vadd.f32 0.0, %v1556
    %v1558 = vpop.f32.mrf.mxu0
    %v1559 = vadd.f32 0.0, %v1558
    %v1560 = vpop.f32.mrf.mxu0
    %v1561 = vpop.f32.mrf.mxu0
    %1562 = vdwg.mxu0
    %1563 = vmatprep.subr.bf16.mxu0 %v700
    %1564 = vmatpush1.bf16.msra.mxu0 %v699
    %1565 = vmatprep.subr.bf16.mxu0 %v696
    %1566 = vmatpush1.bf16.msra.mxu0 %v695
    %1567 = vmatprep.subr.bf16.mxu0 %v692
    %1568 = vmatpush1.bf16.msra.mxu0 %v691
    %1569 = vmatprep.subr.bf16.mxu0 %v688
    %1570 = vmatpush1.bf16.msra.mxu0 %v687
    %1571 = vmatprep.subr.bf16.mxu0 %v684
    %1572 = vmatpush1.bf16.msra.mxu0 %v683
    %1573 = vmatprep.subr.bf16.mxu0 %v680
    %1574 = vmatpush1.bf16.msra.mxu0 %v679
    %1575 = vmatprep.subr.bf16.mxu0 %v676
    %1576 = vmatpush1.bf16.msra.mxu0 %v675
    %1577 = vmatprep.subr.bf16.mxu0 %v672
    %1578 = vmatpush1.bf16.msra.mxu0 %v671
    %1579 = vmatprep.subr.bf16.mxu0 0
    %1580 = vmatpush2.bf16.msra.mxu0 0
    %1581 = vmatprep.subr.bf16.mxu0 0
    %1582 = vmatpush2.bf16.msra.mxu0 0
    %1583 = vmatprep.subr.bf16.mxu0 0
    %1584 = vmatpush2.bf16.msra.mxu0 0
    %1585 = vmatprep.subr.bf16.mxu0 0
    %1586 = vmatpush2.bf16.msra.mxu0 0
    %1587 = vmatprep.subr.bf16.mxu0 0
    %1588 = vmatpush2.bf16.msra.mxu0 0
    %1589 = vmatprep.subr.bf16.mxu0 0
    %1590 = vmatpush2.bf16.msra.mxu0 0
    %1591 = vmatprep.subr.bf16.mxu0 0
    %1592 = vmatpush2.bf16.msra.mxu0 0
    %1593 = vmatprep.subr.bf16.mxu0 0
    %1594 = vmatpush2.bf16.msra.mxu0 0
    %1595 = vmatprep.mubr.bf16.mxu0 0
    %1596 = vmatmul.mubr.bf16.gmra.mxu0 %v1328
    %v1597 = vpop.f32.mrf.mxu0
    %v1598 = vadd.f32 0.0, %v1597
    %v1599 = vpop.f32.mrf.mxu0
    %v1600 = vadd.f32 0.0, %v1599
    %v1601 = vpop.f32.mrf.mxu0
    %v1602 = vpop.f32.mrf.mxu0
    %1603 = vdwg.mxu0
    %v1604 = vadd.f32 %v307, %v1557
    %v1605 = vadd.f32 %v308, %v1559
    %v1606 = vadd.f32 %v309, %v1598
    %v1607 = vadd.f32 %v310, %v1600
    %v1608 = vxor.u32 %v1604, 2147483648
    %v1609 = vxor.u32 %v1605, 2147483648
    %v1610 = vxor.u32 %v1606, 2147483648
    %v1611 = vmul.f32 %v1608, 1.442695
    %v1612 = vpow.pop %v1611
    %v1613 = vmul.f32 %v1609, 1.442695
    %v1614 = vpow.pop %v1613
    %v1615 = vmul.f32 %v1610, 1.442695
    %v1616 = vpow.pop %v1615
    %v1617 = vadd.f32 %v1612, 1.0
    %v1618 = vadd.f32 %v1614, 1.0
    %v1619 = vadd.f32 %v1616, 1.0
    %v1620 = vrcp.pop %v1617
    %v1621 = vmul.f32 1.0, %v1620
    %v1622 = vrcp.pop %v1618
    %v1623 = vmul.f32 1.0, %v1622
    %v1624 = vrcp.pop %v1619
    %v1625 = vmul.f32 1.0, %v1624
    %v1626 = vtanh.pop %v1607
    %v1627 = vmul.f32 %v1623, %v1325
    %v1628 = vmul.f32 %v1621, %v1626
    %v1629 = vadd.f32 %v1627, %v1628
    %v1630 = vtanh.pop %v1629
    %v1631 = vmul.f32 %v1625, %v1630
    %v1632 = vpack.c.bf16 %v1631, %v1631
    %1633 = vmatprep.subr.bf16.mxu0 %v969
    %1634 = vmatpush1.bf16.msra.mxu0 %v968
    %1635 = vmatprep.subr.bf16.mxu0 %v965
    %1636 = vmatpush1.bf16.msra.mxu0 %v964
    %1637 = vmatprep.subr.bf16.mxu0 %v961
    %1638 = vmatpush1.bf16.msra.mxu0 %v960
    %1639 = vmatprep.subr.bf16.mxu0 %v957
    %1640 = vmatpush1.bf16.msra.mxu0 %v956
    %1641 = vmatprep.subr.bf16.mxu0 %v953
    %1642 = vmatpush1.bf16.msra.mxu0 %v952
    %1643 = vmatprep.subr.bf16.mxu0 %v949
    %1644 = vmatpush1.bf16.msra.mxu0 %v948
    %1645 = vmatprep.subr.bf16.mxu0 %v945
    %1646 = vmatpush1.bf16.msra.mxu0 %v944
    %1647 = vmatprep.subr.bf16.mxu0 %v941
    %1648 = vmatpush1.bf16.msra.mxu0 %v940
    %1649 = vmatprep.subr.bf16.mxu0 0
    %1650 = vmatpush2.bf16.msra.mxu0 0
    %1651 = vmatprep.subr.bf16.mxu0 0
    %1652 = vmatpush2.bf16.msra.mxu0 0
    %1653 = vmatprep.subr.bf16.mxu0 0
    %1654 = vmatpush2.bf16.msra.mxu0 0
    %1655 = vmatprep.subr.bf16.mxu0 0
    %1656 = vmatpush2.bf16.msra.mxu0 0
    %1657 = vmatprep.subr.bf16.mxu0 0
    %1658 = vmatpush2.bf16.msra.mxu0 0
    %1659 = vmatprep.subr.bf16.mxu0 0
    %1660 = vmatpush2.bf16.msra.mxu0 0
    %1661 = vmatprep.subr.bf16.mxu0 0
    %1662 = vmatpush2.bf16.msra.mxu0 0
    %1663 = vmatprep.subr.bf16.mxu0 0
    %1664 = vmatpush2.bf16.msra.mxu0 0
    %1665 = vmatprep.mubr.bf16.mxu0 0
    %1666 = vmatmul.mubr.bf16.gmra.mxu0 %v1632
    %v1667 = vpop.f32.mrf.mxu0
    %v1668 = vadd.f32 %v1475, %v1667
    %v1669 = vpop.f32.mrf.mxu0
    %v1670 = vadd.f32 %v1477, %v1669
    %v1671 = vpop.f32.mrf.mxu0
    %v1672 = vpop.f32.mrf.mxu0
    %1673 = vdwg.mxu0
    %1674 = vmatprep.subr.bf16.mxu0 %v971
    %1675 = vmatpush1.bf16.msra.mxu0 %v970
    %1676 = vmatprep.subr.bf16.mxu0 %v967
    %1677 = vmatpush1.bf16.msra.mxu0 %v966
    %1678 = vmatprep.subr.bf16.mxu0 %v963
    %1679 = vmatpush1.bf16.msra.mxu0 %v962
    %1680 = vmatprep.subr.bf16.mxu0 %v959
    %1681 = vmatpush1.bf16.msra.mxu0 %v958
    %1682 = vmatprep.subr.bf16.mxu0 %v955
    %1683 = vmatpush1.bf16.msra.mxu0 %v954
    %1684 = vmatprep.subr.bf16.mxu0 %v951
    %1685 = vmatpush1.bf16.msra.mxu0 %v950
    %1686 = vmatprep.subr.bf16.mxu0 %v947
    %1687 = vmatpush1.bf16.msra.mxu0 %v946
    %1688 = vmatprep.subr.bf16.mxu0 %v943
    %1689 = vmatpush1.bf16.msra.mxu0 %v942
    %1690 = vmatprep.subr.bf16.mxu0 0
    %1691 = vmatpush2.bf16.msra.mxu0 0
    %1692 = vmatprep.subr.bf16.mxu0 0
    %1693 = vmatpush2.bf16.msra.mxu0 0
    %1694 = vmatprep.subr.bf16.mxu0 0
    %1695 = vmatpush2.bf16.msra.mxu0 0
    %1696 = vmatprep.subr.bf16.mxu0 0
    %1697 = vmatpush2.bf16.msra.mxu0 0
    %1698 = vmatprep.subr.bf16.mxu0 0
    %1699 = vmatpush2.bf16.msra.mxu0 0
    %1700 = vmatprep.subr.bf16.mxu0 0
    %1701 = vmatpush2.bf16.msra.mxu0 0
    %1702 = vmatprep.subr.bf16.mxu0 0
    %1703 = vmatpush2.bf16.msra.mxu0 0
    %1704 = vmatprep.subr.bf16.mxu0 0
    %1705 = vmatpush2.bf16.msra.mxu0 0
    %1706 = vmatprep.mubr.bf16.mxu0 0
    %1707 = vmatmul.mubr.bf16.gmra.mxu0 %v1632
    %v1708 = vpop.f32.mrf.mxu0
    %v1709 = vadd.f32 %v1516, %v1708
    %v1710 = vpop.f32.mrf.mxu0
    %v1711 = vadd.f32 %v1518, %v1710
    %v1712 = vpop.f32.mrf.mxu0
    %v1713 = vpop.f32.mrf.mxu0
    %1714 = vdwg.mxu0
    %v1715 = vadd.f32 %v1668, %v1090
    %v1716 = vadd.f32 %v1670, %v1094
    %v1717 = vadd.f32 %v1709, %v1098
    %v1718 = vadd.f32 %v1711, %v1102
    %v1719 = vxor.u32 %v1715, 2147483648
    %v1720 = vxor.u32 %v1716, 2147483648
    %v1721 = vxor.u32 %v1717, 2147483648
    %v1722 = vmul.f32 %v1719, 1.442695
    %v1723 = vpow.pop %v1722
    %v1724 = vmul.f32 %v1720, 1.442695
    %v1725 = vpow.pop %v1724
    %v1726 = vmul.f32 %v1721, 1.442695
    %v1727 = vpow.pop %v1726
    %v1728 = vadd.f32 %v1723, 1.0
    %v1729 = vadd.f32 %v1725, 1.0
    %v1730 = vadd.f32 %v1727, 1.0
    %v1731 = vrcp.pop %v1728
    %v1732 = vmul.f32 1.0, %v1731
    %v1733 = vrcp.pop %v1729
    %v1734 = vmul.f32 1.0, %v1733
    %v1735 = vrcp.pop %v1730
    %v1736 = vmul.f32 1.0, %v1735
    %v1737 = vtanh.pop %v1718
    %v1738 = vmul.f32 %v1734, %v1436
    %v1739 = vmul.f32 %v1732, %v1737
    %v1740 = vadd.f32 %v1738, %v1739
    %v1741 = vtanh.pop %v1740
    %v1742 = vmul.f32 %v1736, %v1741
    %v1743 = vpack.c.bf16 %v1742, %v1742
    %1744 = vmatprep.subr.bf16.mxu0 %v456
    %1745 = vmatpush1.bf16.msra.mxu0 %v455
    %1746 = vmatprep.subr.bf16.mxu0 %v452
    %1747 = vmatpush1.bf16.msra.mxu0 %v451
    %1748 = vmatprep.subr.bf16.mxu0 %v448
    %1749 = vmatpush1.bf16.msra.mxu0 %v447
    %1750 = vmatprep.subr.bf16.mxu0 %v444
    %1751 = vmatpush1.bf16.msra.mxu0 %v443
    %1752 = vmatprep.subr.bf16.mxu0 %v440
    %1753 = vmatpush1.bf16.msra.mxu0 %v439
    %1754 = vmatprep.subr.bf16.mxu0 %v436
    %1755 = vmatpush1.bf16.msra.mxu0 %v435
    %1756 = vmatprep.subr.bf16.mxu0 %v432
    %1757 = vmatpush1.bf16.msra.mxu0 %v431
    %1758 = vmatprep.subr.bf16.mxu0 %v428
    %1759 = vmatpush1.bf16.msra.mxu0 %v427
    %1760 = vmatprep.subr.bf16.mxu0 0
    %1761 = vmatpush2.bf16.msra.mxu0 0
    %1762 = vmatprep.subr.bf16.mxu0 0
    %1763 = vmatpush2.bf16.msra.mxu0 0
    %1764 = vmatprep.subr.bf16.mxu0 0
    %1765 = vmatpush2.bf16.msra.mxu0 0
    %1766 = vmatprep.subr.bf16.mxu0 0
    %1767 = vmatpush2.bf16.msra.mxu0 0
    %1768 = vmatprep.subr.bf16.mxu0 0
    %1769 = vmatpush2.bf16.msra.mxu0 0
    %1770 = vmatprep.subr.bf16.mxu0 0
    %1771 = vmatpush2.bf16.msra.mxu0 0
    %1772 = vmatprep.subr.bf16.mxu0 0
    %1773 = vmatpush2.bf16.msra.mxu0 0
    %1774 = vmatprep.subr.bf16.mxu0 0
    %1775 = vmatpush2.bf16.msra.mxu0 0
    %1776 = vmatprep.mubr.bf16.mxu0 0
    %1777 = vmatmul.mubr.bf16.gmra.mxu0 %v1743
    %v1778 = vpop.f32.mrf.mxu0
    %v1779 = vadd.f32 0.0, %v1778
    %v1780 = vpop.f32.mrf.mxu0
    %v1781 = vadd.f32 0.0, %v1780
    %v1782 = vpop.f32.mrf.mxu0
    %v1783 = vpop.f32.mrf.mxu0
    %1784 = vdwg.mxu0
    %1785 = vmatprep.subr.bf16.mxu0 %v458
    %1786 = vmatpush1.bf16.msra.mxu0 %v457
    %1787 = vmatprep.subr.bf16.mxu0 %v454
    %1788 = vmatpush1.bf16.msra.mxu0 %v453
    %1789 = vmatprep.subr.bf16.mxu0 %v450
    %1790 = vmatpush1.bf16.msra.mxu0 %v449
    %1791 = vmatprep.subr.bf16.mxu0 %v446
    %1792 = vmatpush1.bf16.msra.mxu0 %v445
    %1793 = vmatprep.subr.bf16.mxu0 %v442
    %1794 = vmatpush1.bf16.msra.mxu0 %v441
    %1795 = vmatprep.subr.bf16.mxu0 %v438
    %1796 = vmatpush1.bf16.msra.mxu0 %v437
    %1797 = vmatprep.subr.bf16.mxu0 %v434
    %1798 = vmatpush1.bf16.msra.mxu0 %v433
    %1799 = vmatprep.subr.bf16.mxu0 %v430
    %1800 = vmatpush1.bf16.msra.mxu0 %v429
    %1801 = vmatprep.subr.bf16.mxu0 0
    %1802 = vmatpush2.bf16.msra.mxu0 0
    %1803 = vmatprep.subr.bf16.mxu0 0
    %1804 = vmatpush2.bf16.msra.mxu0 0
    %1805 = vmatprep.subr.bf16.mxu0 0
    %1806 = vmatpush2.bf16.msra.mxu0 0
    %1807 = vmatprep.subr.bf16.mxu0 0
    %1808 = vmatpush2.bf16.msra.mxu0 0
    %1809 = vmatprep.subr.bf16.mxu0 0
    %1810 = vmatpush2.bf16.msra.mxu0 0
    %1811 = vmatprep.subr.bf16.mxu0 0
    %1812 = vmatpush2.bf16.msra.mxu0 0
    %1813 = vmatprep.subr.bf16.mxu0 0
    %1814 = vmatpush2.bf16.msra.mxu0 0
    %1815 = vmatprep.subr.bf16.mxu0 0
    %1816 = vmatpush2.bf16.msra.mxu0 0
    %1817 = vmatprep.mubr.bf16.mxu0 0
    %1818 = vmatmul.mubr.bf16.gmra.mxu0 %v1743
    %v1819 = vpop.f32.mrf.mxu0
    %v1820 = vadd.f32 0.0, %v1819
    %v1821 = vpop.f32.mrf.mxu0
    %v1822 = vadd.f32 0.0, %v1821
    %v1823 = vpop.f32.mrf.mxu0
    %v1824 = vpop.f32.mrf.mxu0
    %1825 = vdwg.mxu0
    %1826 = vmatprep.subr.bf16.mxu0 %v698
    %1827 = vmatpush1.bf16.msra.mxu0 %v697
    %1828 = vmatprep.subr.bf16.mxu0 %v694
    %1829 = vmatpush1.bf16.msra.mxu0 %v693
    %1830 = vmatprep.subr.bf16.mxu0 %v690
    %1831 = vmatpush1.bf16.msra.mxu0 %v689
    %1832 = vmatprep.subr.bf16.mxu0 %v686
    %1833 = vmatpush1.bf16.msra.mxu0 %v685
    %1834 = vmatprep.subr.bf16.mxu0 %v682
    %1835 = vmatpush1.bf16.msra.mxu0 %v681
    %1836 = vmatprep.subr.bf16.mxu0 %v678
    %1837 = vmatpush1.bf16.msra.mxu0 %v677
    %1838 = vmatprep.subr.bf16.mxu0 %v674
    %1839 = vmatpush1.bf16.msra.mxu0 %v673
    %1840 = vmatprep.subr.bf16.mxu0 %v670
    %1841 = vmatpush1.bf16.msra.mxu0 %v669
    %1842 = vmatprep.subr.bf16.mxu0 0
    %1843 = vmatpush2.bf16.msra.mxu0 0
    %1844 = vmatprep.subr.bf16.mxu0 0
    %1845 = vmatpush2.bf16.msra.mxu0 0
    %1846 = vmatprep.subr.bf16.mxu0 0
    %1847 = vmatpush2.bf16.msra.mxu0 0
    %1848 = vmatprep.subr.bf16.mxu0 0
    %1849 = vmatpush2.bf16.msra.mxu0 0
    %1850 = vmatprep.subr.bf16.mxu0 0
    %1851 = vmatpush2.bf16.msra.mxu0 0
    %1852 = vmatprep.subr.bf16.mxu0 0
    %1853 = vmatpush2.bf16.msra.mxu0 0
    %1854 = vmatprep.subr.bf16.mxu0 0
    %1855 = vmatpush2.bf16.msra.mxu0 0
    %1856 = vmatprep.subr.bf16.mxu0 0
    %1857 = vmatpush2.bf16.msra.mxu0 0
    %1858 = vmatprep.mubr.bf16.mxu0 0
    %1859 = vmatmul.mubr.bf16.gmra.mxu0 %v1632
    %v1860 = vpop.f32.mrf.mxu0
    %v1861 = vadd.f32 0.0, %v1860
    %v1862 = vpop.f32.mrf.mxu0
    %v1863 = vadd.f32 0.0, %v1862
    %v1864 = vpop.f32.mrf.mxu0
    %v1865 = vpop.f32.mrf.mxu0
    %1866 = vdwg.mxu0
    %1867 = vmatprep.subr.bf16.mxu0 %v700
    %1868 = vmatpush1.bf16.msra.mxu0 %v699
    %1869 = vmatprep.subr.bf16.mxu0 %v696
    %1870 = vmatpush1.bf16.msra.mxu0 %v695
    %1871 = vmatprep.subr.bf16.mxu0 %v692
    %1872 = vmatpush1.bf16.msra.mxu0 %v691
    %1873 = vmatprep.subr.bf16.mxu0 %v688
    %1874 = vmatpush1.bf16.msra.mxu0 %v687
    %1875 = vmatprep.subr.bf16.mxu0 %v684
    %1876 = vmatpush1.bf16.msra.mxu0 %v683
    %1877 = vmatprep.subr.bf16.mxu0 %v680
    %1878 = vmatpush1.bf16.msra.mxu0 %v679
    %1879 = vmatprep.subr.bf16.mxu0 %v676
    %1880 = vmatpush1.bf16.msra.mxu0 %v675
    %1881 = vmatprep.subr.bf16.mxu0 %v672
    %1882 = vmatpush1.bf16.msra.mxu0 %v671
    %1883 = vmatprep.subr.bf16.mxu0 0
    %1884 = vmatpush2.bf16.msra.mxu0 0
    %1885 = vmatprep.subr.bf16.mxu0 0
    %1886 = vmatpush2.bf16.msra.mxu0 0
    %1887 = vmatprep.subr.bf16.mxu0 0
    %1888 = vmatpush2.bf16.msra.mxu0 0
    %1889 = vmatprep.subr.bf16.mxu0 0
    %1890 = vmatpush2.bf16.msra.mxu0 0
    %1891 = vmatprep.subr.bf16.mxu0 0
    %1892 = vmatpush2.bf16.msra.mxu0 0
    %1893 = vmatprep.subr.bf16.mxu0 0
    %1894 = vmatpush2.bf16.msra.mxu0 0
    %1895 = vmatprep.subr.bf16.mxu0 0
    %1896 = vmatpush2.bf16.msra.mxu0 0
    %1897 = vmatprep.subr.bf16.mxu0 0
    %1898 = vmatpush2.bf16.msra.mxu0 0
    %1899 = vmatprep.mubr.bf16.mxu0 0
    %1900 = vmatmul.mubr.bf16.gmra.mxu0 %v1632
    %v1901 = vpop.f32.mrf.mxu0
    %v1902 = vadd.f32 0.0, %v1901
    %v1903 = vpop.f32.mrf.mxu0
    %v1904 = vadd.f32 0.0, %v1903
    %v1905 = vpop.f32.mrf.mxu0
    %v1906 = vpop.f32.mrf.mxu0
    %1907 = vdwg.mxu0
    %v1908 = vadd.f32 %v311, %v1861
    %v1909 = vadd.f32 %v312, %v1863
    %v1910 = vadd.f32 %v313, %v1902
    %v1911 = vadd.f32 %v314, %v1904
    %v1912 = vxor.u32 %v1908, 2147483648
    %v1913 = vxor.u32 %v1909, 2147483648
    %v1914 = vxor.u32 %v1910, 2147483648
    %v1915 = vmul.f32 %v1912, 1.442695
    %v1916 = vpow.pop %v1915
    %v1917 = vmul.f32 %v1913, 1.442695
    %v1918 = vpow.pop %v1917
    %v1919 = vmul.f32 %v1914, 1.442695
    %v1920 = vpow.pop %v1919
    %v1921 = vadd.f32 %v1916, 1.0
    %v1922 = vadd.f32 %v1918, 1.0
    %v1923 = vadd.f32 %v1920, 1.0
    %v1924 = vrcp.pop %v1921
    %v1925 = vmul.f32 1.0, %v1924
    %v1926 = vrcp.pop %v1922
    %v1927 = vmul.f32 1.0, %v1926
    %v1928 = vrcp.pop %v1923
    %v1929 = vmul.f32 1.0, %v1928
    %v1930 = vtanh.pop %v1911
    %v1931 = vmul.f32 %v1927, %v1629
    %v1932 = vmul.f32 %v1925, %v1930
    %v1933 = vadd.f32 %v1931, %v1932
    %v1934 = vtanh.pop %v1933
    %v1935 = vmul.f32 %v1929, %v1934
    %v1936 = vpack.c.bf16 %v1935, %v1935
    %1937 = vmatprep.subr.bf16.mxu0 %v969
    %1938 = vmatpush1.bf16.msra.mxu0 %v968
    %1939 = vmatprep.subr.bf16.mxu0 %v965
    %1940 = vmatpush1.bf16.msra.mxu0 %v964
    %1941 = vmatprep.subr.bf16.mxu0 %v961
    %1942 = vmatpush1.bf16.msra.mxu0 %v960
    %1943 = vmatprep.subr.bf16.mxu0 %v957
    %1944 = vmatpush1.bf16.msra.mxu0 %v956
    %1945 = vmatprep.subr.bf16.mxu0 %v953
    %1946 = vmatpush1.bf16.msra.mxu0 %v952
    %1947 = vmatprep.subr.bf16.mxu0 %v949
    %1948 = vmatpush1.bf16.msra.mxu0 %v948
    %1949 = vmatprep.subr.bf16.mxu0 %v945
    %1950 = vmatpush1.bf16.msra.mxu0 %v944
    %1951 = vmatprep.subr.bf16.mxu0 %v941
    %1952 = vmatpush1.bf16.msra.mxu0 %v940
    %1953 = vmatprep.subr.bf16.mxu0 0
    %1954 = vmatpush2.bf16.msra.mxu0 0
    %1955 = vmatprep.subr.bf16.mxu0 0
    %1956 = vmatpush2.bf16.msra.mxu0 0
    %1957 = vmatprep.subr.bf16.mxu0 0
    %1958 = vmatpush2.bf16.msra.mxu0 0
    %1959 = vmatprep.subr.bf16.mxu0 0
    %1960 = vmatpush2.bf16.msra.mxu0 0
    %1961 = vmatprep.subr.bf16.mxu0 0
    %1962 = vmatpush2.bf16.msra.mxu0 0
    %1963 = vmatprep.subr.bf16.mxu0 0
    %1964 = vmatpush2.bf16.msra.mxu0 0
    %1965 = vmatprep.subr.bf16.mxu0 0
    %1966 = vmatpush2.bf16.msra.mxu0 0
    %1967 = vmatprep.subr.bf16.mxu0 0
    %1968 = vmatpush2.bf16.msra.mxu0 0
    %1969 = vmatprep.mubr.bf16.mxu0 0
    %1970 = vmatmul.mubr.bf16.gmra.mxu0 %v1936
    %v1971 = vpop.f32.mrf.mxu0
    %v1972 = vadd.f32 %v1779, %v1971
    %v1973 = vpop.f32.mrf.mxu0
    %v1974 = vadd.f32 %v1781, %v1973
    %v1975 = vpop.f32.mrf.mxu0
    %v1976 = vpop.f32.mrf.mxu0
    %1977 = vdwg.mxu0
    %1978 = vmatprep.subr.bf16.mxu0 %v971
    %1979 = vmatpush1.bf16.msra.mxu0 %v970
    %1980 = vmatprep.subr.bf16.mxu0 %v967
    %1981 = vmatpush1.bf16.msra.mxu0 %v966
    %1982 = vmatprep.subr.bf16.mxu0 %v963
    %1983 = vmatpush1.bf16.msra.mxu0 %v962
    %1984 = vmatprep.subr.bf16.mxu0 %v959
    %1985 = vmatpush1.bf16.msra.mxu0 %v958
    %1986 = vmatprep.subr.bf16.mxu0 %v955
    %1987 = vmatpush1.bf16.msra.mxu0 %v954
    %1988 = vmatprep.subr.bf16.mxu0 %v951
    %1989 = vmatpush1.bf16.msra.mxu0 %v950
    %1990 = vmatprep.subr.bf16.mxu0 %v947
    %1991 = vmatpush1.bf16.msra.mxu0 %v946
    %1992 = vmatprep.subr.bf16.mxu0 %v943
    %1993 = vmatpush1.bf16.msra.mxu0 %v942
    %1994 = vmatprep.subr.bf16.mxu0 0
    %1995 = vmatpush2.bf16.msra.mxu0 0
    %1996 = vmatprep.subr.bf16.mxu0 0
    %1997 = vmatpush2.bf16.msra.mxu0 0
    %1998 = vmatprep.subr.bf16.mxu0 0
    %1999 = vmatpush2.bf16.msra.mxu0 0
    %2000 = vmatprep.subr.bf16.mxu0 0
    %2001 = vmatpush2.bf16.msra.mxu0 0
    %2002 = vmatprep.subr.bf16.mxu0 0
    %2003 = vmatpush2.bf16.msra.mxu0 0
    %2004 = vmatprep.subr.bf16.mxu0 0
    %2005 = vmatpush2.bf16.msra.mxu0 0
    %2006 = vmatprep.subr.bf16.mxu0 0
    %2007 = vmatpush2.bf16.msra.mxu0 0
    %2008 = vmatprep.subr.bf16.mxu0 0
    %2009 = vmatpush2.bf16.msra.mxu0 0
    %2010 = vmatprep.mubr.bf16.mxu0 0
    %2011 = vmatmul.mubr.bf16.gmra.mxu0 %v1936
    %v2012 = vpop.f32.mrf.mxu0
    %v2013 = vadd.f32 %v1820, %v2012
    %v2014 = vpop.f32.mrf.mxu0
    %v2015 = vadd.f32 %v1822, %v2014
    %v2016 = vpop.f32.mrf.mxu0
    %v2017 = vpop.f32.mrf.mxu0
    %2018 = vdwg.mxu0
    %v2019 = vadd.f32 %v1972, %v1090
    %v2020 = vadd.f32 %v1974, %v1094
    %v2021 = vadd.f32 %v2013, %v1098
    %v2022 = vadd.f32 %v2015, %v1102
    %v2023 = vxor.u32 %v2019, 2147483648
    %v2024 = vxor.u32 %v2020, 2147483648
    %v2025 = vxor.u32 %v2021, 2147483648
    %v2026 = vmul.f32 %v2023, 1.442695
    %v2027 = vpow.pop %v2026
    %v2028 = vmul.f32 %v2024, 1.442695
    %v2029 = vpow.pop %v2028
    %v2030 = vmul.f32 %v2025, 1.442695
    %v2031 = vpow.pop %v2030
    %v2032 = vadd.f32 %v2027, 1.0
    %v2033 = vadd.f32 %v2029, 1.0
    %v2034 = vadd.f32 %v2031, 1.0
    %v2035 = vrcp.pop %v2032
    %v2036 = vmul.f32 1.0, %v2035
    %v2037 = vrcp.pop %v2033
    %v2038 = vmul.f32 1.0, %v2037
    %v2039 = vrcp.pop %v2034
    %v2040 = vmul.f32 1.0, %v2039
    %v2041 = vtanh.pop %v2022
    %v2042 = vmul.f32 %v2038, %v1740
    %v2043 = vmul.f32 %v2036, %v2041
    %v2044 = vadd.f32 %v2042, %v2043
    %v2045 = vtanh.pop %v2044
    %v2046 = vmul.f32 %v2040, %v2045
    %v2047 = vpack.c.bf16 %v2046, %v2046
    %2048 = vmatprep.subr.bf16.mxu0 %v456
    %2049 = vmatpush1.bf16.msra.mxu0 %v455
    %2050 = vmatprep.subr.bf16.mxu0 %v452
    %2051 = vmatpush1.bf16.msra.mxu0 %v451
    %2052 = vmatprep.subr.bf16.mxu0 %v448
    %2053 = vmatpush1.bf16.msra.mxu0 %v447
    %2054 = vmatprep.subr.bf16.mxu0 %v444
    %2055 = vmatpush1.bf16.msra.mxu0 %v443
    %2056 = vmatprep.subr.bf16.mxu0 %v440
    %2057 = vmatpush1.bf16.msra.mxu0 %v439
    %2058 = vmatprep.subr.bf16.mxu0 %v436
    %2059 = vmatpush1.bf16.msra.mxu0 %v435
    %2060 = vmatprep.subr.bf16.mxu0 %v432
    %2061 = vmatpush1.bf16.msra.mxu0 %v431
    %2062 = vmatprep.subr.bf16.mxu0 %v428
    %2063 = vmatpush1.bf16.msra.mxu0 %v427
    %2064 = vmatprep.subr.bf16.mxu0 0
    %2065 = vmatpush2.bf16.msra.mxu0 0
    %2066 = vmatprep.subr.bf16.mxu0 0
    %2067 = vmatpush2.bf16.msra.mxu0 0
    %2068 = vmatprep.subr.bf16.mxu0 0
    %2069 = vmatpush2.bf16.msra.mxu0 0
    %2070 = vmatprep.subr.bf16.mxu0 0
    %2071 = vmatpush2.bf16.msra.mxu0 0
    %2072 = vmatprep.subr.bf16.mxu0 0
    %2073 = vmatpush2.bf16.msra.mxu0 0
    %2074 = vmatprep.subr.bf16.mxu0 0
    %2075 = vmatpush2.bf16.msra.mxu0 0
    %2076 = vmatprep.subr.bf16.mxu0 0
    %2077 = vmatpush2.bf16.msra.mxu0 0
    %2078 = vmatprep.subr.bf16.mxu0 0
    %2079 = vmatpush2.bf16.msra.mxu0 0
    %2080 = vmatprep.mubr.bf16.mxu0 0
    %2081 = vmatmul.mubr.bf16.gmra.mxu0 %v2047
    %v2082 = vpop.f32.mrf.mxu0
    %v2083 = vadd.f32 0.0, %v2082
    %v2084 = vpop.f32.mrf.mxu0
    %v2085 = vadd.f32 0.0, %v2084
    %v2086 = vpop.f32.mrf.mxu0
    %v2087 = vpop.f32.mrf.mxu0
    %2088 = vdwg.mxu0
    %2089 = vmatprep.subr.bf16.mxu0 %v458
    %2090 = vmatpush1.bf16.msra.mxu0 %v457
    %2091 = vmatprep.subr.bf16.mxu0 %v454
    %2092 = vmatpush1.bf16.msra.mxu0 %v453
    %2093 = vmatprep.subr.bf16.mxu0 %v450
    %2094 = vmatpush1.bf16.msra.mxu0 %v449
    %2095 = vmatprep.subr.bf16.mxu0 %v446
    %2096 = vmatpush1.bf16.msra.mxu0 %v445
    %2097 = vmatprep.subr.bf16.mxu0 %v442
    %2098 = vmatpush1.bf16.msra.mxu0 %v441
    %2099 = vmatprep.subr.bf16.mxu0 %v438
    %2100 = vmatpush1.bf16.msra.mxu0 %v437
    %2101 = vmatprep.subr.bf16.mxu0 %v434
    %2102 = vmatpush1.bf16.msra.mxu0 %v433
    %2103 = vmatprep.subr.bf16.mxu0 %v430
    %2104 = vmatpush1.bf16.msra.mxu0 %v429
    %2105 = vmatprep.subr.bf16.mxu0 0
    %2106 = vmatpush2.bf16.msra.mxu0 0
    %2107 = vmatprep.subr.bf16.mxu0 0
    %2108 = vmatpush2.bf16.msra.mxu0 0
    %2109 = vmatprep.subr.bf16.mxu0 0
    %2110 = vmatpush2.bf16.msra.mxu0 0
    %2111 = vmatprep.subr.bf16.mxu0 0
    %2112 = vmatpush2.bf16.msra.mxu0 0
    %2113 = vmatprep.subr.bf16.mxu0 0
    %2114 = vmatpush2.bf16.msra.mxu0 0
    %2115 = vmatprep.subr.bf16.mxu0 0
    %2116 = vmatpush2.bf16.msra.mxu0 0
    %2117 = vmatprep.subr.bf16.mxu0 0
    %2118 = vmatpush2.bf16.msra.mxu0 0
    %2119 = vmatprep.subr.bf16.mxu0 0
    %2120 = vmatpush2.bf16.msra.mxu0 0
    %2121 = vmatprep.mubr.bf16.mxu0 0
    %2122 = vmatmul.mubr.bf16.gmra.mxu0 %v2047
    %v2123 = vpop.f32.mrf.mxu0
    %v2124 = vadd.f32 0.0, %v2123
    %v2125 = vpop.f32.mrf.mxu0
    %v2126 = vadd.f32 0.0, %v2125
    %v2127 = vpop.f32.mrf.mxu0
    %v2128 = vpop.f32.mrf.mxu0
    %2129 = vdwg.mxu0
    %2130 = vmatprep.subr.bf16.mxu0 %v698
    %2131 = vmatpush1.bf16.msra.mxu0 %v697
    %2132 = vmatprep.subr.bf16.mxu0 %v694
    %2133 = vmatpush1.bf16.msra.mxu0 %v693
    %2134 = vmatprep.subr.bf16.mxu0 %v690
    %2135 = vmatpush1.bf16.msra.mxu0 %v689
    %2136 = vmatprep.subr.bf16.mxu0 %v686
    %2137 = vmatpush1.bf16.msra.mxu0 %v685
    %2138 = vmatprep.subr.bf16.mxu0 %v682
    %2139 = vmatpush1.bf16.msra.mxu0 %v681
    %2140 = vmatprep.subr.bf16.mxu0 %v678
    %2141 = vmatpush1.bf16.msra.mxu0 %v677
    %2142 = vmatprep.subr.bf16.mxu0 %v674
    %2143 = vmatpush1.bf16.msra.mxu0 %v673
    %2144 = vmatprep.subr.bf16.mxu0 %v670
    %2145 = vmatpush1.bf16.msra.mxu0 %v669
    %2146 = vmatprep.subr.bf16.mxu0 0
    %2147 = vmatpush2.bf16.msra.mxu0 0
    %2148 = vmatprep.subr.bf16.mxu0 0
    %2149 = vmatpush2.bf16.msra.mxu0 0
    %2150 = vmatprep.subr.bf16.mxu0 0
    %2151 = vmatpush2.bf16.msra.mxu0 0
    %2152 = vmatprep.subr.bf16.mxu0 0
    %2153 = vmatpush2.bf16.msra.mxu0 0
    %2154 = vmatprep.subr.bf16.mxu0 0
    %2155 = vmatpush2.bf16.msra.mxu0 0
    %2156 = vmatprep.subr.bf16.mxu0 0
    %2157 = vmatpush2.bf16.msra.mxu0 0
    %2158 = vmatprep.subr.bf16.mxu0 0
    %2159 = vmatpush2.bf16.msra.mxu0 0
    %2160 = vmatprep.subr.bf16.mxu0 0
    %2161 = vmatpush2.bf16.msra.mxu0 0
    %2162 = vmatprep.mubr.bf16.mxu0 0
    %2163 = vmatmul.mubr.bf16.gmra.mxu0 %v1936
    %v2164 = vpop.f32.mrf.mxu0
    %v2165 = vadd.f32 0.0, %v2164
    %v2166 = vpop.f32.mrf.mxu0
    %v2167 = vadd.f32 0.0, %v2166
    %v2168 = vpop.f32.mrf.mxu0
    %v2169 = vpop.f32.mrf.mxu0
    %2170 = vdwg.mxu0
    %2171 = vmatprep.subr.bf16.mxu0 %v700
    %2172 = vmatpush1.bf16.msra.mxu0 %v699
    %2173 = vmatprep.subr.bf16.mxu0 %v696
    %2174 = vmatpush1.bf16.msra.mxu0 %v695
    %2175 = vmatprep.subr.bf16.mxu0 %v692
    %2176 = vmatpush1.bf16.msra.mxu0 %v691
    %2177 = vmatprep.subr.bf16.mxu0 %v688
    %2178 = vmatpush1.bf16.msra.mxu0 %v687
    %2179 = vmatprep.subr.bf16.mxu0 %v684
    %2180 = vmatpush1.bf16.msra.mxu0 %v683
    %2181 = vmatprep.subr.bf16.mxu0 %v680
    %2182 = vmatpush1.bf16.msra.mxu0 %v679
    %2183 = vmatprep.subr.bf16.mxu0 %v676
    %2184 = vmatpush1.bf16.msra.mxu0 %v675
    %2185 = vmatprep.subr.bf16.mxu0 %v672
    %2186 = vmatpush1.bf16.msra.mxu0 %v671
    %2187 = vmatprep.subr.bf16.mxu0 0
    %2188 = vmatpush2.bf16.msra.mxu0 0
    %2189 = vmatprep.subr.bf16.mxu0 0
    %2190 = vmatpush2.bf16.msra.mxu0 0
    %2191 = vmatprep.subr.bf16.mxu0 0
    %2192 = vmatpush2.bf16.msra.mxu0 0
    %2193 = vmatprep.subr.bf16.mxu0 0
    %2194 = vmatpush2.bf16.msra.mxu0 0
    %2195 = vmatprep.subr.bf16.mxu0 0
    %2196 = vmatpush2.bf16.msra.mxu0 0
    %2197 = vmatprep.subr.bf16.mxu0 0
    %2198 = vmatpush2.bf16.msra.mxu0 0
    %2199 = vmatprep.subr.bf16.mxu0 0
    %2200 = vmatpush2.bf16.msra.mxu0 0
    %2201 = vmatprep.subr.bf16.mxu0 0
    %2202 = vmatpush2.bf16.msra.mxu0 0
    %2203 = vmatprep.mubr.bf16.mxu0 0
    %2204 = vmatmul.mubr.bf16.gmra.mxu0 %v1936
    %v2205 = vpop.f32.mrf.mxu0
    %v2206 = vadd.f32 0.0, %v2205
    %v2207 = vpop.f32.mrf.mxu0
    %v2208 = vadd.f32 0.0, %v2207
    %v2209 = vpop.f32.mrf.mxu0
    %v2210 = vpop.f32.mrf.mxu0
    %2211 = vdwg.mxu0
    %v2212 = vadd.f32 %v315, %v2165
    %v2213 = vadd.f32 %v316, %v2167
    %v2214 = vadd.f32 %v317, %v2206
    %v2215 = vadd.f32 %v318, %v2208
    %v2216 = vxor.u32 %v2212, 2147483648
    %v2217 = vxor.u32 %v2213, 2147483648
    %v2218 = vxor.u32 %v2214, 2147483648
    %v2219 = vmul.f32 %v2216, 1.442695
    %v2220 = vpow.pop %v2219
    %v2221 = vmul.f32 %v2217, 1.442695
    %v2222 = vpow.pop %v2221
    %v2223 = vmul.f32 %v2218, 1.442695
    %v2224 = vpow.pop %v2223
    %v2225 = vadd.f32 %v2220, 1.0
    %v2226 = vadd.f32 %v2222, 1.0
    %v2227 = vadd.f32 %v2224, 1.0
    %v2228 = vrcp.pop %v2225
    %v2229 = vmul.f32 1.0, %v2228
    %v2230 = vrcp.pop %v2226
    %v2231 = vmul.f32 1.0, %v2230
    %v2232 = vrcp.pop %v2227
    %v2233 = vmul.f32 1.0, %v2232
    %v2234 = vtanh.pop %v2215
    %v2235 = vmul.f32 %v2231, %v1933
    %v2236 = vmul.f32 %v2229, %v2234
    %v2237 = vadd.f32 %v2235, %v2236
    %v2238 = vtanh.pop %v2237
    %v2239 = vmul.f32 %v2233, %v2238
    %v2240 = vpack.c.bf16 %v2239, %v2239
    %2241 = vmatprep.subr.bf16.mxu0 %v969
    %2242 = vmatpush1.bf16.msra.mxu0 %v968
    %2243 = vmatprep.subr.bf16.mxu0 %v965
    %2244 = vmatpush1.bf16.msra.mxu0 %v964
    %2245 = vmatprep.subr.bf16.mxu0 %v961
    %2246 = vmatpush1.bf16.msra.mxu0 %v960
    %2247 = vmatprep.subr.bf16.mxu0 %v957
    %2248 = vmatpush1.bf16.msra.mxu0 %v956
    %2249 = vmatprep.subr.bf16.mxu0 %v953
    %2250 = vmatpush1.bf16.msra.mxu0 %v952
    %2251 = vmatprep.subr.bf16.mxu0 %v949
    %2252 = vmatpush1.bf16.msra.mxu0 %v948
    %2253 = vmatprep.subr.bf16.mxu0 %v945
    %2254 = vmatpush1.bf16.msra.mxu0 %v944
    %2255 = vmatprep.subr.bf16.mxu0 %v941
    %2256 = vmatpush1.bf16.msra.mxu0 %v940
    %2257 = vmatprep.subr.bf16.mxu0 0
    %2258 = vmatpush2.bf16.msra.mxu0 0
    %2259 = vmatprep.subr.bf16.mxu0 0
    %2260 = vmatpush2.bf16.msra.mxu0 0
    %2261 = vmatprep.subr.bf16.mxu0 0
    %2262 = vmatpush2.bf16.msra.mxu0 0
    %2263 = vmatprep.subr.bf16.mxu0 0
    %2264 = vmatpush2.bf16.msra.mxu0 0
    %2265 = vmatprep.subr.bf16.mxu0 0
    %2266 = vmatpush2.bf16.msra.mxu0 0
    %2267 = vmatprep.subr.bf16.mxu0 0
    %2268 = vmatpush2.bf16.msra.mxu0 0
    %2269 = vmatprep.subr.bf16.mxu0 0
    %2270 = vmatpush2.bf16.msra.mxu0 0
    %2271 = vmatprep.subr.bf16.mxu0 0
    %2272 = vmatpush2.bf16.msra.mxu0 0
    %2273 = vmatprep.mubr.bf16.mxu0 0
    %2274 = vmatmul.mubr.bf16.gmra.mxu0 %v2240
    %v2275 = vpop.f32.mrf.mxu0
    %v2276 = vadd.f32 %v2083, %v2275
    %v2277 = vpop.f32.mrf.mxu0
    %v2278 = vadd.f32 %v2085, %v2277
    %v2279 = vpop.f32.mrf.mxu0
    %v2280 = vpop.f32.mrf.mxu0
    %2281 = vdwg.mxu0
    %2282 = vmatprep.subr.bf16.mxu0 %v971
    %2283 = vmatpush1.bf16.msra.mxu0 %v970
    %2284 = vmatprep.subr.bf16.mxu0 %v967
    %2285 = vmatpush1.bf16.msra.mxu0 %v966
    %2286 = vmatprep.subr.bf16.mxu0 %v963
    %2287 = vmatpush1.bf16.msra.mxu0 %v962
    %2288 = vmatprep.subr.bf16.mxu0 %v959
    %2289 = vmatpush1.bf16.msra.mxu0 %v958
    %2290 = vmatprep.subr.bf16.mxu0 %v955
    %2291 = vmatpush1.bf16.msra.mxu0 %v954
    %2292 = vmatprep.subr.bf16.mxu0 %v951
    %2293 = vmatpush1.bf16.msra.mxu0 %v950
    %2294 = vmatprep.subr.bf16.mxu0 %v947
    %2295 = vmatpush1.bf16.msra.mxu0 %v946
    %2296 = vmatprep.subr.bf16.mxu0 %v943
    %2297 = vmatpush1.bf16.msra.mxu0 %v942
    %2298 = vmatprep.subr.bf16.mxu0 0
    %2299 = vmatpush2.bf16.msra.mxu0 0
    %2300 = vmatprep.subr.bf16.mxu0 0
    %2301 = vmatpush2.bf16.msra.mxu0 0
    %2302 = vmatprep.subr.bf16.mxu0 0
    %2303 = vmatpush2.bf16.msra.mxu0 0
    %2304 = vmatprep.subr.bf16.mxu0 0
    %2305 = vmatpush2.bf16.msra.mxu0 0
    %2306 = vmatprep.subr.bf16.mxu0 0
    %2307 = vmatpush2.bf16.msra.mxu0 0
    %2308 = vmatprep.subr.bf16.mxu0 0
    %2309 = vmatpush2.bf16.msra.mxu0 0
    %2310 = vmatprep.subr.bf16.mxu0 0
    %2311 = vmatpush2.bf16.msra.mxu0 0
    %2312 = vmatprep.subr.bf16.mxu0 0
    %2313 = vmatpush2.bf16.msra.mxu0 0
    %2314 = vmatprep.mubr.bf16.mxu0 0
    %2315 = vmatmul.mubr.bf16.gmra.mxu0 %v2240
    %v2316 = vpop.f32.mrf.mxu0
    %v2317 = vadd.f32 %v2124, %v2316
    %v2318 = vpop.f32.mrf.mxu0
    %v2319 = vadd.f32 %v2126, %v2318
    %v2320 = vpop.f32.mrf.mxu0
    %v2321 = vpop.f32.mrf.mxu0
    %2322 = vdwg.mxu0
    %v2323 = vadd.f32 %v2276, %v1090
    %v2324 = vadd.f32 %v2278, %v1094
    %v2325 = vadd.f32 %v2317, %v1098
    %v2326 = vadd.f32 %v2319, %v1102
    %v2327 = vxor.u32 %v2323, 2147483648
    %v2328 = vxor.u32 %v2324, 2147483648
    %v2329 = vxor.u32 %v2325, 2147483648
    %v2330 = vmul.f32 %v2327, 1.442695
    %v2331 = vpow.pop %v2330
    %v2332 = vmul.f32 %v2328, 1.442695
    %v2333 = vpow.pop %v2332
    %v2334 = vmul.f32 %v2329, 1.442695
    %v2335 = vpow.pop %v2334
    %v2336 = vadd.f32 %v2331, 1.0
    %v2337 = vadd.f32 %v2333, 1.0
    %v2338 = vadd.f32 %v2335, 1.0
    %v2339 = vrcp.pop %v2336
    %v2340 = vmul.f32 1.0, %v2339
    %v2341 = vrcp.pop %v2337
    %v2342 = vmul.f32 1.0, %v2341
    %v2343 = vrcp.pop %v2338
    %v2344 = vmul.f32 1.0, %v2343
    %v2345 = vtanh.pop %v2326
    %v2346 = vmul.f32 %v2342, %v2044
    %v2347 = vmul.f32 %v2340, %v2345
    %v2348 = vadd.f32 %v2346, %v2347
    %v2349 = vtanh.pop %v2348
    %v2350 = vmul.f32 %v2344, %v2349
    %v2351 = vpack.c.bf16 %v2350, %v2350
    %2352 = vmatprep.subr.bf16.mxu0 %v456
    %2353 = vmatpush1.bf16.msra.mxu0 %v455
    %2354 = vmatprep.subr.bf16.mxu0 %v452
    %2355 = vmatpush1.bf16.msra.mxu0 %v451
    %2356 = vmatprep.subr.bf16.mxu0 %v448
    %2357 = vmatpush1.bf16.msra.mxu0 %v447
    %2358 = vmatprep.subr.bf16.mxu0 %v444
    %2359 = vmatpush1.bf16.msra.mxu0 %v443
    %2360 = vmatprep.subr.bf16.mxu0 %v440
    %2361 = vmatpush1.bf16.msra.mxu0 %v439
    %2362 = vmatprep.subr.bf16.mxu0 %v436
    %2363 = vmatpush1.bf16.msra.mxu0 %v435
    %2364 = vmatprep.subr.bf16.mxu0 %v432
    %2365 = vmatpush1.bf16.msra.mxu0 %v431
    %2366 = vmatprep.subr.bf16.mxu0 %v428
    %2367 = vmatpush1.bf16.msra.mxu0 %v427
    %2368 = vmatprep.subr.bf16.mxu0 0
    %2369 = vmatpush2.bf16.msra.mxu0 0
    %2370 = vmatprep.subr.bf16.mxu0 0
    %2371 = vmatpush2.bf16.msra.mxu0 0
    %2372 = vmatprep.subr.bf16.mxu0 0
    %2373 = vmatpush2.bf16.msra.mxu0 0
    %2374 = vmatprep.subr.bf16.mxu0 0
    %2375 = vmatpush2.bf16.msra.mxu0 0
    %2376 = vmatprep.subr.bf16.mxu0 0
    %2377 = vmatpush2.bf16.msra.mxu0 0
    %2378 = vmatprep.subr.bf16.mxu0 0
    %2379 = vmatpush2.bf16.msra.mxu0 0
    %2380 = vmatprep.subr.bf16.mxu0 0
    %2381 = vmatpush2.bf16.msra.mxu0 0
    %2382 = vmatprep.subr.bf16.mxu0 0
    %2383 = vmatpush2.bf16.msra.mxu0 0
    %2384 = vmatprep.mubr.bf16.mxu0 0
    %2385 = vmatmul.mubr.bf16.gmra.mxu0 %v2351
    %v2386 = vpop.f32.mrf.mxu0
    %v2387 = vadd.f32 0.0, %v2386
    %v2388 = vpop.f32.mrf.mxu0
    %v2389 = vadd.f32 0.0, %v2388
    %v2390 = vpop.f32.mrf.mxu0
    %v2391 = vpop.f32.mrf.mxu0
    %2392 = vdwg.mxu0
    %2393 = vmatprep.subr.bf16.mxu0 %v458
    %2394 = vmatpush1.bf16.msra.mxu0 %v457
    %2395 = vmatprep.subr.bf16.mxu0 %v454
    %2396 = vmatpush1.bf16.msra.mxu0 %v453
    %2397 = vmatprep.subr.bf16.mxu0 %v450
    %2398 = vmatpush1.bf16.msra.mxu0 %v449
    %2399 = vmatprep.subr.bf16.mxu0 %v446
    %2400 = vmatpush1.bf16.msra.mxu0 %v445
    %2401 = vmatprep.subr.bf16.mxu0 %v442
    %2402 = vmatpush1.bf16.msra.mxu0 %v441
    %2403 = vmatprep.subr.bf16.mxu0 %v438
    %2404 = vmatpush1.bf16.msra.mxu0 %v437
    %2405 = vmatprep.subr.bf16.mxu0 %v434
    %2406 = vmatpush1.bf16.msra.mxu0 %v433
    %2407 = vmatprep.subr.bf16.mxu0 %v430
    %2408 = vmatpush1.bf16.msra.mxu0 %v429
    %2409 = vmatprep.subr.bf16.mxu0 0
    %2410 = vmatpush2.bf16.msra.mxu0 0
    %2411 = vmatprep.subr.bf16.mxu0 0
    %2412 = vmatpush2.bf16.msra.mxu0 0
    %2413 = vmatprep.subr.bf16.mxu0 0
    %2414 = vmatpush2.bf16.msra.mxu0 0
    %2415 = vmatprep.subr.bf16.mxu0 0
    %2416 = vmatpush2.bf16.msra.mxu0 0
    %2417 = vmatprep.subr.bf16.mxu0 0
    %2418 = vmatpush2.bf16.msra.mxu0 0
    %2419 = vmatprep.subr.bf16.mxu0 0
    %2420 = vmatpush2.bf16.msra.mxu0 0
    %2421 = vmatprep.subr.bf16.mxu0 0
    %2422 = vmatpush2.bf16.msra.mxu0 0
    %2423 = vmatprep.subr.bf16.mxu0 0
    %2424 = vmatpush2.bf16.msra.mxu0 0
    %2425 = vmatprep.mubr.bf16.mxu0 0
    %2426 = vmatmul.mubr.bf16.gmra.mxu0 %v2351
    %v2427 = vpop.f32.mrf.mxu0
    %v2428 = vadd.f32 0.0, %v2427
    %v2429 = vpop.f32.mrf.mxu0
    %v2430 = vadd.f32 0.0, %v2429
    %v2431 = vpop.f32.mrf.mxu0
    %v2432 = vpop.f32.mrf.mxu0
    %2433 = vdwg.mxu0
    %2434 = vmatprep.subr.bf16.mxu0 %v698
    %2435 = vmatpush1.bf16.msra.mxu0 %v697
    %2436 = vmatprep.subr.bf16.mxu0 %v694
    %2437 = vmatpush1.bf16.msra.mxu0 %v693
    %2438 = vmatprep.subr.bf16.mxu0 %v690
    %2439 = vmatpush1.bf16.msra.mxu0 %v689
    %2440 = vmatprep.subr.bf16.mxu0 %v686
    %2441 = vmatpush1.bf16.msra.mxu0 %v685
    %2442 = vmatprep.subr.bf16.mxu0 %v682
    %2443 = vmatpush1.bf16.msra.mxu0 %v681
    %2444 = vmatprep.subr.bf16.mxu0 %v678
    %2445 = vmatpush1.bf16.msra.mxu0 %v677
    %2446 = vmatprep.subr.bf16.mxu0 %v674
    %2447 = vmatpush1.bf16.msra.mxu0 %v673
    %2448 = vmatprep.subr.bf16.mxu0 %v670
    %2449 = vmatpush1.bf16.msra.mxu0 %v669
    %2450 = vmatprep.subr.bf16.mxu0 0
    %2451 = vmatpush2.bf16.msra.mxu0 0
    %2452 = vmatprep.subr.bf16.mxu0 0
    %2453 = vmatpush2.bf16.msra.mxu0 0
    %2454 = vmatprep.subr.bf16.mxu0 0
    %2455 = vmatpush2.bf16.msra.mxu0 0
    %2456 = vmatprep.subr.bf16.mxu0 0
    %2457 = vmatpush2.bf16.msra.mxu0 0
    %2458 = vmatprep.subr.bf16.mxu0 0
    %2459 = vmatpush2.bf16.msra.mxu0 0
    %2460 = vmatprep.subr.bf16.mxu0 0
    %2461 = vmatpush2.bf16.msra.mxu0 0
    %2462 = vmatprep.subr.bf16.mxu0 0
    %2463 = vmatpush2.bf16.msra.mxu0 0
    %2464 = vmatprep.subr.bf16.mxu0 0
    %2465 = vmatpush2.bf16.msra.mxu0 0
    %2466 = vmatprep.mubr.bf16.mxu0 0
    %2467 = vmatmul.mubr.bf16.gmra.mxu0 %v2240
    %v2468 = vpop.f32.mrf.mxu0
    %v2469 = vadd.f32 0.0, %v2468
    %v2470 = vpop.f32.mrf.mxu0
    %v2471 = vadd.f32 0.0, %v2470
    %v2472 = vpop.f32.mrf.mxu0
    %v2473 = vpop.f32.mrf.mxu0
    %2474 = vdwg.mxu0
    %2475 = vmatprep.subr.bf16.mxu0 %v700
    %2476 = vmatpush1.bf16.msra.mxu0 %v699
    %2477 = vmatprep.subr.bf16.mxu0 %v696
    %2478 = vmatpush1.bf16.msra.mxu0 %v695
    %2479 = vmatprep.subr.bf16.mxu0 %v692
    %2480 = vmatpush1.bf16.msra.mxu0 %v691
    %2481 = vmatprep.subr.bf16.mxu0 %v688
    %2482 = vmatpush1.bf16.msra.mxu0 %v687
    %2483 = vmatprep.subr.bf16.mxu0 %v684
    %2484 = vmatpush1.bf16.msra.mxu0 %v683
    %2485 = vmatprep.subr.bf16.mxu0 %v680
    %2486 = vmatpush1.bf16.msra.mxu0 %v679
    %2487 = vmatprep.subr.bf16.mxu0 %v676
    %2488 = vmatpush1.bf16.msra.mxu0 %v675
    %2489 = vmatprep.subr.bf16.mxu0 %v672
    %2490 = vmatpush1.bf16.msra.mxu0 %v671
    %2491 = vmatprep.subr.bf16.mxu0 0
    %2492 = vmatpush2.bf16.msra.mxu0 0
    %2493 = vmatprep.subr.bf16.mxu0 0
    %2494 = vmatpush2.bf16.msra.mxu0 0
    %2495 = vmatprep.subr.bf16.mxu0 0
    %2496 = vmatpush2.bf16.msra.mxu0 0
    %2497 = vmatprep.subr.bf16.mxu0 0
    %2498 = vmatpush2.bf16.msra.mxu0 0
    %2499 = vmatprep.subr.bf16.mxu0 0
    %2500 = vmatpush2.bf16.msra.mxu0 0
    %2501 = vmatprep.subr.bf16.mxu0 0
    %2502 = vmatpush2.bf16.msra.mxu0 0
    %2503 = vmatprep.subr.bf16.mxu0 0
    %2504 = vmatpush2.bf16.msra.mxu0 0
    %2505 = vmatprep.subr.bf16.mxu0 0
    %2506 = vmatpush2.bf16.msra.mxu0 0
    %2507 = vmatprep.mubr.bf16.mxu0 0
    %2508 = vmatmul.mubr.bf16.gmra.mxu0 %v2240
    %v2509 = vpop.f32.mrf.mxu0
    %v2510 = vadd.f32 0.0, %v2509
    %v2511 = vpop.f32.mrf.mxu0
    %v2512 = vadd.f32 0.0, %v2511
    %v2513 = vpop.f32.mrf.mxu0
    %v2514 = vpop.f32.mrf.mxu0
    %2515 = vdwg.mxu0
    %v2516 = vadd.f32 %v319, %v2469
    %v2517 = vadd.f32 %v320, %v2471
    %v2518 = vadd.f32 %v321, %v2510
    %v2519 = vadd.f32 %v322, %v2512
    %v2520 = vxor.u32 %v2516, 2147483648
    %v2521 = vxor.u32 %v2517, 2147483648
    %v2522 = vxor.u32 %v2518, 2147483648
    %v2523 = vmul.f32 %v2520, 1.442695
    %v2524 = vpow.pop %v2523
    %v2525 = vmul.f32 %v2521, 1.442695
    %v2526 = vpow.pop %v2525
    %v2527 = vmul.f32 %v2522, 1.442695
    %v2528 = vpow.pop %v2527
    %v2529 = vadd.f32 %v2524, 1.0
    %v2530 = vadd.f32 %v2526, 1.0
    %v2531 = vadd.f32 %v2528, 1.0
    %v2532 = vrcp.pop %v2529
    %v2533 = vmul.f32 1.0, %v2532
    %v2534 = vrcp.pop %v2530
    %v2535 = vmul.f32 1.0, %v2534
    %v2536 = vrcp.pop %v2531
    %v2537 = vmul.f32 1.0, %v2536
    %v2538 = vtanh.pop %v2519
    %v2539 = vmul.f32 %v2535, %v2237
    %v2540 = vmul.f32 %v2533, %v2538
    %v2541 = vadd.f32 %v2539, %v2540
    %v2542 = vtanh.pop %v2541
    %v2543 = vmul.f32 %v2537, %v2542
    %v2544 = vpack.c.bf16 %v2543, %v2543
    %2545 = vmatprep.subr.bf16.mxu0 %v969
    %2546 = vmatpush1.bf16.msra.mxu0 %v968
    %2547 = vmatprep.subr.bf16.mxu0 %v965
    %2548 = vmatpush1.bf16.msra.mxu0 %v964
    %2549 = vmatprep.subr.bf16.mxu0 %v961
    %2550 = vmatpush1.bf16.msra.mxu0 %v960
    %2551 = vmatprep.subr.bf16.mxu0 %v957
    %2552 = vmatpush1.bf16.msra.mxu0 %v956
    %2553 = vmatprep.subr.bf16.mxu0 %v953
    %2554 = vmatpush1.bf16.msra.mxu0 %v952
    %2555 = vmatprep.subr.bf16.mxu0 %v949
    %2556 = vmatpush1.bf16.msra.mxu0 %v948
    %2557 = vmatprep.subr.bf16.mxu0 %v945
    %2558 = vmatpush1.bf16.msra.mxu0 %v944
    %2559 = vmatprep.subr.bf16.mxu0 %v941
    %2560 = vmatpush1.bf16.msra.mxu0 %v940
    %2561 = vmatprep.subr.bf16.mxu0 0
    %2562 = vmatpush2.bf16.msra.mxu0 0
    %2563 = vmatprep.subr.bf16.mxu0 0
    %2564 = vmatpush2.bf16.msra.mxu0 0
    %2565 = vmatprep.subr.bf16.mxu0 0
    %2566 = vmatpush2.bf16.msra.mxu0 0
    %2567 = vmatprep.subr.bf16.mxu0 0
    %2568 = vmatpush2.bf16.msra.mxu0 0
    %2569 = vmatprep.subr.bf16.mxu0 0
    %2570 = vmatpush2.bf16.msra.mxu0 0
    %2571 = vmatprep.subr.bf16.mxu0 0
    %2572 = vmatpush2.bf16.msra.mxu0 0
    %2573 = vmatprep.subr.bf16.mxu0 0
    %2574 = vmatpush2.bf16.msra.mxu0 0
    %2575 = vmatprep.subr.bf16.mxu0 0
    %2576 = vmatpush2.bf16.msra.mxu0 0
    %2577 = vmatprep.mubr.bf16.mxu0 0
    %2578 = vmatmul.mubr.bf16.gmra.mxu0 %v2544
    %v2579 = vpop.f32.mrf.mxu0
    %v2580 = vadd.f32 %v2387, %v2579
    %v2581 = vpop.f32.mrf.mxu0
    %v2582 = vadd.f32 %v2389, %v2581
    %v2583 = vpop.f32.mrf.mxu0
    %v2584 = vpop.f32.mrf.mxu0
    %2585 = vdwg.mxu0
    %2586 = vmatprep.subr.bf16.mxu0 %v971
    %2587 = vmatpush1.bf16.msra.mxu0 %v970
    %2588 = vmatprep.subr.bf16.mxu0 %v967
    %2589 = vmatpush1.bf16.msra.mxu0 %v966
    %2590 = vmatprep.subr.bf16.mxu0 %v963
    %2591 = vmatpush1.bf16.msra.mxu0 %v962
    %2592 = vmatprep.subr.bf16.mxu0 %v959
    %2593 = vmatpush1.bf16.msra.mxu0 %v958
    %2594 = vmatprep.subr.bf16.mxu0 %v955
    %2595 = vmatpush1.bf16.msra.mxu0 %v954
    %2596 = vmatprep.subr.bf16.mxu0 %v951
    %2597 = vmatpush1.bf16.msra.mxu0 %v950
    %2598 = vmatprep.subr.bf16.mxu0 %v947
    %2599 = vmatpush1.bf16.msra.mxu0 %v946
    %2600 = vmatprep.subr.bf16.mxu0 %v943
    %2601 = vmatpush1.bf16.msra.mxu0 %v942
    %2602 = vmatprep.subr.bf16.mxu0 0
    %2603 = vmatpush2.bf16.msra.mxu0 0
    %2604 = vmatprep.subr.bf16.mxu0 0
    %2605 = vmatpush2.bf16.msra.mxu0 0
    %2606 = vmatprep.subr.bf16.mxu0 0
    %2607 = vmatpush2.bf16.msra.mxu0 0
    %2608 = vmatprep.subr.bf16.mxu0 0
    %2609 = vmatpush2.bf16.msra.mxu0 0
    %2610 = vmatprep.subr.bf16.mxu0 0
    %2611 = vmatpush2.bf16.msra.mxu0 0
    %2612 = vmatprep.subr.bf16.mxu0 0
    %2613 = vmatpush2.bf16.msra.mxu0 0
    %2614 = vmatprep.subr.bf16.mxu0 0
    %2615 = vmatpush2.bf16.msra.mxu0 0
    %2616 = vmatprep.subr.bf16.mxu0 0
    %2617 = vmatpush2.bf16.msra.mxu0 0
    %2618 = vmatprep.mubr.bf16.mxu0 0
    %2619 = vmatmul.mubr.bf16.gmra.mxu0 %v2544
    %v2620 = vpop.f32.mrf.mxu0
    %v2621 = vadd.f32 %v2428, %v2620
    %v2622 = vpop.f32.mrf.mxu0
    %v2623 = vadd.f32 %v2430, %v2622
    %v2624 = vpop.f32.mrf.mxu0
    %v2625 = vpop.f32.mrf.mxu0
    %2626 = vdwg.mxu0
    %v2627 = vadd.f32 %v2580, %v1090
    %v2628 = vadd.f32 %v2582, %v1094
    %v2629 = vadd.f32 %v2621, %v1098
    %v2630 = vadd.f32 %v2623, %v1102
    %v2631 = vxor.u32 %v2627, 2147483648
    %v2632 = vxor.u32 %v2628, 2147483648
    %v2633 = vxor.u32 %v2629, 2147483648
    %v2634 = vmul.f32 %v2631, 1.442695
    %v2635 = vpow.pop %v2634
    %v2636 = vmul.f32 %v2632, 1.442695
    %v2637 = vpow.pop %v2636
    %v2638 = vmul.f32 %v2633, 1.442695
    %v2639 = vpow.pop %v2638
    %v2640 = vadd.f32 %v2635, 1.0
    %v2641 = vadd.f32 %v2637, 1.0
    %v2642 = vadd.f32 %v2639, 1.0
    %v2643 = vrcp.pop %v2640
    %v2644 = vmul.f32 1.0, %v2643
    %v2645 = vrcp.pop %v2641
    %v2646 = vmul.f32 1.0, %v2645
    %v2647 = vrcp.pop %v2642
    %v2648 = vmul.f32 1.0, %v2647
    %v2649 = vtanh.pop %v2630
    %v2650 = vmul.f32 %v2646, %v2348
    %v2651 = vmul.f32 %v2644, %v2649
    %v2652 = vadd.f32 %v2650, %v2651
    %v2653 = vtanh.pop %v2652
    %v2654 = vmul.f32 %v2648, %v2653
    %v2655 = vpack.c.bf16 %v2654, %v2654
    %2656 = vmatprep.subr.bf16.mxu0 %v456
    %2657 = vmatpush1.bf16.msra.mxu0 %v455
    %2658 = vmatprep.subr.bf16.mxu0 %v452
    %2659 = vmatpush1.bf16.msra.mxu0 %v451
    %2660 = vmatprep.subr.bf16.mxu0 %v448
    %2661 = vmatpush1.bf16.msra.mxu0 %v447
    %2662 = vmatprep.subr.bf16.mxu0 %v444
    %2663 = vmatpush1.bf16.msra.mxu0 %v443
    %2664 = vmatprep.subr.bf16.mxu0 %v440
    %2665 = vmatpush1.bf16.msra.mxu0 %v439
    %2666 = vmatprep.subr.bf16.mxu0 %v436
    %2667 = vmatpush1.bf16.msra.mxu0 %v435
    %2668 = vmatprep.subr.bf16.mxu0 %v432
    %2669 = vmatpush1.bf16.msra.mxu0 %v431
    %2670 = vmatprep.subr.bf16.mxu0 %v428
    %2671 = vmatpush1.bf16.msra.mxu0 %v427
    %2672 = vmatprep.subr.bf16.mxu0 0
    %2673 = vmatpush2.bf16.msra.mxu0 0
    %2674 = vmatprep.subr.bf16.mxu0 0
    %2675 = vmatpush2.bf16.msra.mxu0 0
    %2676 = vmatprep.subr.bf16.mxu0 0
    %2677 = vmatpush2.bf16.msra.mxu0 0
    %2678 = vmatprep.subr.bf16.mxu0 0
    %2679 = vmatpush2.bf16.msra.mxu0 0
    %2680 = vmatprep.subr.bf16.mxu0 0
    %2681 = vmatpush2.bf16.msra.mxu0 0
    %2682 = vmatprep.subr.bf16.mxu0 0
    %2683 = vmatpush2.bf16.msra.mxu0 0
    %2684 = vmatprep.subr.bf16.mxu0 0
    %2685 = vmatpush2.bf16.msra.mxu0 0
    %2686 = vmatprep.subr.bf16.mxu0 0
    %2687 = vmatpush2.bf16.msra.mxu0 0
    %2688 = vmatprep.mubr.bf16.mxu0 0
    %2689 = vmatmul.mubr.bf16.gmra.mxu0 %v2655
    %v2690 = vpop.f32.mrf.mxu0
    %v2691 = vadd.f32 0.0, %v2690
    %v2692 = vpop.f32.mrf.mxu0
    %v2693 = vadd.f32 0.0, %v2692
    %v2694 = vpop.f32.mrf.mxu0
    %v2695 = vpop.f32.mrf.mxu0
    %2696 = vdwg.mxu0
    %2697 = vmatprep.subr.bf16.mxu0 %v458
    %2698 = vmatpush1.bf16.msra.mxu0 %v457
    %2699 = vmatprep.subr.bf16.mxu0 %v454
    %2700 = vmatpush1.bf16.msra.mxu0 %v453
    %2701 = vmatprep.subr.bf16.mxu0 %v450
    %2702 = vmatpush1.bf16.msra.mxu0 %v449
    %2703 = vmatprep.subr.bf16.mxu0 %v446
    %2704 = vmatpush1.bf16.msra.mxu0 %v445
    %2705 = vmatprep.subr.bf16.mxu0 %v442
    %2706 = vmatpush1.bf16.msra.mxu0 %v441
    %2707 = vmatprep.subr.bf16.mxu0 %v438
    %2708 = vmatpush1.bf16.msra.mxu0 %v437
    %2709 = vmatprep.subr.bf16.mxu0 %v434
    %2710 = vmatpush1.bf16.msra.mxu0 %v433
    %2711 = vmatprep.subr.bf16.mxu0 %v430
    %2712 = vmatpush1.bf16.msra.mxu0 %v429
    %2713 = vmatprep.subr.bf16.mxu0 0
    %2714 = vmatpush2.bf16.msra.mxu0 0
    %2715 = vmatprep.subr.bf16.mxu0 0
    %2716 = vmatpush2.bf16.msra.mxu0 0
    %2717 = vmatprep.subr.bf16.mxu0 0
    %2718 = vmatpush2.bf16.msra.mxu0 0
    %2719 = vmatprep.subr.bf16.mxu0 0
    %2720 = vmatpush2.bf16.msra.mxu0 0
    %2721 = vmatprep.subr.bf16.mxu0 0
    %2722 = vmatpush2.bf16.msra.mxu0 0
    %2723 = vmatprep.subr.bf16.mxu0 0
    %2724 = vmatpush2.bf16.msra.mxu0 0
    %2725 = vmatprep.subr.bf16.mxu0 0
    %2726 = vmatpush2.bf16.msra.mxu0 0
    %2727 = vmatprep.subr.bf16.mxu0 0
    %2728 = vmatpush2.bf16.msra.mxu0 0
    %2729 = vmatprep.mubr.bf16.mxu0 0
    %2730 = vmatmul.mubr.bf16.gmra.mxu0 %v2655
    %v2731 = vpop.f32.mrf.mxu0
    %v2732 = vadd.f32 0.0, %v2731
    %v2733 = vpop.f32.mrf.mxu0
    %v2734 = vadd.f32 0.0, %v2733
    %v2735 = vpop.f32.mrf.mxu0
    %v2736 = vpop.f32.mrf.mxu0
    %2737 = vdwg.mxu0
    %2738 = vmatprep.subr.bf16.mxu0 %v698
    %2739 = vmatpush1.bf16.msra.mxu0 %v697
    %2740 = vmatprep.subr.bf16.mxu0 %v694
    %2741 = vmatpush1.bf16.msra.mxu0 %v693
    %2742 = vmatprep.subr.bf16.mxu0 %v690
    %2743 = vmatpush1.bf16.msra.mxu0 %v689
    %2744 = vmatprep.subr.bf16.mxu0 %v686
    %2745 = vmatpush1.bf16.msra.mxu0 %v685
    %2746 = vmatprep.subr.bf16.mxu0 %v682
    %2747 = vmatpush1.bf16.msra.mxu0 %v681
    %2748 = vmatprep.subr.bf16.mxu0 %v678
    %2749 = vmatpush1.bf16.msra.mxu0 %v677
    %2750 = vmatprep.subr.bf16.mxu0 %v674
    %2751 = vmatpush1.bf16.msra.mxu0 %v673
    %2752 = vmatprep.subr.bf16.mxu0 %v670
    %2753 = vmatpush1.bf16.msra.mxu0 %v669
    %2754 = vmatprep.subr.bf16.mxu0 0
    %2755 = vmatpush2.bf16.msra.mxu0 0
    %2756 = vmatprep.subr.bf16.mxu0 0
    %2757 = vmatpush2.bf16.msra.mxu0 0
    %2758 = vmatprep.subr.bf16.mxu0 0
    %2759 = vmatpush2.bf16.msra.mxu0 0
    %2760 = vmatprep.subr.bf16.mxu0 0
    %2761 = vmatpush2.bf16.msra.mxu0 0
    %2762 = vmatprep.subr.bf16.mxu0 0
    %2763 = vmatpush2.bf16.msra.mxu0 0
    %2764 = vmatprep.subr.bf16.mxu0 0
    %2765 = vmatpush2.bf16.msra.mxu0 0
    %2766 = vmatprep.subr.bf16.mxu0 0
    %2767 = vmatpush2.bf16.msra.mxu0 0
    %2768 = vmatprep.subr.bf16.mxu0 0
    %2769 = vmatpush2.bf16.msra.mxu0 0
    %2770 = vmatprep.mubr.bf16.mxu0 0
    %2771 = vmatmul.mubr.bf16.gmra.mxu0 %v2544
    %v2772 = vpop.f32.mrf.mxu0
    %v2773 = vadd.f32 0.0, %v2772
    %v2774 = vpop.f32.mrf.mxu0
    %v2775 = vadd.f32 0.0, %v2774
    %v2776 = vpop.f32.mrf.mxu0
    %v2777 = vpop.f32.mrf.mxu0
    %2778 = vdwg.mxu0
    %2779 = vmatprep.subr.bf16.mxu0 %v700
    %2780 = vmatpush1.bf16.msra.mxu0 %v699
    %2781 = vmatprep.subr.bf16.mxu0 %v696
    %2782 = vmatpush1.bf16.msra.mxu0 %v695
    %2783 = vmatprep.subr.bf16.mxu0 %v692
    %2784 = vmatpush1.bf16.msra.mxu0 %v691
    %2785 = vmatprep.subr.bf16.mxu0 %v688
    %2786 = vmatpush1.bf16.msra.mxu0 %v687
    %2787 = vmatprep.subr.bf16.mxu0 %v684
    %2788 = vmatpush1.bf16.msra.mxu0 %v683
    %2789 = vmatprep.subr.bf16.mxu0 %v680
    %2790 = vmatpush1.bf16.msra.mxu0 %v679
    %2791 = vmatprep.subr.bf16.mxu0 %v676
    %2792 = vmatpush1.bf16.msra.mxu0 %v675
    %2793 = vmatprep.subr.bf16.mxu0 %v672
    %2794 = vmatpush1.bf16.msra.mxu0 %v671
    %2795 = vmatprep.subr.bf16.mxu0 0
    %2796 = vmatpush2.bf16.msra.mxu0 0
    %2797 = vmatprep.subr.bf16.mxu0 0
    %2798 = vmatpush2.bf16.msra.mxu0 0
    %2799 = vmatprep.subr.bf16.mxu0 0
    %2800 = vmatpush2.bf16.msra.mxu0 0
    %2801 = vmatprep.subr.bf16.mxu0 0
    %2802 = vmatpush2.bf16.msra.mxu0 0
    %2803 = vmatprep.subr.bf16.mxu0 0
    %2804 = vmatpush2.bf16.msra.mxu0 0
    %2805 = vmatprep.subr.bf16.mxu0 0
    %2806 = vmatpush2.bf16.msra.mxu0 0
    %2807 = vmatprep.subr.bf16.mxu0 0
    %2808 = vmatpush2.bf16.msra.mxu0 0
    %2809 = vmatprep.subr.bf16.mxu0 0
    %2810 = vmatpush2.bf16.msra.mxu0 0
    %2811 = vmatprep.mubr.bf16.mxu0 0
    %2812 = vmatmul.mubr.bf16.gmra.mxu0 %v2544
    %v2813 = vpop.f32.mrf.mxu0
    %v2814 = vadd.f32 0.0, %v2813
    %v2815 = vpop.f32.mrf.mxu0
    %v2816 = vadd.f32 0.0, %v2815
    %v2817 = vpop.f32.mrf.mxu0
    %v2818 = vpop.f32.mrf.mxu0
    %2819 = vdwg.mxu0
    %v2820 = vadd.f32 %v323, %v2773
    %v2821 = vadd.f32 %v324, %v2775
    %v2822 = vadd.f32 %v325, %v2814
    %v2823 = vadd.f32 %v326, %v2816
    %v2824 = vxor.u32 %v2820, 2147483648
    %v2825 = vxor.u32 %v2821, 2147483648
    %v2826 = vxor.u32 %v2822, 2147483648
    %v2827 = vmul.f32 %v2824, 1.442695
    %v2828 = vpow.pop %v2827
    %v2829 = vmul.f32 %v2825, 1.442695
    %v2830 = vpow.pop %v2829
    %v2831 = vmul.f32 %v2826, 1.442695
    %v2832 = vpow.pop %v2831
    %v2833 = vadd.f32 %v2828, 1.0
    %v2834 = vadd.f32 %v2830, 1.0
    %v2835 = vadd.f32 %v2832, 1.0
    %v2836 = vrcp.pop %v2833
    %v2837 = vmul.f32 1.0, %v2836
    %v2838 = vrcp.pop %v2834
    %v2839 = vmul.f32 1.0, %v2838
    %v2840 = vrcp.pop %v2835
    %v2841 = vmul.f32 1.0, %v2840
    %v2842 = vtanh.pop %v2823
    %v2843 = vmul.f32 %v2839, %v2541
    %v2844 = vmul.f32 %v2837, %v2842
    %v2845 = vadd.f32 %v2843, %v2844
    %v2846 = vtanh.pop %v2845
    %v2847 = vmul.f32 %v2841, %v2846
    %v2848 = vpack.c.bf16 %v2847, %v2847
    %2849 = vmatprep.subr.bf16.mxu0 %v969
    %2850 = vmatpush1.bf16.msra.mxu0 %v968
    %2851 = vmatprep.subr.bf16.mxu0 %v965
    %2852 = vmatpush1.bf16.msra.mxu0 %v964
    %2853 = vmatprep.subr.bf16.mxu0 %v961
    %2854 = vmatpush1.bf16.msra.mxu0 %v960
    %2855 = vmatprep.subr.bf16.mxu0 %v957
    %2856 = vmatpush1.bf16.msra.mxu0 %v956
    %2857 = vmatprep.subr.bf16.mxu0 %v953
    %2858 = vmatpush1.bf16.msra.mxu0 %v952
    %2859 = vmatprep.subr.bf16.mxu0 %v949
    %2860 = vmatpush1.bf16.msra.mxu0 %v948
    %2861 = vmatprep.subr.bf16.mxu0 %v945
    %2862 = vmatpush1.bf16.msra.mxu0 %v944
    %2863 = vmatprep.subr.bf16.mxu0 %v941
    %2864 = vmatpush1.bf16.msra.mxu0 %v940
    %2865 = vmatprep.subr.bf16.mxu0 0
    %2866 = vmatpush2.bf16.msra.mxu0 0
    %2867 = vmatprep.subr.bf16.mxu0 0
    %2868 = vmatpush2.bf16.msra.mxu0 0
    %2869 = vmatprep.subr.bf16.mxu0 0
    %2870 = vmatpush2.bf16.msra.mxu0 0
    %2871 = vmatprep.subr.bf16.mxu0 0
    %2872 = vmatpush2.bf16.msra.mxu0 0
    %2873 = vmatprep.subr.bf16.mxu0 0
    %2874 = vmatpush2.bf16.msra.mxu0 0
    %2875 = vmatprep.subr.bf16.mxu0 0
    %2876 = vmatpush2.bf16.msra.mxu0 0
    %2877 = vmatprep.subr.bf16.mxu0 0
    %2878 = vmatpush2.bf16.msra.mxu0 0
    %2879 = vmatprep.subr.bf16.mxu0 0
    %2880 = vmatpush2.bf16.msra.mxu0 0
    %2881 = vmatprep.mubr.bf16.mxu0 0
    %2882 = vmatmul.mubr.bf16.gmra.mxu0 %v2848
    %v2883 = vpop.f32.mrf.mxu0
    %v2884 = vadd.f32 %v2691, %v2883
    %v2885 = vpop.f32.mrf.mxu0
    %v2886 = vadd.f32 %v2693, %v2885
    %v2887 = vpop.f32.mrf.mxu0
    %v2888 = vpop.f32.mrf.mxu0
    %2889 = vdwg.mxu0
    %2890 = vmatprep.subr.bf16.mxu0 %v971
    %2891 = vmatpush1.bf16.msra.mxu0 %v970
    %2892 = vmatprep.subr.bf16.mxu0 %v967
    %2893 = vmatpush1.bf16.msra.mxu0 %v966
    %2894 = vmatprep.subr.bf16.mxu0 %v963
    %2895 = vmatpush1.bf16.msra.mxu0 %v962
    %2896 = vmatprep.subr.bf16.mxu0 %v959
    %2897 = vmatpush1.bf16.msra.mxu0 %v958
    %2898 = vmatprep.subr.bf16.mxu0 %v955
    %2899 = vmatpush1.bf16.msra.mxu0 %v954
    %2900 = vmatprep.subr.bf16.mxu0 %v951
    %2901 = vmatpush1.bf16.msra.mxu0 %v950
    %2902 = vmatprep.subr.bf16.mxu0 %v947
    %2903 = vmatpush1.bf16.msra.mxu0 %v946
    %2904 = vmatprep.subr.bf16.mxu0 %v943
    %2905 = vmatpush1.bf16.msra.mxu0 %v942
    %2906 = vmatprep.subr.bf16.mxu0 0
    %2907 = vmatpush2.bf16.msra.mxu0 0
    %2908 = vmatprep.subr.bf16.mxu0 0
    %2909 = vmatpush2.bf16.msra.mxu0 0
    %2910 = vmatprep.subr.bf16.mxu0 0
    %2911 = vmatpush2.bf16.msra.mxu0 0
    %2912 = vmatprep.subr.bf16.mxu0 0
    %2913 = vmatpush2.bf16.msra.mxu0 0
    %2914 = vmatprep.subr.bf16.mxu0 0
    %2915 = vmatpush2.bf16.msra.mxu0 0
    %2916 = vmatprep.subr.bf16.mxu0 0
    %2917 = vmatpush2.bf16.msra.mxu0 0
    %2918 = vmatprep.subr.bf16.mxu0 0
    %2919 = vmatpush2.bf16.msra.mxu0 0
    %2920 = vmatprep.subr.bf16.mxu0 0
    %2921 = vmatpush2.bf16.msra.mxu0 0
    %2922 = vmatprep.mubr.bf16.mxu0 0
    %2923 = vmatmul.mubr.bf16.gmra.mxu0 %v2848
    %v2924 = vpop.f32.mrf.mxu0
    %v2925 = vadd.f32 %v2732, %v2924
    %v2926 = vpop.f32.mrf.mxu0
    %v2927 = vadd.f32 %v2734, %v2926
    %v2928 = vpop.f32.mrf.mxu0
    %v2929 = vpop.f32.mrf.mxu0
    %2930 = vdwg.mxu0
    %v2931 = vadd.f32 %v2884, %v1090
    %v2932 = vadd.f32 %v2886, %v1094
    %v2933 = vadd.f32 %v2925, %v1098
    %v2934 = vadd.f32 %v2927, %v1102
    %v2935 = vxor.u32 %v2931, 2147483648
    %v2936 = vxor.u32 %v2932, 2147483648
    %v2937 = vxor.u32 %v2933, 2147483648
    %v2938 = vmul.f32 %v2935, 1.442695
    %v2939 = vpow.pop %v2938
    %v2940 = vmul.f32 %v2936, 1.442695
    %v2941 = vpow.pop %v2940
    %v2942 = vmul.f32 %v2937, 1.442695
    %v2943 = vpow.pop %v2942
    %v2944 = vadd.f32 %v2939, 1.0
    %v2945 = vadd.f32 %v2941, 1.0
    %v2946 = vadd.f32 %v2943, 1.0
    %v2947 = vrcp.pop %v2944
    %v2948 = vmul.f32 1.0, %v2947
    %v2949 = vrcp.pop %v2945
    %v2950 = vmul.f32 1.0, %v2949
    %v2951 = vrcp.pop %v2946
    %v2952 = vmul.f32 1.0, %v2951
    %v2953 = vtanh.pop %v2934
    %v2954 = vmul.f32 %v2950, %v2652
    %v2955 = vmul.f32 %v2948, %v2953
    %v2956 = vadd.f32 %v2954, %v2955
    %v2957 = vtanh.pop %v2956
    %v2958 = vmul.f32 %v2952, %v2957
    %v2959 = vpack.c.bf16 %v2958, %v2958
    %2960 = vmatprep.subr.bf16.mxu0 %v456
    %2961 = vmatpush1.bf16.msra.mxu0 %v455
    %2962 = vmatprep.subr.bf16.mxu0 %v452
    %2963 = vmatpush1.bf16.msra.mxu0 %v451
    %2964 = vmatprep.subr.bf16.mxu0 %v448
    %2965 = vmatpush1.bf16.msra.mxu0 %v447
    %2966 = vmatprep.subr.bf16.mxu0 %v444
    %2967 = vmatpush1.bf16.msra.mxu0 %v443
    %2968 = vmatprep.subr.bf16.mxu0 %v440
    %2969 = vmatpush1.bf16.msra.mxu0 %v439
    %2970 = vmatprep.subr.bf16.mxu0 %v436
    %2971 = vmatpush1.bf16.msra.mxu0 %v435
    %2972 = vmatprep.subr.bf16.mxu0 %v432
    %2973 = vmatpush1.bf16.msra.mxu0 %v431
    %2974 = vmatprep.subr.bf16.mxu0 %v428
    %2975 = vmatpush1.bf16.msra.mxu0 %v427
    %2976 = vmatprep.subr.bf16.mxu0 0
    %2977 = vmatpush2.bf16.msra.mxu0 0
    %2978 = vmatprep.subr.bf16.mxu0 0
    %2979 = vmatpush2.bf16.msra.mxu0 0
    %2980 = vmatprep.subr.bf16.mxu0 0
    %2981 = vmatpush2.bf16.msra.mxu0 0
    %2982 = vmatprep.subr.bf16.mxu0 0
    %2983 = vmatpush2.bf16.msra.mxu0 0
    %2984 = vmatprep.subr.bf16.mxu0 0
    %2985 = vmatpush2.bf16.msra.mxu0 0
    %2986 = vmatprep.subr.bf16.mxu0 0
    %2987 = vmatpush2.bf16.msra.mxu0 0
    %2988 = vmatprep.subr.bf16.mxu0 0
    %2989 = vmatpush2.bf16.msra.mxu0 0
    %2990 = vmatprep.subr.bf16.mxu0 0
    %2991 = vmatpush2.bf16.msra.mxu0 0
    %2992 = vmatprep.mubr.bf16.mxu0 0
    %2993 = vmatmul.mubr.bf16.gmra.mxu0 %v2959
    %v2994 = vpop.f32.mrf.mxu0
    %v2995 = vadd.f32 0.0, %v2994
    %v2996 = vpop.f32.mrf.mxu0
    %v2997 = vadd.f32 0.0, %v2996
    %v2998 = vpop.f32.mrf.mxu0
    %v2999 = vpop.f32.mrf.mxu0
    %3000 = vdwg.mxu0
    %3001 = vmatprep.subr.bf16.mxu0 %v458
    %3002 = vmatpush1.bf16.msra.mxu0 %v457
    %3003 = vmatprep.subr.bf16.mxu0 %v454
    %3004 = vmatpush1.bf16.msra.mxu0 %v453
    %3005 = vmatprep.subr.bf16.mxu0 %v450
    %3006 = vmatpush1.bf16.msra.mxu0 %v449
    %3007 = vmatprep.subr.bf16.mxu0 %v446
    %3008 = vmatpush1.bf16.msra.mxu0 %v445
    %3009 = vmatprep.subr.bf16.mxu0 %v442
    %3010 = vmatpush1.bf16.msra.mxu0 %v441
    %3011 = vmatprep.subr.bf16.mxu0 %v438
    %3012 = vmatpush1.bf16.msra.mxu0 %v437
    %3013 = vmatprep.subr.bf16.mxu0 %v434
    %3014 = vmatpush1.bf16.msra.mxu0 %v433
    %3015 = vmatprep.subr.bf16.mxu0 %v430
    %3016 = vmatpush1.bf16.msra.mxu0 %v429
    %3017 = vmatprep.subr.bf16.mxu0 0
    %3018 = vmatpush2.bf16.msra.mxu0 0
    %3019 = vmatprep.subr.bf16.mxu0 0
    %3020 = vmatpush2.bf16.msra.mxu0 0
    %3021 = vmatprep.subr.bf16.mxu0 0
    %3022 = vmatpush2.bf16.msra.mxu0 0
    %3023 = vmatprep.subr.bf16.mxu0 0
    %3024 = vmatpush2.bf16.msra.mxu0 0
    %3025 = vmatprep.subr.bf16.mxu0 0
    %3026 = vmatpush2.bf16.msra.mxu0 0
    %3027 = vmatprep.subr.bf16.mxu0 0
    %3028 = vmatpush2.bf16.msra.mxu0 0
    %3029 = vmatprep.subr.bf16.mxu0 0
    %3030 = vmatpush2.bf16.msra.mxu0 0
    %3031 = vmatprep.subr.bf16.mxu0 0
    %3032 = vmatpush2.bf16.msra.mxu0 0
    %3033 = vmatprep.mubr.bf16.mxu0 0
    %3034 = vmatmul.mubr.bf16.gmra.mxu0 %v2959
    %v3035 = vpop.f32.mrf.mxu0
    %v3036 = vadd.f32 0.0, %v3035
    %v3037 = vpop.f32.mrf.mxu0
    %v3038 = vadd.f32 0.0, %v3037
    %v3039 = vpop.f32.mrf.mxu0
    %v3040 = vpop.f32.mrf.mxu0
    %3041 = vdwg.mxu0
    %3042 = vmatprep.subr.bf16.mxu0 %v698
    %3043 = vmatpush1.bf16.msra.mxu0 %v697
    %3044 = vmatprep.subr.bf16.mxu0 %v694
    %3045 = vmatpush1.bf16.msra.mxu0 %v693
    %3046 = vmatprep.subr.bf16.mxu0 %v690
    %3047 = vmatpush1.bf16.msra.mxu0 %v689
    %3048 = vmatprep.subr.bf16.mxu0 %v686
    %3049 = vmatpush1.bf16.msra.mxu0 %v685
    %3050 = vmatprep.subr.bf16.mxu0 %v682
    %3051 = vmatpush1.bf16.msra.mxu0 %v681
    %3052 = vmatprep.subr.bf16.mxu0 %v678
    %3053 = vmatpush1.bf16.msra.mxu0 %v677
    %3054 = vmatprep.subr.bf16.mxu0 %v674
    %3055 = vmatpush1.bf16.msra.mxu0 %v673
    %3056 = vmatprep.subr.bf16.mxu0 %v670
    %3057 = vmatpush1.bf16.msra.mxu0 %v669
    %3058 = vmatprep.subr.bf16.mxu0 0
    %3059 = vmatpush2.bf16.msra.mxu0 0
    %3060 = vmatprep.subr.bf16.mxu0 0
    %3061 = vmatpush2.bf16.msra.mxu0 0
    %3062 = vmatprep.subr.bf16.mxu0 0
    %3063 = vmatpush2.bf16.msra.mxu0 0
    %3064 = vmatprep.subr.bf16.mxu0 0
    %3065 = vmatpush2.bf16.msra.mxu0 0
    %3066 = vmatprep.subr.bf16.mxu0 0
    %3067 = vmatpush2.bf16.msra.mxu0 0
    %3068 = vmatprep.subr.bf16.mxu0 0
    %3069 = vmatpush2.bf16.msra.mxu0 0
    %3070 = vmatprep.subr.bf16.mxu0 0
    %3071 = vmatpush2.bf16.msra.mxu0 0
    %3072 = vmatprep.subr.bf16.mxu0 0
    %3073 = vmatpush2.bf16.msra.mxu0 0
    %3074 = vmatprep.mubr.bf16.mxu0 0
    %3075 = vmatmul.mubr.bf16.gmra.mxu0 %v2848
    %v3076 = vpop.f32.mrf.mxu0
    %v3077 = vadd.f32 0.0, %v3076
    %v3078 = vpop.f32.mrf.mxu0
    %v3079 = vadd.f32 0.0, %v3078
    %v3080 = vpop.f32.mrf.mxu0
    %v3081 = vpop.f32.mrf.mxu0
    %3082 = vdwg.mxu0
    %3083 = vmatprep.subr.bf16.mxu0 %v700
    %3084 = vmatpush1.bf16.msra.mxu0 %v699
    %3085 = vmatprep.subr.bf16.mxu0 %v696
    %3086 = vmatpush1.bf16.msra.mxu0 %v695
    %3087 = vmatprep.subr.bf16.mxu0 %v692
    %3088 = vmatpush1.bf16.msra.mxu0 %v691
    %3089 = vmatprep.subr.bf16.mxu0 %v688
    %3090 = vmatpush1.bf16.msra.mxu0 %v687
    %3091 = vmatprep.subr.bf16.mxu0 %v684
    %3092 = vmatpush1.bf16.msra.mxu0 %v683
    %3093 = vmatprep.subr.bf16.mxu0 %v680
    %3094 = vmatpush1.bf16.msra.mxu0 %v679
    %3095 = vmatprep.subr.bf16.mxu0 %v676
    %3096 = vmatpush1.bf16.msra.mxu0 %v675
    %3097 = vmatprep.subr.bf16.mxu0 %v672
    %3098 = vmatpush1.bf16.msra.mxu0 %v671
    %3099 = vmatprep.subr.bf16.mxu0 0
    %3100 = vmatpush2.bf16.msra.mxu0 0
    %3101 = vmatprep.subr.bf16.mxu0 0
    %3102 = vmatpush2.bf16.msra.mxu0 0
    %3103 = vmatprep.subr.bf16.mxu0 0
    %3104 = vmatpush2.bf16.msra.mxu0 0
    %3105 = vmatprep.subr.bf16.mxu0 0
    %3106 = vmatpush2.bf16.msra.mxu0 0
    %3107 = vmatprep.subr.bf16.mxu0 0
    %3108 = vmatpush2.bf16.msra.mxu0 0
    %3109 = vmatprep.subr.bf16.mxu0 0
    %3110 = vmatpush2.bf16.msra.mxu0 0
    %3111 = vmatprep.subr.bf16.mxu0 0
    %3112 = vmatpush2.bf16.msra.mxu0 0
    %3113 = vmatprep.subr.bf16.mxu0 0
    %3114 = vmatpush2.bf16.msra.mxu0 0
    %3115 = vmatprep.mubr.bf16.mxu0 0
    %3116 = vmatmul.mubr.bf16.gmra.mxu0 %v2848
    %v3117 = vpop.f32.mrf.mxu0
    %v3118 = vadd.f32 0.0, %v3117
    %v3119 = vpop.f32.mrf.mxu0
    %v3120 = vadd.f32 0.0, %v3119
    %v3121 = vpop.f32.mrf.mxu0
    %v3122 = vpop.f32.mrf.mxu0
    %3123 = vdwg.mxu0
    %v3124 = vadd.f32 %v327, %v3077
    %v3125 = vadd.f32 %v328, %v3079
    %v3126 = vadd.f32 %v329, %v3118
    %v3127 = vadd.f32 %v330, %v3120
    %v3128 = vxor.u32 %v3124, 2147483648
    %v3129 = vxor.u32 %v3125, 2147483648
    %v3130 = vxor.u32 %v3126, 2147483648
    %v3131 = vmul.f32 %v3128, 1.442695
    %v3132 = vpow.pop %v3131
    %v3133 = vmul.f32 %v3129, 1.442695
    %v3134 = vpow.pop %v3133
    %v3135 = vmul.f32 %v3130, 1.442695
    %v3136 = vpow.pop %v3135
    %v3137 = vadd.f32 %v3132, 1.0
    %v3138 = vadd.f32 %v3134, 1.0
    %v3139 = vadd.f32 %v3136, 1.0
    %v3140 = vrcp.pop %v3137
    %v3141 = vmul.f32 1.0, %v3140
    %v3142 = vrcp.pop %v3138
    %v3143 = vmul.f32 1.0, %v3142
    %v3144 = vrcp.pop %v3139
    %v3145 = vmul.f32 1.0, %v3144
    %v3146 = vtanh.pop %v3127
    %v3147 = vmul.f32 %v3143, %v2845
    %v3148 = vmul.f32 %v3141, %v3146
    %v3149 = vadd.f32 %v3147, %v3148
    %v3150 = vtanh.pop %v3149
    %v3151 = vmul.f32 %v3145, %v3150
    %v3152 = vpack.c.bf16 %v3151, %v3151
    %3153 = vmatprep.subr.bf16.mxu0 %v969
    %3154 = vmatpush1.bf16.msra.mxu0 %v968
    %3155 = vmatprep.subr.bf16.mxu0 %v965
    %3156 = vmatpush1.bf16.msra.mxu0 %v964
    %3157 = vmatprep.subr.bf16.mxu0 %v961
    %3158 = vmatpush1.bf16.msra.mxu0 %v960
    %3159 = vmatprep.subr.bf16.mxu0 %v957
    %3160 = vmatpush1.bf16.msra.mxu0 %v956
    %3161 = vmatprep.subr.bf16.mxu0 %v953
    %3162 = vmatpush1.bf16.msra.mxu0 %v952
    %3163 = vmatprep.subr.bf16.mxu0 %v949
    %3164 = vmatpush1.bf16.msra.mxu0 %v948
    %3165 = vmatprep.subr.bf16.mxu0 %v945
    %3166 = vmatpush1.bf16.msra.mxu0 %v944
    %3167 = vmatprep.subr.bf16.mxu0 %v941
    %3168 = vmatpush1.bf16.msra.mxu0 %v940
    %3169 = vmatprep.subr.bf16.mxu0 0
    %3170 = vmatpush2.bf16.msra.mxu0 0
    %3171 = vmatprep.subr.bf16.mxu0 0
    %3172 = vmatpush2.bf16.msra.mxu0 0
    %3173 = vmatprep.subr.bf16.mxu0 0
    %3174 = vmatpush2.bf16.msra.mxu0 0
    %3175 = vmatprep.subr.bf16.mxu0 0
    %3176 = vmatpush2.bf16.msra.mxu0 0
    %3177 = vmatprep.subr.bf16.mxu0 0
    %3178 = vmatpush2.bf16.msra.mxu0 0
    %3179 = vmatprep.subr.bf16.mxu0 0
    %3180 = vmatpush2.bf16.msra.mxu0 0
    %3181 = vmatprep.subr.bf16.mxu0 0
    %3182 = vmatpush2.bf16.msra.mxu0 0
    %3183 = vmatprep.subr.bf16.mxu0 0
    %3184 = vmatpush2.bf16.msra.mxu0 0
    %3185 = vmatprep.mubr.bf16.mxu0 0
    %3186 = vmatmul.mubr.bf16.gmra.mxu0 %v3152
    %v3187 = vpop.f32.mrf.mxu0
    %v3188 = vadd.f32 %v2995, %v3187
    %v3189 = vpop.f32.mrf.mxu0
    %v3190 = vadd.f32 %v2997, %v3189
    %v3191 = vpop.f32.mrf.mxu0
    %v3192 = vpop.f32.mrf.mxu0
    %3193 = vdwg.mxu0
    %3194 = vmatprep.subr.bf16.mxu0 %v971
    %3195 = vmatpush1.bf16.msra.mxu0 %v970
    %3196 = vmatprep.subr.bf16.mxu0 %v967
    %3197 = vmatpush1.bf16.msra.mxu0 %v966
    %3198 = vmatprep.subr.bf16.mxu0 %v963
    %3199 = vmatpush1.bf16.msra.mxu0 %v962
    %3200 = vmatprep.subr.bf16.mxu0 %v959
    %3201 = vmatpush1.bf16.msra.mxu0 %v958
    %3202 = vmatprep.subr.bf16.mxu0 %v955
    %3203 = vmatpush1.bf16.msra.mxu0 %v954
    %3204 = vmatprep.subr.bf16.mxu0 %v951
    %3205 = vmatpush1.bf16.msra.mxu0 %v950
    %3206 = vmatprep.subr.bf16.mxu0 %v947
    %3207 = vmatpush1.bf16.msra.mxu0 %v946
    %3208 = vmatprep.subr.bf16.mxu0 %v943
    %3209 = vmatpush1.bf16.msra.mxu0 %v942
    %3210 = vmatprep.subr.bf16.mxu0 0
    %3211 = vmatpush2.bf16.msra.mxu0 0
    %3212 = vmatprep.subr.bf16.mxu0 0
    %3213 = vmatpush2.bf16.msra.mxu0 0
    %3214 = vmatprep.subr.bf16.mxu0 0
    %3215 = vmatpush2.bf16.msra.mxu0 0
    %3216 = vmatprep.subr.bf16.mxu0 0
    %3217 = vmatpush2.bf16.msra.mxu0 0
    %3218 = vmatprep.subr.bf16.mxu0 0
    %3219 = vmatpush2.bf16.msra.mxu0 0
    %3220 = vmatprep.subr.bf16.mxu0 0
    %3221 = vmatpush2.bf16.msra.mxu0 0
    %3222 = vmatprep.subr.bf16.mxu0 0
    %3223 = vmatpush2.bf16.msra.mxu0 0
    %3224 = vmatprep.subr.bf16.mxu0 0
    %3225 = vmatpush2.bf16.msra.mxu0 0
    %3226 = vmatprep.mubr.bf16.mxu0 0
    %3227 = vmatmul.mubr.bf16.gmra.mxu0 %v3152
    %v3228 = vpop.f32.mrf.mxu0
    %v3229 = vadd.f32 %v3036, %v3228
    %v3230 = vpop.f32.mrf.mxu0
    %v3231 = vadd.f32 %v3038, %v3230
    %v3232 = vpop.f32.mrf.mxu0
    %v3233 = vpop.f32.mrf.mxu0
    %3234 = vdwg.mxu0
    %v3235 = vadd.f32 %v3188, %v1090
    %v3236 = vadd.f32 %v3190, %v1094
    %v3237 = vadd.f32 %v3229, %v1098
    %v3238 = vadd.f32 %v3231, %v1102
    %v3239 = vxor.u32 %v3235, 2147483648
    %v3240 = vxor.u32 %v3236, 2147483648
    %v3241 = vxor.u32 %v3237, 2147483648
    %v3242 = vmul.f32 %v3239, 1.442695
    %v3243 = vpow.pop %v3242
    %v3244 = vmul.f32 %v3240, 1.442695
    %v3245 = vpow.pop %v3244
    %v3246 = vmul.f32 %v3241, 1.442695
    %v3247 = vpow.pop %v3246
    %v3248 = vadd.f32 %v3243, 1.0
    %v3249 = vadd.f32 %v3245, 1.0
    %v3250 = vadd.f32 %v3247, 1.0
    %v3251 = vrcp.pop %v3248
    %v3252 = vmul.f32 1.0, %v3251
    %v3253 = vrcp.pop %v3249
    %v3254 = vmul.f32 1.0, %v3253
    %v3255 = vrcp.pop %v3250
    %v3256 = vmul.f32 1.0, %v3255
    %v3257 = vtanh.pop %v3238
    %v3258 = vmul.f32 %v3254, %v2956
    %v3259 = vmul.f32 %v3252, %v3257
    %v3260 = vadd.f32 %v3258, %v3259
    %v3261 = vtanh.pop %v3260
    %v3262 = vmul.f32 %v3256, %v3261
    %v3264 = vlaneseq
    %v3265 = vshrl.u32 %v3264, 7
    %v3266 = vsub.s32 0, %v3265
    %v3267 = vrot.slane %v183, %v3266
    %v3269 = vmul.f32 %v3262, %v3267
    %3270 = vadd.xlane.f32.xlu0 %v3269
    %v3271 = vpop.xlane.xlu0 %3270
    %v3273 = vlaneseq
    %v3274 = vshrl.u32 %v3273, 7
    %v3275 = vsub.s32 0, %v3274
    %v3276 = vrot.slane %v184, %v3275
    %v3278 = vadd.f32 %v3271, %v3276
    %vm3279 = vcmask 7168
    %3280 = vst.msk [vmem:[%s9] sm:$0xff] %vm3279, %v3278
    // Predicated region
    $region50: #{tpu_custom_call.1} parent=1 // pred_check
      _
    $region51: #{tpu_custom_call.1} parent=1 // pred_check_branch
      %3282 = sbr.rel (0) target = $region53
    $region52: #{tpu_custom_call.1} parent=1 // pred_region
      _
    $region53: #{tpu_custom_call.1} parent=1 // pred_fallthru
      _
    // Predicated region
    $region54: #{tpu_custom_call.1} parent=1 // pred_check
      _
    $region55: #{tpu_custom_call.1} parent=1 // pred_check_branch
      %3284 = sbr.rel (0) target = $region57
    $region56: #{tpu_custom_call.1} parent=1 // pred_region
      _
    $region57: #{tpu_custom_call.1} parent=1 // pred_fallthru
      _
    %3285 = vsyncpa [#allocation4], 1
    %3286 = vsyncpa [#allocation6], 1

</llo_original>
